<compile_context>
chip_gen: v5e
topology: v5e:2x2
jax: 0.10.0
libtpu: 0.0.40
codegen_flags: <defaults>
</compile_context>

<pallas_src>
import functools
import math

import jax
import jax.numpy as jnp
from jax.experimental import pallas as pl
from jax.experimental.pallas import tpu as pltpu

DIM = 32                 # latent / hidden channel count ("dim" in the torch module)
NUM_EMBEDDINGS = 64      # codebook size
COMMITMENT_COST = 0.25
BN_EPS = 1e-5            # nn.BatchNorm2d default eps
# decay = 0  -> plain VectorQuantizer branch (no EMA buffers)


def _vspec():
    return pl.BlockSpec(memory_space=pltpu.MemorySpace.VMEM)


def _cost(flops, bytes_accessed, transcendentals=0):
    return pl.CostEstimate(flops=int(flops), transcendentals=int(transcendentals),
                           bytes_accessed=int(bytes_accessed))


# ----------------------------- Pallas kernels ------------------------------
# All activations use the channels-first flat layout (C, P) with P = N*H*W on lanes.

def _conv_bn_relu_kernel(cols_ref, w_ref, g_ref, b_ref, o_ref, *, eps):
    # (C_out, K) @ (K, P) conv, fused training-mode BN (batch stats) + ReLU epilogue.
    y = jnp.dot(w_ref[...], cols_ref[...], preferred_element_type=jnp.float32)
    inv_p = 1.0 / float(y.shape[1])
    mean = jnp.sum(y, axis=1, keepdims=True) * inv_p
    var = jnp.sum(y * y, axis=1, keepdims=True) * inv_p - mean * mean
    o_ref[...] = jnp.maximum(
        (y - mean) * jax.lax.rsqrt(var + eps) * g_ref[...] + b_ref[...], 0.0)


def _conv_bias_kernel(cols_ref, w_ref, b_ref, o_ref):
    # plain conv with bias (no BN follows).
    o_ref[...] = (jnp.dot(w_ref[...], cols_ref[...], preferred_element_type=jnp.float32)
                  + b_ref[...])


def _resblock_kernel(cols_ref, x_ref, w1_ref, g1_ref, b1_ref,
                     w2_ref, g2_ref, b2_ref, o_ref, *, eps):
    # x + Sequential(ReLU, Conv3x3 pad1 (bias dropped), BN, ReLU, Conv1x1 (bias dropped), BN)(x)
    # The leading ReLU commutes with im2col, so it is applied to the cols slab here.
    h = jnp.maximum(cols_ref[...], 0.0)                                         # (9C, P)
    y1 = jnp.dot(w1_ref[...], h, preferred_element_type=jnp.float32)            # (C, P)
    inv_p = 1.0 / float(y1.shape[1])
    m1 = jnp.sum(y1, axis=1, keepdims=True) * inv_p
    v1 = jnp.sum(y1 * y1, axis=1, keepdims=True) * inv_p - m1 * m1
    h1 = jnp.maximum((y1 - m1) * jax.lax.rsqrt(v1 + eps) * g1_ref[...] + b1_ref[...], 0.0)
    y2 = jnp.dot(w2_ref[...], h1, preferred_element_type=jnp.float32)           # (C, P)
    m2 = jnp.sum(y2, axis=1, keepdims=True) * inv_p
    v2 = jnp.sum(y2 * y2, axis=1, keepdims=True) * inv_p - m2 * m2
    o_ref[...] = x_ref[...] + ((y2 - m2) * jax.lax.rsqrt(v2 + eps) * g2_ref[...]
                               + b2_ref[...])


def _deconv_bn_relu_kernel(cols_ref, w_ref, g_ref, b_ref, o_ref, *, eps, pre_relu):
    # ConvTranspose2d(4,2,1) via 4 sub-pixel parity matmuls, fused BN (stats over all
    # 4 parities = all output pixels) + ReLU.  Optional pre-ReLU on the input cols.
    ys = []
    for i in range(4):
        c = cols_ref[i]
        if pre_relu:
            c = jnp.maximum(c, 0.0)
        ys.append(jnp.dot(w_ref[i], c, preferred_element_type=jnp.float32))     # (C_out, P)
    inv = 1.0 / float(4 * ys[0].shape[1])
    s1 = (jnp.sum(ys[0], axis=1, keepdims=True) + jnp.sum(ys[1], axis=1, keepdims=True)
          + jnp.sum(ys[2], axis=1, keepdims=True) + jnp.sum(ys[3], axis=1, keepdims=True))
    s2 = (jnp.sum(ys[0] * ys[0], axis=1, keepdims=True)
          + jnp.sum(ys[1] * ys[1], axis=1, keepdims=True)
          + jnp.sum(ys[2] * ys[2], axis=1, keepdims=True)
          + jnp.sum(ys[3] * ys[3], axis=1, keepdims=True))
    mean = s1 * inv
    var = s2 * inv - mean * mean
    scale = jax.lax.rsqrt(var + eps) * g_ref[...]
    shift = b_ref[...] - mean * scale
    for i in range(4):
        o_ref[i] = jnp.maximum(ys[i] * scale + shift, 0.0)


def _deconv_bias_tanh_kernel(cols_ref, w_ref, b_ref, o_ref):
    # Final ConvTranspose2d(dim->3) via 4 sub-pixel parity matmuls + bias + tanh.
    for i in range(4):
        y = (jnp.dot(w_ref[i], cols_ref[i], preferred_element_type=jnp.float32)
             + b_ref[...])
        o_ref[i] = jnp.tanh(y)


def _vq_kernel(x_ref, e_ref, et_ref, q_ref, loss_ref, perp_ref, *, commitment_cost):
    # VectorQuantizer forward on (D, P) latents:
    # argmin distances -> one-hot -> codebook matmul -> loss -> perplexity.
    x = x_ref[...]                     # (D, P)
    e = e_ref[...]                     # (K, D) codebook
    D, P = x.shape
    K = e.shape[0]

    e_sq = jnp.sum(e * e, axis=1, keepdims=True)                        # (K, 1)
    xe = jnp.dot(e, x, preferred_element_type=jnp.float32)              # (K, P)
    # ||x||^2 is constant per pixel (column) -> omitted: argmin unchanged.
    d = e_sq - 2.0 * xe                                                  # (K, P)

    min_d = jnp.min(d, axis=0, keepdims=True)                            # (1, P)
    iota = jax.lax.broadcasted_iota(jnp.int32, (K, P), 0)
    # first index achieving the minimum (matches torch.argmin tie behaviour)
    idx = jnp.min(jnp.where(d == min_d, iota, K), axis=0, keepdims=True)
    onehot = (iota == idx).astype(jnp.float32)                           # (K, P)

    quant = jnp.dot(et_ref[...], onehot, preferred_element_type=jnp.float32)  # (D, P)
    q_ref[...] = quant

    diff = quant - x
    sq = jnp.sum(jnp.sum(diff * diff, axis=1, keepdims=True), axis=0, keepdims=True)
    # q_latent_loss + commitment_cost * e_latent_loss == (1 + c) * MSE in forward value
    loss_ref[...] = (1.0 + commitment_cost) * sq * (1.0 / float(P * D))

    avg = jnp.sum(onehot, axis=1, keepdims=True) * (1.0 / float(P))      # (K, 1)
    ent = jnp.sum(avg * jnp.log(avg + 1e-10), axis=0, keepdims=True)     # (1, 1)
    perp_ref[...] = jnp.exp(-ent)


# ----------------------------- wrapper glue (XLA) ---------------------------

def conv_weight_mat(w):
    # torch Conv2d weight (C_out, C_in, kh, kw) -> (C_out, kh*kw*C_in), tap-major.
    c_out, c_in, kh, kw = w.shape
    return jnp.transpose(w, (0, 2, 3, 1)).reshape(c_out, kh * kw * c_in)


def im2col_cf(x_cf, kh, kw, stride, padding):
    # x_cf: (C, N, H, W) -> cols (kh*kw*C, N*Ho*Wo), tap-major / channel-minor rows.
    C, N, H, W = x_cf.shape
    xp = jnp.pad(x_cf, ((0, 0), (0, 0), (padding, padding), (padding, padding)))
    Ho = (H + 2 * padding - kh) // stride + 1
    Wo = (W + 2 * padding - kw) // stride + 1
    taps = []
    for i in range(kh):
        for j in range(kw):
            taps.append(xp[:, :, i:i + Ho * stride:stride, j:j + Wo * stride:stride])
    cols = jnp.stack(taps, axis=0).reshape(kh * kw * C, N * Ho * Wo)
    return cols, (Ho, Wo)


def conv_bn_relu(x_cf, w, gamma, beta, kh, kw, stride, padding):
    C_in, N = x_cf.shape[0], x_cf.shape[1]
    cols, (Ho, Wo) = im2col_cf(x_cf, kh, kw, stride, padding)
    K, P = cols.shape
    C_out = w.shape[0]
    out = pl.pallas_call(
        functools.partial(_conv_bn_relu_kernel, eps=BN_EPS),
        out_shape=jax.ShapeDtypeStruct((C_out, P), jnp.float32),
        in_specs=[_vspec()] * 4,
        out_specs=_vspec(),
        cost_estimate=_cost(2 * C_out * K * P + 10 * C_out * P,
                            4 * (K * P + C_out * K + 2 * C_out * P),
                            transcendentals=C_out),
    )(cols, conv_weight_mat(w), gamma.reshape(C_out, 1), beta.reshape(C_out, 1))
    return out.reshape(C_out, N, Ho, Wo)


def conv_bias(x_cf, w, bias, kh, kw, stride, padding):
    C_in, N = x_cf.shape[0], x_cf.shape[1]
    cols, (Ho, Wo) = im2col_cf(x_cf, kh, kw, stride, padding)
    K, P = cols.shape
    C_out = w.shape[0]
    out = pl.pallas_call(
        _conv_bias_kernel,
        out_shape=jax.ShapeDtypeStruct((C_out, P), jnp.float32),
        in_specs=[_vspec()] * 3,
        out_specs=_vspec(),
        cost_estimate=_cost(2 * C_out * K * P + C_out * P,
                            4 * (K * P + C_out * K + 2 * C_out * P)),
    )(cols, conv_weight_mat(w), bias.reshape(C_out, 1))
    return out.reshape(C_out, N, Ho, Wo)


def resblock(x_cf, p):
    # ReLU, Conv3x3 pad1, BN, ReLU, Conv1x1, BN fused into one kernel; + residual.
    C, N, H, W = x_cf.shape
    cols, _ = im2col_cf(x_cf, 3, 3, 1, 1)
    P = N * H * W
    out = pl.pallas_call(
        functools.partial(_resblock_kernel, eps=BN_EPS),
        out_shape=jax.ShapeDtypeStruct((C, P), jnp.float32),
        in_specs=[_vspec()] * 8,
        out_specs=_vspec(),
        cost_estimate=_cost(2 * C * (9 * C) * P + 2 * C * C * P + 20 * C * P,
                            4 * (9 * C * P + 9 * C * C + C * C + 3 * C * P),
                            transcendentals=2 * C),
    )(cols, x_cf.reshape(C, P),
      conv_weight_mat(p["w1"]), p["g1"].reshape(C, 1), p["be1"].reshape(C, 1),
      conv_weight_mat(p["w2"]), p["g2"].reshape(C, 1), p["be2"].reshape(C, 1))
    return out.reshape(C, N, H, W)


def vector_quantizer(z_cf, embedding, commitment_cost):
    D, N, H, W = z_cf.shape
    P = N * H * W
    K = embedding.shape[0]
    flat = z_cf.reshape(D, P)
    q, loss, perp = pl.pallas_call(
        functools.partial(_vq_kernel, commitment_cost=commitment_cost),
        out_shape=(
            jax.ShapeDtypeStruct((D, P), jnp.float32),
            jax.ShapeDtypeStruct((1, 1), jnp.float32),
            jax.ShapeDtypeStruct((1, 1), jnp.float32),
        ),
        in_specs=[_vspec()] * 3,
        out_specs=(_vspec(), _vspec(), _vspec()),
        cost_estimate=_cost(4 * K * D * P + 12 * K * P + 6 * D * P,
                            4 * (2 * K * D + 2 * D * P + 2 * K * P),
                            transcendentals=K + 2),
    )(flat, embedding, jnp.transpose(embedding))
    # straight-through: forward value of `inputs + (quantized - inputs).detach()` == quantized
    return loss[0, 0], q.reshape(D, N, H, W), perp[0, 0]


# ---- ConvTranspose2d(k=4, s=2, p=1) via sub-pixel decomposition -------------
# out[oy, ox] with oy = 2*iy - 1 + ky: each output parity (py, px) is a stride-1
# 2x2 convolution of the (one-side padded) input with taps ky = 3 - py - 2*dy,
# kx = 3 - px - 2*dx.

def _deconv_parity_cols(x_cf, py, px):
    C, N, H, W = x_cf.shape
    pt, pb = (1, 0) if py == 0 else (0, 1)
    plft, prt = (1, 0) if px == 0 else (0, 1)
    xp = jnp.pad(x_cf, ((0, 0), (0, 0), (pt, pb), (plft, prt)))
    taps = []
    for dy in range(2):
        for dx in range(2):
            taps.append(xp[:, :, dy:dy + H, dx:dx + W])
    return jnp.stack(taps, axis=0).reshape(4 * C, N * H * W)


def _deconv_parity_weight(w, py, px):
    # w: torch ConvTranspose2d weight (C_in, C_out, 4, 4)
    C_in, C_out = w.shape[0], w.shape[1]
    taps = []
    for dy in range(2):
        for dx in range(2):
            ky = 3 - py - 2 * dy
            kx = 3 - px - 2 * dx
            taps.append(jnp.transpose(w[:, :, ky, kx], (1, 0)))   # (C_out, C_in)
    return jnp.stack(taps, axis=1).reshape(C_out, 4 * C_in)


def _interleave_parity(parts, C, N, H, W):
    # parts: 4 arrays (C, N*H*W) ordered (py, px) = (0,0),(0,1),(1,0),(1,1)
    ps = [p.reshape(C, N, H, W) for p in parts]
    row0 = jnp.stack([ps[0], ps[1]], axis=-1)          # (C, N, H, W, 2)  [px]
    row1 = jnp.stack([ps[2], ps[3]], axis=-1)
    t = jnp.stack([row0, row1], axis=3)                # (C, N, H, 2, W, 2) [py, px]
    return t.reshape(C, N, 2 * H, 2 * W)


def deconv_bn_relu(x_cf, w_t, gamma, beta, pre_relu):
    C_in, N, H, W = x_cf.shape
    C_out = w_t.shape[1]
    P = N * H * W
    cols = jnp.stack([_deconv_parity_cols(x_cf, py, px)
                      for py in range(2) for px in range(2)], axis=0)   # (4, 4*C_in, P)
    wms = jnp.stack([_deconv_parity_weight(w_t, py, px)
                     for py in range(2) for px in range(2)], axis=0)    # (4, C_out, 4*C_in)
    out = pl.pallas_call(
        functools.partial(_deconv_bn_relu_kernel, eps=BN_EPS, pre_relu=pre_relu),
        out_shape=jax.ShapeDtypeStruct((4, C_out, P), jnp.float32),
        in_specs=[_vspec()] * 4,
        out_specs=_vspec(),
        cost_estimate=_cost(4 * (2 * C_out * 4 * C_in * P) + 24 * C_out * P,
                            4 * (4 * 4 * C_in * P + 4 * C_out * 4 * C_in + 8 * C_out * P),
                            transcendentals=C_out),
    )(cols, wms, gamma.reshape(C_out, 1), beta.reshape(C_out, 1))
    return _interleave_parity([out[i] for i in range(4)], C_out, N, H, W)


def deconv_bias_tanh(x_cf, w_t, bias):
    C_in, N, H, W = x_cf.shape
    C_out = w_t.shape[1]
    P = N * H * W
    cols = jnp.stack([_deconv_parity_cols(x_cf, py, px)
                      for py in range(2) for px in range(2)], axis=0)
    wms = jnp.stack([_deconv_parity_weight(w_t, py, px)
                     for py in range(2) for px in range(2)], axis=0)
    out = pl.pallas_call(
        _deconv_bias_tanh_kernel,
        out_shape=jax.ShapeDtypeStruct((4, C_out, P), jnp.float32),
        in_specs=[_vspec()] * 3,
        out_specs=_vspec(),
        cost_estimate=_cost(4 * (2 * C_out * 4 * C_in * P) + 8 * C_out * P,
                            4 * (4 * 4 * C_in * P + 4 * C_out * 4 * C_in + 8 * C_out * P),
                            transcendentals=4 * C_out * P),
    )(cols, wms, bias.reshape(C_out, 1))
    return _interleave_parity([out[i] for i in range(4)], C_out, N, H, W)


# --------------------------------- params -----------------------------------

def xavier_uniform(key, shape):
    fan_in = shape[1] * shape[2] * shape[3]
    fan_out = shape[0] * shape[2] * shape[3]
    a = math.sqrt(6.0 / (fan_in + fan_out))
    return jax.random.uniform(key, shape, jnp.float32, -a, a)


def init_resblock_params(key, dim):
    # conv biases omitted: exactly cancelled by the training-mode BN that follows.
    k1, k2 = jax.random.split(key)
    return {
        "w1": xavier_uniform(k1, (dim, dim, 3, 3)),
        "g1": jnp.ones((dim,), jnp.float32),
        "be1": jnp.zeros((dim,), jnp.float32),
        "w2": xavier_uniform(k2, (dim, dim, 1, 1)),
        "g2": jnp.ones((dim,), jnp.float32),
        "be2": jnp.zeros((dim,), jnp.float32),
    }


def init_params(key, dim, num_embeddings):
    keys = jax.random.split(key, 9)
    return {
        "enc_w1": xavier_uniform(keys[0], (dim, 3, 4, 4)),       # bias dropped (BN follows)
        "enc_g1": jnp.ones((dim,), jnp.float32),
        "enc_be1": jnp.zeros((dim,), jnp.float32),
        "enc_w2": xavier_uniform(keys[1], (dim, dim, 4, 4)),
        "enc_b2": jnp.zeros((dim,), jnp.float32),                # no BN after -> keep bias
        "enc_rb1": init_resblock_params(keys[2], dim),
        "enc_rb2": init_resblock_params(keys[3], dim),
        "embedding": jax.random.uniform(
            keys[4], (num_embeddings, dim), jnp.float32,
            -1.0 / num_embeddings, 1.0 / num_embeddings),
        "dec_rb1": init_resblock_params(keys[5], dim),
        "dec_rb2": init_resblock_params(keys[6], dim),
        "dec_tw1": xavier_uniform(keys[7], (dim, dim, 4, 4)),    # ConvTranspose2d weight, bias dropped (BN follows)
        "dec_g1": jnp.ones((dim,), jnp.float32),
        "dec_be1": jnp.zeros((dim,), jnp.float32),
        "dec_tw2": xavier_uniform(keys[8], (dim, 3, 4, 4)),
        "dec_tb2": jnp.zeros((3,), jnp.float32),                 # final layer keeps bias
    }


# --------------------------------- forward ----------------------------------

def forward(params, x_nchw):
    # TODO(synk): BatchNorm running_mean/var buffer updates are a training side effect
    # that does not change the forward output; not reproduced here.
    x = jnp.transpose(x_nchw.astype(jnp.float32), (1, 0, 2, 3))   # NCHW -> (C, N, H, W)

    # encoder: Conv(3->dim,4,2,1)+BN+ReLU, Conv(dim->dim,4,2,1)+bias, ResBlock, ResBlock
    h = conv_bn_relu(x, params["enc_w1"], params["enc_g1"], params["enc_be1"], 4, 4, 2, 1)
    h = conv_bias(h, params["enc_w2"], params["enc_b2"], 4, 4, 2, 1)
    h = resblock(h, params["enc_rb1"])
    h = resblock(h, params["enc_rb2"])

    # vector quantizer (decay=0 branch); encodings are discarded by Model.forward
    loss, quantized, perplexity = vector_quantizer(h, params["embedding"], COMMITMENT_COST)

    # decoder: ResBlock, ResBlock, [ReLU+ConvT(dim->dim,4,2,1)+BN+ReLU], [ConvT(dim->3,4,2,1)+Tanh]
    d = resblock(quantized, params["dec_rb1"])
    d = resblock(d, params["dec_rb2"])
    d = deconv_bn_relu(d, params["dec_tw1"], params["dec_g1"], params["dec_be1"], pre_relu=True)
    d = deconv_bias_tanh(d, params["dec_tw2"], params["dec_tb2"])   # (3, N, H, W)

    x_recon = jnp.transpose(d, (1, 0, 2, 3))                        # -> NCHW
    return loss, x_recon, perplexity


if __name__ == "__main__":
    key = jax.random.PRNGKey(0)
    pkey, xkey = jax.random.split(key)
    params = init_params(pkey, DIM, NUM_EMBEDDINGS)
    x = jax.random.normal(xkey, (2, 3, 16, 16), jnp.float32)        # NCHW like PyTorch

    loss, x_recon, perplexity = jax.jit(forward)(params, x)
    jax.block_until_ready((loss, x_recon, perplexity))

    assert x_recon.shape == (2, 3, 16, 16)
    assert loss.shape == () and perplexity.shape == ()
    assert bool(jnp.isfinite(loss)) and bool(jnp.isfinite(perplexity))
    print("KERNEL_OK")
</pallas_src>

<mosaic_0001>
module attributes {stable_mosaic.version = 11 : i64} {
  func.func @_conv_bn_relu_kernel(%arg0: memref<48x128xf32, #tpu.memory_space<vmem>>, %arg1: memref<32x48xf32, #tpu.memory_space<vmem>>, %arg2: memref<32x1xf32, #tpu.memory_space<vmem>>, %arg3: memref<32x1xf32, #tpu.memory_space<vmem>>, %arg4: memref<32x128xf32, #tpu.memory_space<vmem>>) attributes {dimension_semantics = [], scalar_prefetch = 0 : i64, scratch_operands = 0 : i64, tpu.core_type = #tpu.core_type<tc>} {
    %c0 = arith.constant 0 : index
    %c0_0 = arith.constant 0 : index
    %0 = vector.load %arg1[%c0, %c0_0] : memref<32x48xf32, #tpu.memory_space<vmem>>, vector<32x48xf32>
    %c0_1 = arith.constant 0 : index
    %c0_2 = arith.constant 0 : index
    %1 = vector.load %arg0[%c0_1, %c0_2] : memref<48x128xf32, #tpu.memory_space<vmem>>, vector<48x128xf32>
    %cst = arith.constant dense<0.000000e+00> : vector<32x128xf32>
    %2 = tpu.matmul %0, %1, %cst {dimension_numbers = #tpu.dot_dimension_numbers<[1], [0], [0], [1], [0, 0, 1, 1], [], []>} : vector<32x48xf32>, vector<48x128xf32>, vector<32x128xf32> -> vector<32x128xf32>
    %cst_3 = arith.constant dense<0.000000e+00> : vector<32xf32>
    %3 = vector.multi_reduction <add>, %2, %cst_3 [1] : vector<32x128xf32> to vector<32xf32>
    %4 = vector.shape_cast %3 : vector<32xf32> to vector<32x1xf32>
    %cst_4 = arith.constant 7.812500e-03 : f32
    %5 = vector.broadcast %cst_4 : f32 to vector<32x1xf32>
    %6 = arith.mulf %4, %5 : vector<32x1xf32>
    %7 = arith.mulf %2, %2 : vector<32x128xf32>
    %cst_5 = arith.constant dense<0.000000e+00> : vector<32xf32>
    %8 = vector.multi_reduction <add>, %7, %cst_5 [1] : vector<32x128xf32> to vector<32xf32>
    %9 = vector.shape_cast %8 : vector<32xf32> to vector<32x1xf32>
    %cst_6 = arith.constant 7.812500e-03 : f32
    %10 = vector.broadcast %cst_6 : f32 to vector<32x1xf32>
    %11 = arith.mulf %9, %10 : vector<32x1xf32>
    %12 = arith.mulf %6, %6 : vector<32x1xf32>
    %13 = arith.subf %11, %12 : vector<32x1xf32>
    %14 = vector.broadcast %6 : vector<32x1xf32> to vector<32x128xf32>
    %15 = arith.subf %2, %14 : vector<32x128xf32>
    %cst_7 = arith.constant 9.99999974E-6 : f32
    %16 = vector.broadcast %cst_7 : f32 to vector<32x1xf32>
    %17 = arith.addf %13, %16 : vector<32x1xf32>
    %18 = math.rsqrt %17 : vector<32x1xf32>
    %19 = vector.broadcast %18 : vector<32x1xf32> to vector<32x128xf32>
    %20 = arith.mulf %15, %19 : vector<32x128xf32>
    %c0_8 = arith.constant 0 : index
    %c0_9 = arith.constant 0 : index
    %21 = vector.load %arg2[%c0_8, %c0_9] : memref<32x1xf32, #tpu.memory_space<vmem>>, vector<32x1xf32>
    %22 = vector.broadcast %21 : vector<32x1xf32> to vector<32x128xf32>
    %23 = arith.mulf %20, %22 : vector<32x128xf32>
    %c0_10 = arith.constant 0 : index
    %c0_11 = arith.constant 0 : index
    %24 = vector.load %arg3[%c0_10, %c0_11] : memref<32x1xf32, #tpu.memory_space<vmem>>, vector<32x1xf32>
    %25 = vector.broadcast %24 : vector<32x1xf32> to vector<32x128xf32>
    %26 = arith.addf %23, %25 : vector<32x128xf32>
    %cst_12 = arith.constant 0.000000e+00 : f32
    %27 = vector.broadcast %cst_12 : f32 to vector<32x128xf32>
    %28 = arith.maximumf %26, %27 : vector<32x128xf32>
    %c0_13 = arith.constant 0 : index
    %c0_14 = arith.constant 0 : index
    %29 = vector.load %arg4[%c0_13, %c0_14] : memref<32x128xf32, #tpu.memory_space<vmem>>, vector<32x128xf32>
    tpu.vector_store %arg4[%c0_13, %c0_14], %28 {strides = array<i32>} : memref<32x128xf32, #tpu.memory_space<vmem>>, vector<32x128xf32>,
    return
  }
}

module attributes {stable_mosaic.version = 11 : i64} {
  func.func @_conv_bias_kernel(%arg0: memref<512x32xf32, #tpu.memory_space<vmem>>, %arg1: memref<32x512xf32, #tpu.memory_space<vmem>>, %arg2: memref<32x1xf32, #tpu.memory_space<vmem>>, %arg3: memref<32x32xf32, #tpu.memory_space<vmem>>) attributes {dimension_semantics = [], scalar_prefetch = 0 : i64, scratch_operands = 0 : i64, tpu.core_type = #tpu.core_type<tc>} {
    %c0 = arith.constant 0 : index
    %c0_0 = arith.constant 0 : index
    %0 = vector.load %arg1[%c0, %c0_0] : memref<32x512xf32, #tpu.memory_space<vmem>>, vector<32x512xf32>
    %c0_1 = arith.constant 0 : index
    %c0_2 = arith.constant 0 : index
    %1 = vector.load %arg0[%c0_1, %c0_2] : memref<512x32xf32, #tpu.memory_space<vmem>>, vector<512x32xf32>
    %cst = arith.constant dense<0.000000e+00> : vector<32x32xf32>
    %2 = tpu.matmul %0, %1, %cst {dimension_numbers = #tpu.dot_dimension_numbers<[1], [0], [0], [1], [0, 0, 1, 1], [], []>} : vector<32x512xf32>, vector<512x32xf32>, vector<32x32xf32> -> vector<32x32xf32>
    %c0_3 = arith.constant 0 : index
    %c0_4 = arith.constant 0 : index
    %3 = vector.load %arg2[%c0_3, %c0_4] : memref<32x1xf32, #tpu.memory_space<vmem>>, vector<32x1xf32>
    %4 = vector.broadcast %3 : vector<32x1xf32> to vector<32x32xf32>
    %5 = arith.addf %2, %4 : vector<32x32xf32>
    %c0_5 = arith.constant 0 : index
    %c0_6 = arith.constant 0 : index
    %6 = vector.load %arg3[%c0_5, %c0_6] : memref<32x32xf32, #tpu.memory_space<vmem>>, vector<32x32xf32>
    tpu.vector_store %arg3[%c0_5, %c0_6], %5 {strides = array<i32>} : memref<32x32xf32, #tpu.memory_space<vmem>>, vector<32x32xf32>,
    return
  }
}

module attributes {stable_mosaic.version = 11 : i64} {
  func.func @_resblock_kernel(%arg0: memref<288x32xf32, #tpu.memory_space<vmem>>, %arg1: memref<32x32xf32, #tpu.memory_space<vmem>>, %arg2: memref<32x288xf32, #tpu.memory_space<vmem>>, %arg3: memref<32x1xf32, #tpu.memory_space<vmem>>, %arg4: memref<32x1xf32, #tpu.memory_space<vmem>>, %arg5: memref<32x32xf32, #tpu.memory_space<vmem>>, %arg6: memref<32x1xf32, #tpu.memory_space<vmem>>, %arg7: memref<32x1xf32, #tpu.memory_space<vmem>>, %arg8: memref<32x32xf32, #tpu.memory_space<vmem>>) attributes {dimension_semantics = [], scalar_prefetch = 0 : i64, scratch_operands = 0 : i64, tpu.core_type = #tpu.core_type<tc>} {
    %c0 = arith.constant 0 : index
    %c0_0 = arith.constant 0 : index
    %0 = vector.load %arg0[%c0, %c0_0] : memref<288x32xf32, #tpu.memory_space<vmem>>, vector<288x32xf32>
    %cst = arith.constant 0.000000e+00 : f32
    %1 = vector.broadcast %cst : f32 to vector<288x32xf32>
    %2 = arith.maximumf %0, %1 : vector<288x32xf32>
    %c0_1 = arith.constant 0 : index
    %c0_2 = arith.constant 0 : index
    %3 = vector.load %arg2[%c0_1, %c0_2] : memref<32x288xf32, #tpu.memory_space<vmem>>, vector<32x288xf32>
    %cst_3 = arith.constant dense<0.000000e+00> : vector<32x32xf32>
    %4 = tpu.matmul %3, %2, %cst_3 {dimension_numbers = #tpu.dot_dimension_numbers<[1], [0], [0], [1], [0, 0, 1, 1], [], []>} : vector<32x288xf32>, vector<288x32xf32>, vector<32x32xf32> -> vector<32x32xf32>
    %cst_4 = arith.constant dense<0.000000e+00> : vector<32xf32>
    %5 = vector.multi_reduction <add>, %4, %cst_4 [1] : vector<32x32xf32> to vector<32xf32>
    %6 = vector.shape_cast %5 : vector<32xf32> to vector<32x1xf32>
    %cst_5 = arith.constant 3.125000e-02 : f32
    %7 = vector.broadcast %cst_5 : f32 to vector<32x1xf32>
    %8 = arith.mulf %6, %7 : vector<32x1xf32>
    %9 = arith.mulf %4, %4 : vector<32x32xf32>
    %cst_6 = arith.constant dense<0.000000e+00> : vector<32xf32>
    %10 = vector.multi_reduction <add>, %9, %cst_6 [1] : vector<32x32xf32> to vector<32xf32>
    %11 = vector.shape_cast %10 : vector<32xf32> to vector<32x1xf32>
    %cst_7 = arith.constant 3.125000e-02 : f32
    %12 = vector.broadcast %cst_7 : f32 to vector<32x1xf32>
    %13 = arith.mulf %11, %12 : vector<32x1xf32>
    %14 = arith.mulf %8, %8 : vector<32x1xf32>
    %15 = arith.subf %13, %14 : vector<32x1xf32>
    %16 = vector.broadcast %8 : vector<32x1xf32> to vector<32x32xf32>
    %17 = arith.subf %4, %16 : vector<32x32xf32>
    %cst_8 = arith.constant 9.99999974E-6 : f32
    %18 = vector.broadcast %cst_8 : f32 to vector<32x1xf32>
    %19 = arith.addf %15, %18 : vector<32x1xf32>
    %20 = math.rsqrt %19 : vector<32x1xf32>
    %21 = vector.broadcast %20 : vector<32x1xf32> to vector<32x32xf32>
    %22 = arith.mulf %17, %21 : vector<32x32xf32>
    %c0_9 = arith.constant 0 : index
    %c0_10 = arith.constant 0 : index
    %23 = vector.load %arg3[%c0_9, %c0_10] : memref<32x1xf32, #tpu.memory_space<vmem>>, vector<32x1xf32>
    %24 = vector.broadcast %23 : vector<32x1xf32> to vector<32x32xf32>
    %25 = arith.mulf %22, %24 : vector<32x32xf32>
    %c0_11 = arith.constant 0 : index
    %c0_12 = arith.constant 0 : index
    %26 = vector.load %arg4[%c0_11, %c0_12] : memref<32x1xf32, #tpu.memory_space<vmem>>, vector<32x1xf32>
    %27 = vector.broadcast %26 : vector<32x1xf32> to vector<32x32xf32>
    %28 = arith.addf %25, %27 : vector<32x32xf32>
    %cst_13 = arith.constant 0.000000e+00 : f32
    %29 = vector.broadcast %cst_13 : f32 to vector<32x32xf32>
    %30 = arith.maximumf %28, %29 : vector<32x32xf32>
    %c0_14 = arith.constant 0 : index
    %c0_15 = arith.constant 0 : index
    %31 = vector.load %arg5[%c0_14, %c0_15] : memref<32x32xf32, #tpu.memory_space<vmem>>, vector<32x32xf32>
    %cst_16 = arith.constant dense<0.000000e+00> : vector<32x32xf32>
    %32 = tpu.matmul %31, %30, %cst_16 {dimension_numbers = #tpu.dot_dimension_numbers<[1], [0], [0], [1], [0, 0, 1, 1], [], []>} : vector<32x32xf32>, vector<32x32xf32>, vector<32x32xf32> -> vector<32x32xf32>
    %cst_17 = arith.constant dense<0.000000e+00> : vector<32xf32>
    %33 = vector.multi_reduction <add>, %32, %cst_17 [1] : vector<32x32xf32> to vector<32xf32>
    %34 = vector.shape_cast %33 : vector<32xf32> to vector<32x1xf32>
    %cst_18 = arith.constant 3.125000e-02 : f32
    %35 = vector.broadcast %cst_18 : f32 to vector<32x1xf32>
    %36 = arith.mulf %34, %35 : vector<32x1xf32>
    %37 = arith.mulf %32, %32 : vector<32x32xf32>
    %cst_19 = arith.constant dense<0.000000e+00> : vector<32xf32>
    %38 = vector.multi_reduction <add>, %37, %cst_19 [1] : vector<32x32xf32> to vector<32xf32>
    %39 = vector.shape_cast %38 : vector<32xf32> to vector<32x1xf32>
    %cst_20 = arith.constant 3.125000e-02 : f32
    %40 = vector.broadcast %cst_20 : f32 to vector<32x1xf32>
    %41 = arith.mulf %39, %40 : vector<32x1xf32>
    %42 = arith.mulf %36, %36 : vector<32x1xf32>
    %43 = arith.subf %41, %42 : vector<32x1xf32>
    %c0_21 = arith.constant 0 : index
    %c0_22 = arith.constant 0 : index
    %44 = vector.load %arg1[%c0_21, %c0_22] : memref<32x32xf32, #tpu.memory_space<vmem>>, vector<32x32xf32>
    %45 = vector.broadcast %36 : vector<32x1xf32> to vector<32x32xf32>
    %46 = arith.subf %32, %45 : vector<32x32xf32>
    %cst_23 = arith.constant 9.99999974E-6 : f32
    %47 = vector.broadcast %cst_23 : f32 to vector<32x1xf32>
    %48 = arith.addf %43, %47 : vector<32x1xf32>
    %49 = math.rsqrt %48 : vector<32x1xf32>
    %50 = vector.broadcast %49 : vector<32x1xf32> to vector<32x32xf32>
    %51 = arith.mulf %46, %50 : vector<32x32xf32>
    %c0_24 = arith.constant 0 : index
    %c0_25 = arith.constant 0 : index
    %52 = vector.load %arg6[%c0_24, %c0_25] : memref<32x1xf32, #tpu.memory_space<vmem>>, vector<32x1xf32>
    %53 = vector.broadcast %52 : vector<32x1xf32> to vector<32x32xf32>
    %54 = arith.mulf %51, %53 : vector<32x32xf32>
    %c0_26 = arith.constant 0 : index
    %c0_27 = arith.constant 0 : index
    %55 = vector.load %arg7[%c0_26, %c0_27] : memref<32x1xf32, #tpu.memory_space<vmem>>, vector<32x1xf32>
    %56 = vector.broadcast %55 : vector<32x1xf32> to vector<32x32xf32>
    %57 = arith.addf %54, %56 : vector<32x32xf32>
    %58 = arith.addf %44, %57 : vector<32x32xf32>
    %c0_28 = arith.constant 0 : index
    %c0_29 = arith.constant 0 : index
    %59 = vector.load %arg8[%c0_28, %c0_29] : memref<32x32xf32, #tpu.memory_space<vmem>>, vector<32x32xf32>
    tpu.vector_store %arg8[%c0_28, %c0_29], %58 {strides = array<i32>} : memref<32x32xf32, #tpu.memory_space<vmem>>, vector<32x32xf32>,
    return
  }
}

module attributes {stable_mosaic.version = 11 : i64} {
  func.func @_vq_kernel(%arg0: memref<32x32xf32, #tpu.memory_space<vmem>>, %arg1: memref<64x32xf32, #tpu.memory_space<vmem>>, %arg2: memref<32x64xf32, #tpu.memory_space<vmem>>, %arg3: memref<32x32xf32, #tpu.memory_space<vmem>>, %arg4: memref<1x1xf32, #tpu.memory_space<vmem>>, %arg5: memref<1x1xf32, #tpu.memory_space<vmem>>) attributes {dimension_semantics = [], scalar_prefetch = 0 : i64, scratch_operands = 0 : i64, tpu.core_type = #tpu.core_type<tc>} {
    %c0 = arith.constant 0 : index
    %c0_0 = arith.constant 0 : index
    %0 = vector.load %arg0[%c0, %c0_0] : memref<32x32xf32, #tpu.memory_space<vmem>>, vector<32x32xf32>
    %c0_1 = arith.constant 0 : index
    %c0_2 = arith.constant 0 : index
    %1 = vector.load %arg1[%c0_1, %c0_2] : memref<64x32xf32, #tpu.memory_space<vmem>>, vector<64x32xf32>
    %2 = arith.mulf %1, %1 : vector<64x32xf32>
    %cst = arith.constant dense<0.000000e+00> : vector<64xf32>
    %3 = vector.multi_reduction <add>, %2, %cst [1] : vector<64x32xf32> to vector<64xf32>
    %4 = vector.shape_cast %3 : vector<64xf32> to vector<64x1xf32>
    %cst_3 = arith.constant dense<0.000000e+00> : vector<64x32xf32>
    %5 = tpu.matmul %1, %0, %cst_3 {dimension_numbers = #tpu.dot_dimension_numbers<[1], [0], [0], [1], [0, 0, 1, 1], [], []>} : vector<64x32xf32>, vector<32x32xf32>, vector<64x32xf32> -> vector<64x32xf32>
    %cst_4 = arith.constant 2.000000e+00 : f32
    %6 = vector.broadcast %cst_4 : f32 to vector<64x32xf32>
    %7 = arith.mulf %6, %5 : vector<64x32xf32>
    %8 = vector.broadcast %4 : vector<64x1xf32> to vector<64x32xf32>
    %9 = arith.subf %8, %7 : vector<64x32xf32>
    %cst_5 = arith.constant dense<0x7F800000> : vector<32xf32>
    %10 = vector.multi_reduction <minimumf>, %9, %cst_5 [0] : vector<64x32xf32> to vector<32xf32>
    %11 = vector.shape_cast %10 : vector<32xf32> to vector<1x32xf32>
    %12 = tpu.iota {dimensions = array<i32: 0>} : vector<64x32xi32>
    %13 = vector.broadcast %11 : vector<1x32xf32> to vector<64x32xf32>
    %14 = arith.cmpf oeq, %9, %13 : vector<64x32xf32>
    %c64_i32 = arith.constant 64 : i32
    %15 = vector.broadcast %c64_i32 : i32 to vector<64x32xi32>
    %16 = arith.select %14, %12, %15 : vector<64x32xi1>, vector<64x32xi32>
    %cst_6 = arith.constant dense<2147483647> : vector<32xi32>
    %17 = vector.multi_reduction <minsi>, %16, %cst_6 [0] : vector<64x32xi32> to vector<32xi32>
    %18 = vector.shape_cast %17 : vector<32xi32> to vector<1x32xi32>
    %19 = vector.broadcast %18 : vector<1x32xi32> to vector<64x32xi32>
    %20 = arith.cmpi eq, %12, %19 : vector<64x32xi32>
    %21 = arith.extui %20 : vector<64x32xi1> to vector<64x32xi32>
    %22 = arith.sitofp %21 : vector<64x32xi32> to vector<64x32xf32>
    %c0_7 = arith.constant 0 : index
    %c0_8 = arith.constant 0 : index
    %23 = vector.load %arg2[%c0_7, %c0_8] : memref<32x64xf32, #tpu.memory_space<vmem>>, vector<32x64xf32>
    %cst_9 = arith.constant dense<0.000000e+00> : vector<32x32xf32>
    %24 = tpu.matmul %23, %22, %cst_9 {dimension_numbers = #tpu.dot_dimension_numbers<[1], [0], [0], [1], [0, 0, 1, 1], [], []>} : vector<32x64xf32>, vector<64x32xf32>, vector<32x32xf32> -> vector<32x32xf32>
    %c0_10 = arith.constant 0 : index
    %c0_11 = arith.constant 0 : index
    %25 = vector.load %arg3[%c0_10, %c0_11] : memref<32x32xf32, #tpu.memory_space<vmem>>, vector<32x32xf32>
    tpu.vector_store %arg3[%c0_10, %c0_11], %24 {strides = array<i32>} : memref<32x32xf32, #tpu.memory_space<vmem>>, vector<32x32xf32>,
    %26 = arith.subf %24, %0 : vector<32x32xf32>
    %27 = arith.mulf %26, %26 : vector<32x32xf32>
    %cst_12 = arith.constant dense<0.000000e+00> : vector<32xf32>
    %28 = vector.multi_reduction <add>, %27, %cst_12 [1] : vector<32x32xf32> to vector<32xf32>
    %29 = vector.shape_cast %28 : vector<32xf32> to vector<32x1xf32>
    %cst_13 = arith.constant dense<0.000000e+00> : vector<1xf32>
    %30 = vector.multi_reduction <add>, %29, %cst_13 [0] : vector<32x1xf32> to vector<1xf32>
    %31 = vector.shape_cast %30 : vector<1xf32> to vector<1x1xf32>
    %cst_14 = arith.constant 1.250000e+00 : f32
    %32 = vector.broadcast %cst_14 : f32 to vector<1x1xf32>
    %33 = arith.mulf %32, %31 : vector<1x1xf32>
    %cst_15 = arith.constant 9.765625E-4 : f32
    %34 = vector.broadcast %cst_15 : f32 to vector<1x1xf32>
    %35 = arith.mulf %33, %34 : vector<1x1xf32>
    %c0_16 = arith.constant 0 : index
    %c0_17 = arith.constant 0 : index
    %36 = vector.load %arg4[%c0_16, %c0_17] : memref<1x1xf32, #tpu.memory_space<vmem>>, vector<1x1xf32>
    tpu.vector_store %arg4[%c0_16, %c0_17], %35 {strides = array<i32>} : memref<1x1xf32, #tpu.memory_space<vmem>>, vector<1x1xf32>,
    %cst_18 = arith.constant dense<0.000000e+00> : vector<64xf32>
    %37 = vector.multi_reduction <add>, %22, %cst_18 [1] : vector<64x32xf32> to vector<64xf32>
    %38 = vector.shape_cast %37 : vector<64xf32> to vector<64x1xf32>
    %cst_19 = arith.constant 3.125000e-02 : f32
    %39 = vector.broadcast %cst_19 : f32 to vector<64x1xf32>
    %40 = arith.mulf %38, %39 : vector<64x1xf32>
    %cst_20 = arith.constant 1.000000e-10 : f32
    %41 = vector.broadcast %cst_20 : f32 to vector<64x1xf32>
    %42 = arith.addf %40, %41 : vector<64x1xf32>
    %43 = math.log %42 : vector<64x1xf32>
    %44 = arith.mulf %40, %43 : vector<64x1xf32>
    %cst_21 = arith.constant dense<0.000000e+00> : vector<1xf32>
    %45 = vector.multi_reduction <add>, %44, %cst_21 [0] : vector<64x1xf32> to vector<1xf32>
    %46 = vector.shape_cast %45 : vector<1xf32> to vector<1x1xf32>
    %cst_22 = arith.constant 0.000000e+00 : f32
    %47 = vector.broadcast %cst_22 : f32 to vector<1x1xf32>
    %48 = arith.subf %47, %46 : vector<1x1xf32>
    %49 = math.exp %48 : vector<1x1xf32>
    %c0_23 = arith.constant 0 : index
    %c0_24 = arith.constant 0 : index
    %50 = vector.load %arg5[%c0_23, %c0_24] : memref<1x1xf32, #tpu.memory_space<vmem>>, vector<1x1xf32>
    tpu.vector_store %arg5[%c0_23, %c0_24], %49 {strides = array<i32>} : memref<1x1xf32, #tpu.memory_space<vmem>>, vector<1x1xf32>,
    return
  }
}

module attributes {stable_mosaic.version = 11 : i64} {
  func.func @_deconv_bn_relu_kernel(%arg0: memref<4x128x32xf32, #tpu.memory_space<vmem>>, %arg1: memref<4x32x128xf32, #tpu.memory_space<vmem>>, %arg2: memref<32x1xf32, #tpu.memory_space<vmem>>, %arg3: memref<32x1xf32, #tpu.memory_space<vmem>>, %arg4: memref<4x32x32xf32, #tpu.memory_space<vmem>>) attributes {dimension_semantics = [], scalar_prefetch = 0 : i64, scratch_operands = 0 : i64, tpu.core_type = #tpu.core_type<tc>} {
    %c0 = arith.constant 0 : index
    %c0_0 = arith.constant 0 : index
    %c0_1 = arith.constant 0 : index
    %0 = vector.load %arg0[%c0, %c0_0, %c0_1] : memref<4x128x32xf32, #tpu.memory_space<vmem>>, vector<1x128x32xf32>
    %1 = vector.shape_cast %0 : vector<1x128x32xf32> to vector<128x32xf32>
    %cst = arith.constant 0.000000e+00 : f32
    %2 = vector.broadcast %cst : f32 to vector<128x32xf32>
    %3 = arith.maximumf %1, %2 : vector<128x32xf32>
    %c0_2 = arith.constant 0 : index
    %c0_3 = arith.constant 0 : index
    %c0_4 = arith.constant 0 : index
    %4 = vector.load %arg1[%c0_2, %c0_3, %c0_4] : memref<4x32x128xf32, #tpu.memory_space<vmem>>, vector<1x32x128xf32>
    %5 = vector.shape_cast %4 : vector<1x32x128xf32> to vector<32x128xf32>
    %cst_5 = arith.constant dense<0.000000e+00> : vector<32x32xf32>
    %6 = tpu.matmul %5, %3, %cst_5 {dimension_numbers = #tpu.dot_dimension_numbers<[1], [0], [0], [1], [0, 0, 1, 1], [], []>} : vector<32x128xf32>, vector<128x32xf32>, vector<32x32xf32> -> vector<32x32xf32>
    %c1 = arith.constant 1 : index
    %c0_6 = arith.constant 0 : index
    %c0_7 = arith.constant 0 : index
    %7 = vector.load %arg0[%c1, %c0_6, %c0_7] : memref<4x128x32xf32, #tpu.memory_space<vmem>>, vector<1x128x32xf32>
    %8 = vector.shape_cast %7 : vector<1x128x32xf32> to vector<128x32xf32>
    %cst_8 = arith.constant 0.000000e+00 : f32
    %9 = vector.broadcast %cst_8 : f32 to vector<128x32xf32>
    %10 = arith.maximumf %8, %9 : vector<128x32xf32>
    %c1_9 = arith.constant 1 : index
    %c0_10 = arith.constant 0 : index
    %c0_11 = arith.constant 0 : index
    %11 = vector.load %arg1[%c1_9, %c0_10, %c0_11] : memref<4x32x128xf32, #tpu.memory_space<vmem>>, vector<1x32x128xf32>
    %12 = vector.shape_cast %11 : vector<1x32x128xf32> to vector<32x128xf32>
    %cst_12 = arith.constant dense<0.000000e+00> : vector<32x32xf32>
    %13 = tpu.matmul %12, %10, %cst_12 {dimension_numbers = #tpu.dot_dimension_numbers<[1], [0], [0], [1], [0, 0, 1, 1], [], []>} : vector<32x128xf32>, vector<128x32xf32>, vector<32x32xf32> -> vector<32x32xf32>
    %c2 = arith.constant 2 : index
    %c0_13 = arith.constant 0 : index
    %c0_14 = arith.constant 0 : index
    %14 = vector.load %arg0[%c2, %c0_13, %c0_14] : memref<4x128x32xf32, #tpu.memory_space<vmem>>, vector<1x128x32xf32>
    %15 = vector.shape_cast %14 : vector<1x128x32xf32> to vector<128x32xf32>
    %cst_15 = arith.constant 0.000000e+00 : f32
    %16 = vector.broadcast %cst_15 : f32 to vector<128x32xf32>
    %17 = arith.maximumf %15, %16 : vector<128x32xf32>
    %c2_16 = arith.constant 2 : index
    %c0_17 = arith.constant 0 : index
    %c0_18 = arith.constant 0 : index
    %18 = vector.load %arg1[%c2_16, %c0_17, %c0_18] : memref<4x32x128xf32, #tpu.memory_space<vmem>>, vector<1x32x128xf32>
    %19 = vector.shape_cast %18 : vector<1x32x128xf32> to vector<32x128xf32>
    %cst_19 = arith.constant dense<0.000000e+00> : vector<32x32xf32>
    %20 = tpu.matmul %19, %17, %cst_19 {dimension_numbers = #tpu.dot_dimension_numbers<[1], [0], [0], [1], [0, 0, 1, 1], [], []>} : vector<32x128xf32>, vector<128x32xf32>, vector<32x32xf32> -> vector<32x32xf32>
    %c3 = arith.constant 3 : index
    %c0_20 = arith.constant 0 : index
    %c0_21 = arith.constant 0 : index
    %21 = vector.load %arg0[%c3, %c0_20, %c0_21] : memref<4x128x32xf32, #tpu.memory_space<vmem>>, vector<1x128x32xf32>
    %22 = vector.shape_cast %21 : vector<1x128x32xf32> to vector<128x32xf32>
    %cst_22 = arith.constant 0.000000e+00 : f32
    %23 = vector.broadcast %cst_22 : f32 to vector<128x32xf32>
    %24 = arith.maximumf %22, %23 : vector<128x32xf32>
    %c3_23 = arith.constant 3 : index
    %c0_24 = arith.constant 0 : index
    %c0_25 = arith.constant 0 : index
    %25 = vector.load %arg1[%c3_23, %c0_24, %c0_25] : memref<4x32x128xf32, #tpu.memory_space<vmem>>, vector<1x32x128xf32>
    %26 = vector.shape_cast %25 : vector<1x32x128xf32> to vector<32x128xf32>
    %cst_26 = arith.constant dense<0.000000e+00> : vector<32x32xf32>
    %27 = tpu.matmul %26, %24, %cst_26 {dimension_numbers = #tpu.dot_dimension_numbers<[1], [0], [0], [1], [0, 0, 1, 1], [], []>} : vector<32x128xf32>, vector<128x32xf32>, vector<32x32xf32> -> vector<32x32xf32>
    %cst_27 = arith.constant dense<0.000000e+00> : vector<32xf32>
    %28 = vector.multi_reduction <add>, %6, %cst_27 [1] : vector<32x32xf32> to vector<32xf32>
    %29 = vector.shape_cast %28 : vector<32xf32> to vector<32x1xf32>
    %cst_28 = arith.constant dense<0.000000e+00> : vector<32xf32>
    %30 = vector.multi_reduction <add>, %13, %cst_28 [1] : vector<32x32xf32> to vector<32xf32>
    %31 = vector.shape_cast %30 : vector<32xf32> to vector<32x1xf32>
    %32 = arith.addf %29, %31 : vector<32x1xf32>
    %cst_29 = arith.constant dense<0.000000e+00> : vector<32xf32>
    %33 = vector.multi_reduction <add>, %20, %cst_29 [1] : vector<32x32xf32> to vector<32xf32>
    %34 = vector.shape_cast %33 : vector<32xf32> to vector<32x1xf32>
    %35 = arith.addf %32, %34 : vector<32x1xf32>
    %cst_30 = arith.constant dense<0.000000e+00> : vector<32xf32>
    %36 = vector.multi_reduction <add>, %27, %cst_30 [1] : vector<32x32xf32> to vector<32xf32>
    %37 = vector.shape_cast %36 : vector<32xf32> to vector<32x1xf32>
    %38 = arith.addf %35, %37 : vector<32x1xf32>
    %39 = arith.mulf %6, %6 : vector<32x32xf32>
    %cst_31 = arith.constant dense<0.000000e+00> : vector<32xf32>
    %40 = vector.multi_reduction <add>, %39, %cst_31 [1] : vector<32x32xf32> to vector<32xf32>
    %41 = vector.shape_cast %40 : vector<32xf32> to vector<32x1xf32>
    %42 = arith.mulf %13, %13 : vector<32x32xf32>
    %cst_32 = arith.constant dense<0.000000e+00> : vector<32xf32>
    %43 = vector.multi_reduction <add>, %42, %cst_32 [1] : vector<32x32xf32> to vector<32xf32>
    %44 = vector.shape_cast %43 : vector<32xf32> to vector<32x1xf32>
    %45 = arith.addf %41, %44 : vector<32x1xf32>
    %46 = arith.mulf %20, %20 : vector<32x32xf32>
    %cst_33 = arith.constant dense<0.000000e+00> : vector<32xf32>
    %47 = vector.multi_reduction <add>, %46, %cst_33 [1] : vector<32x32xf32> to vector<32xf32>
    %48 = vector.shape_cast %47 : vector<32xf32> to vector<32x1xf32>
    %49 = arith.addf %45, %48 : vector<32x1xf32>
    %50 = arith.mulf %27, %27 : vector<32x32xf32>
    %cst_34 = arith.constant dense<0.000000e+00> : vector<32xf32>
    %51 = vector.multi_reduction <add>, %50, %cst_34 [1] : vector<32x32xf32> to vector<32xf32>
    %52 = vector.shape_cast %51 : vector<32xf32> to vector<32x1xf32>
    %53 = arith.addf %49, %52 : vector<32x1xf32>
    %cst_35 = arith.constant 7.812500e-03 : f32
    %54 = vector.broadcast %cst_35 : f32 to vector<32x1xf32>
    %55 = arith.mulf %38, %54 : vector<32x1xf32>
    %cst_36 = arith.constant 7.812500e-03 : f32
    %56 = vector.broadcast %cst_36 : f32 to vector<32x1xf32>
    %57 = arith.mulf %53, %56 : vector<32x1xf32>
    %58 = arith.mulf %55, %55 : vector<32x1xf32>
    %59 = arith.subf %57, %58 : vector<32x1xf32>
    %cst_37 = arith.constant 9.99999974E-6 : f32
    %60 = vector.broadcast %cst_37 : f32 to vector<32x1xf32>
    %61 = arith.addf %59, %60 : vector<32x1xf32>
    %62 = math.rsqrt %61 : vector<32x1xf32>
    %c0_38 = arith.constant 0 : index
    %c0_39 = arith.constant 0 : index
    %63 = vector.load %arg2[%c0_38, %c0_39] : memref<32x1xf32, #tpu.memory_space<vmem>>, vector<32x1xf32>
    %64 = arith.mulf %62, %63 : vector<32x1xf32>
    %c0_40 = arith.constant 0 : index
    %c0_41 = arith.constant 0 : index
    %65 = vector.load %arg3[%c0_40, %c0_41] : memref<32x1xf32, #tpu.memory_space<vmem>>, vector<32x1xf32>
    %66 = arith.mulf %55, %64 : vector<32x1xf32>
    %67 = arith.subf %65, %66 : vector<32x1xf32>
    %68 = vector.broadcast %64 : vector<32x1xf32> to vector<32x32xf32>
    %69 = arith.mulf %6, %68 : vector<32x32xf32>
    %70 = vector.broadcast %67 : vector<32x1xf32> to vector<32x32xf32>
    %71 = arith.addf %69, %70 : vector<32x32xf32>
    %cst_42 = arith.constant 0.000000e+00 : f32
    %72 = vector.broadcast %cst_42 : f32 to vector<32x32xf32>
    %73 = arith.maximumf %71, %72 : vector<32x32xf32>
    %c0_43 = arith.constant 0 : index
    %c0_44 = arith.constant 0 : index
    %c0_45 = arith.constant 0 : index
    %74 = vector.load %arg4[%c0_43, %c0_44, %c0_45] : memref<4x32x32xf32, #tpu.memory_space<vmem>>, vector<1x32x32xf32>
    %75 = vector.shape_cast %74 : vector<1x32x32xf32> to vector<32x32xf32>
    %76 = vector.shape_cast %73 : vector<32x32xf32> to vector<1x32x32xf32>
    tpu.vector_store %arg4[%c0_43, %c0_44, %c0_45], %76 {strides = array<i32>} : memref<4x32x32xf32, #tpu.memory_space<vmem>>, vector<1x32x32xf32>,
    %77 = vector.broadcast %64 : vector<32x1xf32> to vector<32x32xf32>
    %78 = arith.mulf %13, %77 : vector<32x32xf32>
    %79 = vector.broadcast %67 : vector<32x1xf32> to vector<32x32xf32>
    %80 = arith.addf %78, %79 : vector<32x32xf32>
    %cst_46 = arith.constant 0.000000e+00 : f32
    %81 = vector.broadcast %cst_46 : f32 to vector<32x32xf32>
    %82 = arith.maximumf %80, %81 : vector<32x32xf32>
    %c1_47 = arith.constant 1 : index
    %c0_48 = arith.constant 0 : index
    %c0_49 = arith.constant 0 : index
    %83 = vector.load %arg4[%c1_47, %c0_48, %c0_49] : memref<4x32x32xf32, #tpu.memory_space<vmem>>, vector<1x32x32xf32>
    %84 = vector.shape_cast %83 : vector<1x32x32xf32> to vector<32x32xf32>
    %85 = vector.shape_cast %82 : vector<32x32xf32> to vector<1x32x32xf32>
    tpu.vector_store %arg4[%c1_47, %c0_48, %c0_49], %85 {strides = array<i32>} : memref<4x32x32xf32, #tpu.memory_space<vmem>>, vector<1x32x32xf32>,
    %86 = vector.broadcast %64 : vector<32x1xf32> to vector<32x32xf32>
    %87 = arith.mulf %20, %86 : vector<32x32xf32>
    %88 = vector.broadcast %67 : vector<32x1xf32> to vector<32x32xf32>
    %89 = arith.addf %87, %88 : vector<32x32xf32>
    %cst_50 = arith.constant 0.000000e+00 : f32
    %90 = vector.broadcast %cst_50 : f32 to vector<32x32xf32>
    %91 = arith.maximumf %89, %90 : vector<32x32xf32>
    %c2_51 = arith.constant 2 : index
    %c0_52 = arith.constant 0 : index
    %c0_53 = arith.constant 0 : index
    %92 = vector.load %arg4[%c2_51, %c0_52, %c0_53] : memref<4x32x32xf32, #tpu.memory_space<vmem>>, vector<1x32x32xf32>
    %93 = vector.shape_cast %92 : vector<1x32x32xf32> to vector<32x32xf32>
    %94 = vector.shape_cast %91 : vector<32x32xf32> to vector<1x32x32xf32>
    tpu.vector_store %arg4[%c2_51, %c0_52, %c0_53], %94 {strides = array<i32>} : memref<4x32x32xf32, #tpu.memory_space<vmem>>, vector<1x32x32xf32>,
    %95 = vector.broadcast %64 : vector<32x1xf32> to vector<32x32xf32>
    %96 = arith.mulf %27, %95 : vector<32x32xf32>
    %97 = vector.broadcast %67 : vector<32x1xf32> to vector<32x32xf32>
    %98 = arith.addf %96, %97 : vector<32x32xf32>
    %cst_54 = arith.constant 0.000000e+00 : f32
    %99 = vector.broadcast %cst_54 : f32 to vector<32x32xf32>
    %100 = arith.maximumf %98, %99 : vector<32x32xf32>
    %c3_55 = arith.constant 3 : index
    %c0_56 = arith.constant 0 : index
    %c0_57 = arith.constant 0 : index
    %101 = vector.load %arg4[%c3_55, %c0_56, %c0_57] : memref<4x32x32xf32, #tpu.memory_space<vmem>>, vector<1x32x32xf32>
    %102 = vector.shape_cast %101 : vector<1x32x32xf32> to vector<32x32xf32>
    %103 = vector.shape_cast %100 : vector<32x32xf32> to vector<1x32x32xf32>
    tpu.vector_store %arg4[%c3_55, %c0_56, %c0_57], %103 {strides = array<i32>} : memref<4x32x32xf32, #tpu.memory_space<vmem>>, vector<1x32x32xf32>,
    return
  }
}

module attributes {stable_mosaic.version = 11 : i64} {
  func.func @_deconv_bias_tanh_kernel(%arg0: memref<4x128x128xf32, #tpu.memory_space<vmem>>, %arg1: memref<4x3x128xf32, #tpu.memory_space<vmem>>, %arg2: memref<3x1xf32, #tpu.memory_space<vmem>>, %arg3: memref<4x3x128xf32, #tpu.memory_space<vmem>>) attributes {dimension_semantics = [], scalar_prefetch = 0 : i64, scratch_operands = 0 : i64, tpu.core_type = #tpu.core_type<tc>} {
    %c0 = arith.constant 0 : index
    %c0_0 = arith.constant 0 : index
    %c0_1 = arith.constant 0 : index
    %0 = vector.load %arg1[%c0, %c0_0, %c0_1] : memref<4x3x128xf32, #tpu.memory_space<vmem>>, vector<1x3x128xf32>
    %1 = vector.shape_cast %0 : vector<1x3x128xf32> to vector<3x128xf32>
    %c0_2 = arith.constant 0 : index
    %c0_3 = arith.constant 0 : index
    %c0_4 = arith.constant 0 : index
    %2 = vector.load %arg0[%c0_2, %c0_3, %c0_4] : memref<4x128x128xf32, #tpu.memory_space<vmem>>, vector<1x128x128xf32>
    %3 = vector.shape_cast %2 : vector<1x128x128xf32> to vector<128x128xf32>
    %cst = arith.constant dense<0.000000e+00> : vector<3x128xf32>
    %4 = tpu.matmul %1, %3, %cst {dimension_numbers = #tpu.dot_dimension_numbers<[1], [0], [0], [1], [0, 0, 1, 1], [], []>} : vector<3x128xf32>, vector<128x128xf32>, vector<3x128xf32> -> vector<3x128xf32>
    %c0_5 = arith.constant 0 : index
    %c0_6 = arith.constant 0 : index
    %5 = vector.load %arg2[%c0_5, %c0_6] : memref<3x1xf32, #tpu.memory_space<vmem>>, vector<3x1xf32>
    %6 = vector.broadcast %5 : vector<3x1xf32> to vector<3x128xf32>
    %7 = arith.addf %4, %6 : vector<3x128xf32>
    %8 = math.tanh %7 : vector<3x128xf32>
    %c0_7 = arith.constant 0 : index
    %c0_8 = arith.constant 0 : index
    %c0_9 = arith.constant 0 : index
    %9 = vector.load %arg3[%c0_7, %c0_8, %c0_9] : memref<4x3x128xf32, #tpu.memory_space<vmem>>, vector<1x3x128xf32>
    %10 = vector.shape_cast %9 : vector<1x3x128xf32> to vector<3x128xf32>
    %11 = vector.shape_cast %8 : vector<3x128xf32> to vector<1x3x128xf32>
    tpu.vector_store %arg3[%c0_7, %c0_8, %c0_9], %11 {strides = array<i32>} : memref<4x3x128xf32, #tpu.memory_space<vmem>>, vector<1x3x128xf32>,
    %c1 = arith.constant 1 : index
    %c0_10 = arith.constant 0 : index
    %c0_11 = arith.constant 0 : index
    %12 = vector.load %arg1[%c1, %c0_10, %c0_11] : memref<4x3x128xf32, #tpu.memory_space<vmem>>, vector<1x3x128xf32>
    %13 = vector.shape_cast %12 : vector<1x3x128xf32> to vector<3x128xf32>
    %c1_12 = arith.constant 1 : index
    %c0_13 = arith.constant 0 : index
    %c0_14 = arith.constant 0 : index
    %14 = vector.load %arg0[%c1_12, %c0_13, %c0_14] : memref<4x128x128xf32, #tpu.memory_space<vmem>>, vector<1x128x128xf32>
    %15 = vector.shape_cast %14 : vector<1x128x128xf32> to vector<128x128xf32>
    %cst_15 = arith.constant dense<0.000000e+00> : vector<3x128xf32>
    %16 = tpu.matmul %13, %15, %cst_15 {dimension_numbers = #tpu.dot_dimension_numbers<[1], [0], [0], [1], [0, 0, 1, 1], [], []>} : vector<3x128xf32>, vector<128x128xf32>, vector<3x128xf32> -> vector<3x128xf32>
    %c0_16 = arith.constant 0 : index
    %c0_17 = arith.constant 0 : index
    %17 = vector.load %arg2[%c0_16, %c0_17] : memref<3x1xf32, #tpu.memory_space<vmem>>, vector<3x1xf32>
    %18 = vector.broadcast %17 : vector<3x1xf32> to vector<3x128xf32>
    %19 = arith.addf %16, %18 : vector<3x128xf32>
    %20 = math.tanh %19 : vector<3x128xf32>
    %c1_18 = arith.constant 1 : index
    %c0_19 = arith.constant 0 : index
    %c0_20 = arith.constant 0 : index
    %21 = vector.load %arg3[%c1_18, %c0_19, %c0_20] : memref<4x3x128xf32, #tpu.memory_space<vmem>>, vector<1x3x128xf32>
    %22 = vector.shape_cast %21 : vector<1x3x128xf32> to vector<3x128xf32>
    %23 = vector.shape_cast %20 : vector<3x128xf32> to vector<1x3x128xf32>
    tpu.vector_store %arg3[%c1_18, %c0_19, %c0_20], %23 {strides = array<i32>} : memref<4x3x128xf32, #tpu.memory_space<vmem>>, vector<1x3x128xf32>,
    %c2 = arith.constant 2 : index
    %c0_21 = arith.constant 0 : index
    %c0_22 = arith.constant 0 : index
    %24 = vector.load %arg1[%c2, %c0_21, %c0_22] : memref<4x3x128xf32, #tpu.memory_space<vmem>>, vector<1x3x128xf32>
    %25 = vector.shape_cast %24 : vector<1x3x128xf32> to vector<3x128xf32>
    %c2_23 = arith.constant 2 : index
    %c0_24 = arith.constant 0 : index
    %c0_25 = arith.constant 0 : index
    %26 = vector.load %arg0[%c2_23, %c0_24, %c0_25] : memref<4x128x128xf32, #tpu.memory_space<vmem>>, vector<1x128x128xf32>
    %27 = vector.shape_cast %26 : vector<1x128x128xf32> to vector<128x128xf32>
    %cst_26 = arith.constant dense<0.000000e+00> : vector<3x128xf32>
    %28 = tpu.matmul %25, %27, %cst_26 {dimension_numbers = #tpu.dot_dimension_numbers<[1], [0], [0], [1], [0, 0, 1, 1], [], []>} : vector<3x128xf32>, vector<128x128xf32>, vector<3x128xf32> -> vector<3x128xf32>
    %c0_27 = arith.constant 0 : index
    %c0_28 = arith.constant 0 : index
    %29 = vector.load %arg2[%c0_27, %c0_28] : memref<3x1xf32, #tpu.memory_space<vmem>>, vector<3x1xf32>
    %30 = vector.broadcast %29 : vector<3x1xf32> to vector<3x128xf32>
    %31 = arith.addf %28, %30 : vector<3x128xf32>
    %32 = math.tanh %31 : vector<3x128xf32>
    %c2_29 = arith.constant 2 : index
    %c0_30 = arith.constant 0 : index
    %c0_31 = arith.constant 0 : index
    %33 = vector.load %arg3[%c2_29, %c0_30, %c0_31] : memref<4x3x128xf32, #tpu.memory_space<vmem>>, vector<1x3x128xf32>
    %34 = vector.shape_cast %33 : vector<1x3x128xf32> to vector<3x128xf32>
    %35 = vector.shape_cast %32 : vector<3x128xf32> to vector<1x3x128xf32>
    tpu.vector_store %arg3[%c2_29, %c0_30, %c0_31], %35 {strides = array<i32>} : memref<4x3x128xf32, #tpu.memory_space<vmem>>, vector<1x3x128xf32>,
    %c3 = arith.constant 3 : index
    %c0_32 = arith.constant 0 : index
    %c0_33 = arith.constant 0 : index
    %36 = vector.load %arg1[%c3, %c0_32, %c0_33] : memref<4x3x128xf32, #tpu.memory_space<vmem>>, vector<1x3x128xf32>
    %37 = vector.shape_cast %36 : vector<1x3x128xf32> to vector<3x128xf32>
    %c3_34 = arith.constant 3 : index
    %c0_35 = arith.constant 0 : index
    %c0_36 = arith.constant 0 : index
    %38 = vector.load %arg0[%c3_34, %c0_35, %c0_36] : memref<4x128x128xf32, #tpu.memory_space<vmem>>, vector<1x128x128xf32>
    %39 = vector.shape_cast %38 : vector<1x128x128xf32> to vector<128x128xf32>
    %cst_37 = arith.constant dense<0.000000e+00> : vector<3x128xf32>
    %40 = tpu.matmul %37, %39, %cst_37 {dimension_numbers = #tpu.dot_dimension_numbers<[1], [0], [0], [1], [0, 0, 1, 1], [], []>} : vector<3x128xf32>, vector<128x128xf32>, vector<3x128xf32> -> vector<3x128xf32>
    %c0_38 = arith.constant 0 : index
    %c0_39 = arith.constant 0 : index
    %41 = vector.load %arg2[%c0_38, %c0_39] : memref<3x1xf32, #tpu.memory_space<vmem>>, vector<3x1xf32>
    %42 = vector.broadcast %41 : vector<3x1xf32> to vector<3x128xf32>
    %43 = arith.addf %40, %42 : vector<3x128xf32>
    %44 = math.tanh %43 : vector<3x128xf32>
    %c3_40 = arith.constant 3 : index
    %c0_41 = arith.constant 0 : index
    %c0_42 = arith.constant 0 : index
    %45 = vector.load %arg3[%c3_40, %c0_41, %c0_42] : memref<4x3x128xf32, #tpu.memory_space<vmem>>, vector<1x3x128xf32>
    %46 = vector.shape_cast %45 : vector<1x3x128xf32> to vector<3x128xf32>
    %47 = vector.shape_cast %44 : vector<3x128xf32> to vector<1x3x128xf32>
    tpu.vector_store %arg3[%c3_40, %c0_41, %c0_42], %47 {strides = array<i32>} : memref<4x3x128xf32, #tpu.memory_space<vmem>>, vector<1x3x128xf32>,
    return
  }
}

</mosaic_0001>

<llo_original>
// kernel: forward.9
$region0: #{forward.9}
  #allocation0 [shape = 'u32[]', space=smem, size = 0x4, offset = 0x4, fixed_abs, tag = 'smem constant byte address 0x4 - core index']
  #allocation1 [shape = 'u32[72,128]{1,0:T(1,128)}', space=vmem, size = 0x9000, scoped, tag = 'internal scratch']
  %s0 = inlined_call_operand.vmem [shape: f32[48,128], index: 0, kind: input, shape index: {}]
  %s1 = inlined_call_operand.vmem [shape: f32[32,48], index: 1, kind: input, shape index: {}]
  %s2 = inlined_call_operand.vmem [shape: f32[32,1], index: 2, kind: input, shape index: {}]
  %s3 = inlined_call_operand.vmem [shape: f32[32,1], index: 3, kind: input, shape index: {}]
  %s4 = inlined_call_operand.vmem [shape: f32[32,128], index: 4, kind: output, shape index: {}]
  %s5 = sld [smem:[#allocation0]]
  $region26: #{forward.9} parent=0
    _
  %s7 = ssub.s32 1, %s5
  %s8 = scalar_select 0, %s7, %s5
  // Predicated region
  $region2: #{forward.9} parent=0 // pred_check
    _
  $region3: #{forward.9} parent=0 // pred_check_branch
    %10 = sbr.rel (0) target = $region5
  $region4: #{forward.9} parent=0 // pred_region
    _
  $region5: #{forward.9} parent=0 // pred_fallthru
    _
  // Predicated region
  $region6: #{forward.9} parent=0 // pred_check
    _
  $region7: #{forward.9} parent=0 // pred_check_branch
    %12 = sbr.rel (0) target = $region9
  $region8: #{forward.9} parent=0 // pred_region
    _
  $region9: #{forward.9} parent=0 // pred_fallthru
    _
  // Predicated region
  $region10: #{forward.9} parent=0 // pred_check
    _
  $region11: #{forward.9} parent=0 // pred_check_branch
    %14 = sbr.rel (0) target = $region13
  $region12: #{forward.9} parent=0 // pred_region
    _
  $region13: #{forward.9} parent=0 // pred_fallthru
    _
  // Predicated region
  $region14: #{forward.9} parent=0 // pred_check
    _
  $region15: #{forward.9} parent=0 // pred_check_branch
    %16 = sbr.rel (0) target = $region17
  $region16: #{forward.9} parent=0 // pred_region
    _
  $region17: #{forward.9} parent=0 // pred_fallthru
    _
  %v17 = vld [vmem:[%s1] sm:$0xff]
  %v18 = vld [vmem:[%s1 + $0x8] sm:$0xff]
  %v19 = vld [vmem:[%s1 + $0x10] sm:$0xff]
  %v20 = vld [vmem:[%s1 + $0x18] sm:$0xff]
  %v21 = vld [vmem:[%s0] sm:$0xff]
  %v22 = vld [vmem:[%s0 + $0x8] sm:$0xff]
  %v23 = vld [vmem:[%s0 + $0x10] sm:$0xff]
  %v24 = vld [vmem:[%s0 + $0x18] sm:$0xff]
  %v25 = vld [vmem:[%s0 + $0x20] sm:$0xff]
  %v26 = vld [vmem:[%s0 + $0x28] sm:$0xff]
  %vm27 = vcmask 392192
  %v29 = vsel %vm27, %v17, 0
  %v32 = vsel %vm27, %v18, 0
  %v35 = vsel %vm27, %v19, 0
  %v38 = vsel %vm27, %v20, 0
  %40 = vmatpush.msra.mxu0 0.0
  %41 = vmatpush.msra.mxu0 0.0
  %42 = vmatpush.msra.mxu0 0.0
  %43 = vmatpush.msra.mxu0 0.0
  %44 = vmatpush.msra.mxu0 0.0
  %45 = vmatpush.msra.mxu0 0.0
  %46 = vmatpush.msra.mxu0 0.0
  %47 = vmatpush.msra.mxu0 0.0
  %48 = vmatpush.msra.mxu0 0.0
  %49 = vmatpush.msra.mxu0 0.0
  %50 = vmatpush.msra.mxu0 %v26
  %51 = vmatpush.msra.mxu0 %v25
  %52 = vmatpush.msra.mxu0 %v24
  %53 = vmatpush.msra.mxu0 %v23
  %54 = vmatpush.msra.mxu0 %v22
  %55 = vmatpush.msra.mxu0 %v21
  %56 = vmatmul.f32.gmra.mxu0 %v29
  %v57 = vpop.f32.mrf.mxu0
  %v58 = vadd.f32 0.0, %v57
  %59 = vmatmul.f32.gmra.mxu0 %v32
  %v60 = vpop.f32.mrf.mxu0
  %v61 = vadd.f32 0.0, %v60
  %62 = vmatmul.f32.gmra.mxu0 %v35
  %v63 = vpop.f32.mrf.mxu0
  %v64 = vadd.f32 0.0, %v63
  %65 = vmatmul.f32.gmra.mxu0 %v38
  %v66 = vpop.f32.mrf.mxu0
  %v67 = vadd.f32 0.0, %v66
  %68 = vdwg.mxu0
  %69 = vadd.xlane.f32.xlu0 %v58
  %v70 = vpop.xlane.xlu0 %69
  %71 = vadd.xlane.f32.xlu0 %v61
  %v72 = vpop.xlane.xlu0 %71
  %73 = vadd.xlane.f32.xlu0 %v64
  %v74 = vpop.xlane.xlu0 %73
  %75 = vadd.xlane.f32.xlu0 %v67
  %v76 = vpop.xlane.xlu0 %75
  %v77 = vmul.f32 %v70, 0.0078125
  %v78 = vmul.f32 %v72, 0.0078125
  %v79 = vmul.f32 %v74, 0.0078125
  %v80 = vmul.f32 %v76, 0.0078125
  %v81 = vmul.f32 %v58, %v58
  %v82 = vmul.f32 %v61, %v61
  %v83 = vmul.f32 %v64, %v64
  %v84 = vmul.f32 %v67, %v67
  %85 = vadd.xlane.f32.xlu0 %v81
  %v86 = vpop.xlane.xlu0 %85
  %87 = vadd.xlane.f32.xlu0 %v82
  %v88 = vpop.xlane.xlu0 %87
  %89 = vadd.xlane.f32.xlu0 %v83
  %v90 = vpop.xlane.xlu0 %89
  %91 = vadd.xlane.f32.xlu0 %v84
  %v92 = vpop.xlane.xlu0 %91
  %v93 = vmul.f32 %v86, 0.0078125
  %v94 = vmul.f32 %v88, 0.0078125
  %v95 = vmul.f32 %v90, 0.0078125
  %v96 = vmul.f32 %v92, 0.0078125
  %v97 = vmul.f32 %v77, %v77
  %v98 = vmul.f32 %v78, %v78
  %v99 = vmul.f32 %v79, %v79
  %v100 = vmul.f32 %v80, %v80
  %v101 = vsub.f32 %v93, %v97
  %v102 = vsub.f32 %v94, %v98
  %v103 = vsub.f32 %v95, %v99
  %v104 = vsub.f32 %v96, %v100
  %v105 = vsub.f32 %v58, %v77
  %v106 = vsub.f32 %v61, %v78
  %v107 = vsub.f32 %v64, %v79
  %v108 = vsub.f32 %v67, %v80
  %v109 = vadd.f32 %v101, 1e-05
  %v110 = vadd.f32 %v102, 1e-05
  %v111 = vadd.f32 %v103, 1e-05
  %v112 = vadd.f32 %v104, 1e-05
  %v113 = vrsqrt.pop %v109
  %v114 = vmul.f32 %v113, %v109
  %v115 = vmul.f32 %v114, %v113
  %v116 = vmul.f32 0.5, %v115
  %v117 = vsub.f32 1.5, %v116
  %v118 = vmul.f32 %v113, %v117
  %vm119 = vweird.f32 %v109
  %vm120 = vweird.f32 %v113
  %vm121 = vmor %vm119, %vm120
  %v122 = vsel %vm121, %v113, %v118
  %v123 = vrsqrt.pop %v110
  %v124 = vmul.f32 %v123, %v110
  %v125 = vmul.f32 %v124, %v123
  %v126 = vmul.f32 0.5, %v125
  %v127 = vsub.f32 1.5, %v126
  %v128 = vmul.f32 %v123, %v127
  %vm129 = vweird.f32 %v110
  %vm130 = vweird.f32 %v123
  %vm131 = vmor %vm129, %vm130
  %v132 = vsel %vm131, %v123, %v128
  %v133 = vrsqrt.pop %v111
  %v134 = vmul.f32 %v133, %v111
  %v135 = vmul.f32 %v134, %v133
  %v136 = vmul.f32 0.5, %v135
  %v137 = vsub.f32 1.5, %v136
  %v138 = vmul.f32 %v133, %v137
  %vm139 = vweird.f32 %v111
  %vm140 = vweird.f32 %v133
  %vm141 = vmor %vm139, %vm140
  %v142 = vsel %vm141, %v133, %v138
  %v143 = vrsqrt.pop %v112
  %v144 = vmul.f32 %v143, %v112
  %v145 = vmul.f32 %v144, %v143
  %v146 = vmul.f32 0.5, %v145
  %v147 = vsub.f32 1.5, %v146
  %v148 = vmul.f32 %v143, %v147
  %vm149 = vweird.f32 %v112
  %vm150 = vweird.f32 %v143
  %vm151 = vmor %vm149, %vm150
  %v152 = vsel %vm151, %v143, %v148
  %v153 = vmul.f32 %v105, %v122
  %v154 = vmul.f32 %v106, %v132
  %v155 = vmul.f32 %v107, %v142
  %v156 = vmul.f32 %v108, %v152
  %v157 = vld [vmem:[%s2] sm:$0xff]
  %v158 = vld [vmem:[%s2 + $0x8] sm:$0xff]
  %v159 = vld [vmem:[%s2 + $0x10] sm:$0xff]
  %v160 = vld [vmem:[%s2 + $0x18] sm:$0xff]
  %162 = vset.pattern.permute.xlu0 0
  %163 = vperm.xlu0 %162, %v157
  %v164 = vpop.permute.xlu0 %163
  %167 = vset.pattern.permute.xlu0 0
  %168 = vperm.xlu0 %167, %v158
  %v169 = vpop.permute.xlu0 %168
  %172 = vset.pattern.permute.xlu0 0
  %173 = vperm.xlu0 %172, %v159
  %v174 = vpop.permute.xlu0 %173
  %177 = vset.pattern.permute.xlu0 0
  %178 = vperm.xlu0 %177, %v160
  %v179 = vpop.permute.xlu0 %178
  %v181 = vmul.f32 %v153, %v164
  %v182 = vmul.f32 %v154, %v169
  %v183 = vmul.f32 %v155, %v174
  %v184 = vmul.f32 %v156, %v179
  %v185 = vld [vmem:[%s3] sm:$0xff]
  %v186 = vld [vmem:[%s3 + $0x8] sm:$0xff]
  %v187 = vld [vmem:[%s3 + $0x10] sm:$0xff]
  %v188 = vld [vmem:[%s3 + $0x18] sm:$0xff]
  %190 = vset.pattern.permute.xlu0 0
  %191 = vperm.xlu0 %190, %v185
  %v192 = vpop.permute.xlu0 %191
  %195 = vset.pattern.permute.xlu0 0
  %196 = vperm.xlu0 %195, %v186
  %v197 = vpop.permute.xlu0 %196
  %200 = vset.pattern.permute.xlu0 0
  %201 = vperm.xlu0 %200, %v187
  %v202 = vpop.permute.xlu0 %201
  %205 = vset.pattern.permute.xlu0 0
  %206 = vperm.xlu0 %205, %v188
  %v207 = vpop.permute.xlu0 %206
  %v209 = vadd.f32 %v181, %v192
  %v210 = vadd.f32 %v182, %v197
  %v211 = vadd.f32 %v183, %v202
  %v212 = vadd.f32 %v184, %v207
  %v213 = vmax.f32 %v209, 0.0
  %v214 = vmax.f32 %v210, 0.0
  %v215 = vmax.f32 %v211, 0.0
  %v216 = vmax.f32 %v212, 0.0
  %217 = vst [vmem:[%s4] sm:$0xff] %v213
  %218 = vst [vmem:[%s4 + $0x8] sm:$0xff] %v214
  %219 = vst [vmem:[%s4 + $0x10] sm:$0xff] %v215
  %220 = vst [vmem:[%s4 + $0x18] sm:$0xff] %v216
  // Predicated region
  $region18: #{forward.9} parent=0 // pred_check
    _
  $region19: #{forward.9} parent=0 // pred_check_branch
    %222 = sbr.rel (0) target = $region21
  $region20: #{forward.9} parent=0 // pred_region
    _
  $region21: #{forward.9} parent=0 // pred_fallthru
    _
  // Predicated region
  $region22: #{forward.9} parent=0 // pred_check
    _
  $region23: #{forward.9} parent=0 // pred_check_branch
    %224 = sbr.rel (0) target = $region25
  $region24: #{forward.9} parent=0 // pred_region
    _
  $region25: #{forward.9} parent=0 // pred_fallthru
    _

// kernel: forward.10
$region0: #{forward.10}
  #allocation0 [shape = 'u32[]', space=smem, size = 0x4, offset = 0x4, fixed_abs, tag = 'smem constant byte address 0x4 - core index']
  #allocation1 [shape = 'u32[72,128]{1,0:T(1,128)}', space=vmem, size = 0x9000, scoped, tag = 'internal scratch']
  %s0 = inlined_call_operand.vmem [shape: f32[512,32], index: 0, kind: input, shape index: {}]
  %s1 = inlined_call_operand.vmem [shape: f32[32,512], index: 1, kind: input, shape index: {}]
  %s2 = inlined_call_operand.vmem [shape: f32[32,1], index: 2, kind: input, shape index: {}]
  %s3 = inlined_call_operand.vmem [shape: f32[32,32], index: 3, kind: output, shape index: {}]
  %s4 = sld [smem:[#allocation0]]
  $region22: #{forward.10} parent=0
    _
  %s6 = ssub.s32 1, %s4
  %s7 = scalar_select 0, %s6, %s4
  // Predicated region
  $region2: #{forward.10} parent=0 // pred_check
    _
  $region3: #{forward.10} parent=0 // pred_check_branch
    %9 = sbr.rel (0) target = $region5
  $region4: #{forward.10} parent=0 // pred_region
    _
  $region5: #{forward.10} parent=0 // pred_fallthru
    _
  // Predicated region
  $region6: #{forward.10} parent=0 // pred_check
    _
  $region7: #{forward.10} parent=0 // pred_check_branch
    %11 = sbr.rel (0) target = $region9
  $region8: #{forward.10} parent=0 // pred_region
    _
  $region9: #{forward.10} parent=0 // pred_fallthru
    _
  // Predicated region
  $region10: #{forward.10} parent=0 // pred_check
    _
  $region11: #{forward.10} parent=0 // pred_check_branch
    %13 = sbr.rel (0) target = $region13
  $region12: #{forward.10} parent=0 // pred_region
    _
  $region13: #{forward.10} parent=0 // pred_fallthru
    _
  %v14 = vld [vmem:[%s1] sm:$0xff]
  %v15 = vld [vmem:[%s1 + $0x8] sm:$0xff]
  %v16 = vld [vmem:[%s1 + $0x10] sm:$0xff]
  %v17 = vld [vmem:[%s1 + $0x18] sm:$0xff]
  %v18 = vld [vmem:[%s1 + $0x20] sm:$0xff]
  %v19 = vld [vmem:[%s1 + $0x28] sm:$0xff]
  %v20 = vld [vmem:[%s1 + $0x30] sm:$0xff]
  %v21 = vld [vmem:[%s1 + $0x38] sm:$0xff]
  %v22 = vld [vmem:[%s1 + $0x40] sm:$0xff]
  %v23 = vld [vmem:[%s1 + $0x48] sm:$0xff]
  %v24 = vld [vmem:[%s1 + $0x50] sm:$0xff]
  %v25 = vld [vmem:[%s1 + $0x58] sm:$0xff]
  %v26 = vld [vmem:[%s1 + $0x60] sm:$0xff]
  %v27 = vld [vmem:[%s1 + $0x68] sm:$0xff]
  %v28 = vld [vmem:[%s1 + $0x70] sm:$0xff]
  %v29 = vld [vmem:[%s1 + $0x78] sm:$0xff]
  %v30 = vld [vmem:[%s0] sm:$0xff]
  %v31 = vld [vmem:[%s0 + $0x8] sm:$0xff]
  %v32 = vld [vmem:[%s0 + $0x10] sm:$0xff]
  %v33 = vld [vmem:[%s0 + $0x18] sm:$0xff]
  %v34 = vld [vmem:[%s0 + $0x20] sm:$0xff]
  %v35 = vld [vmem:[%s0 + $0x28] sm:$0xff]
  %v36 = vld [vmem:[%s0 + $0x30] sm:$0xff]
  %v37 = vld [vmem:[%s0 + $0x38] sm:$0xff]
  %v38 = vld [vmem:[%s0 + $0x40] sm:$0xff]
  %v39 = vld [vmem:[%s0 + $0x48] sm:$0xff]
  %v40 = vld [vmem:[%s0 + $0x50] sm:$0xff]
  %v41 = vld [vmem:[%s0 + $0x58] sm:$0xff]
  %v42 = vld [vmem:[%s0 + $0x60] sm:$0xff]
  %v43 = vld [vmem:[%s0 + $0x68] sm:$0xff]
  %v44 = vld [vmem:[%s0 + $0x70] sm:$0xff]
  %v45 = vld [vmem:[%s0 + $0x78] sm:$0xff]
  %v46 = vld [vmem:[%s0 + $0x80] sm:$0xff]
  %v47 = vld [vmem:[%s0 + $0x88] sm:$0xff]
  %v48 = vld [vmem:[%s0 + $0x90] sm:$0xff]
  %v49 = vld [vmem:[%s0 + $0x98] sm:$0xff]
  %v50 = vld [vmem:[%s0 + $0xa0] sm:$0xff]
  %v51 = vld [vmem:[%s0 + $0xa8] sm:$0xff]
  %v52 = vld [vmem:[%s0 + $0xb0] sm:$0xff]
  %v53 = vld [vmem:[%s0 + $0xb8] sm:$0xff]
  %v54 = vld [vmem:[%s0 + $0xc0] sm:$0xff]
  %v55 = vld [vmem:[%s0 + $0xc8] sm:$0xff]
  %v56 = vld [vmem:[%s0 + $0xd0] sm:$0xff]
  %v57 = vld [vmem:[%s0 + $0xd8] sm:$0xff]
  %v58 = vld [vmem:[%s0 + $0xe0] sm:$0xff]
  %v59 = vld [vmem:[%s0 + $0xe8] sm:$0xff]
  %v60 = vld [vmem:[%s0 + $0xf0] sm:$0xff]
  %v61 = vld [vmem:[%s0 + $0xf8] sm:$0xff]
  %v62 = vld [vmem:[%s0 + $0x100] sm:$0xff]
  %v63 = vld [vmem:[%s0 + $0x108] sm:$0xff]
  %v64 = vld [vmem:[%s0 + $0x110] sm:$0xff]
  %v65 = vld [vmem:[%s0 + $0x118] sm:$0xff]
  %v66 = vld [vmem:[%s0 + $0x120] sm:$0xff]
  %v67 = vld [vmem:[%s0 + $0x128] sm:$0xff]
  %v68 = vld [vmem:[%s0 + $0x130] sm:$0xff]
  %v69 = vld [vmem:[%s0 + $0x138] sm:$0xff]
  %v70 = vld [vmem:[%s0 + $0x140] sm:$0xff]
  %v71 = vld [vmem:[%s0 + $0x148] sm:$0xff]
  %v72 = vld [vmem:[%s0 + $0x150] sm:$0xff]
  %v73 = vld [vmem:[%s0 + $0x158] sm:$0xff]
  %v74 = vld [vmem:[%s0 + $0x160] sm:$0xff]
  %v75 = vld [vmem:[%s0 + $0x168] sm:$0xff]
  %v76 = vld [vmem:[%s0 + $0x170] sm:$0xff]
  %v77 = vld [vmem:[%s0 + $0x178] sm:$0xff]
  %v78 = vld [vmem:[%s0 + $0x180] sm:$0xff]
  %v79 = vld [vmem:[%s0 + $0x188] sm:$0xff]
  %v80 = vld [vmem:[%s0 + $0x190] sm:$0xff]
  %v81 = vld [vmem:[%s0 + $0x198] sm:$0xff]
  %v82 = vld [vmem:[%s0 + $0x1a0] sm:$0xff]
  %v83 = vld [vmem:[%s0 + $0x1a8] sm:$0xff]
  %v84 = vld [vmem:[%s0 + $0x1b0] sm:$0xff]
  %v85 = vld [vmem:[%s0 + $0x1b8] sm:$0xff]
  %v86 = vld [vmem:[%s0 + $0x1c0] sm:$0xff]
  %v87 = vld [vmem:[%s0 + $0x1c8] sm:$0xff]
  %v88 = vld [vmem:[%s0 + $0x1d0] sm:$0xff]
  %v89 = vld [vmem:[%s0 + $0x1d8] sm:$0xff]
  %v90 = vld [vmem:[%s0 + $0x1e0] sm:$0xff]
  %v91 = vld [vmem:[%s0 + $0x1e8] sm:$0xff]
  %v92 = vld [vmem:[%s0 + $0x1f0] sm:$0xff]
  %v93 = vld [vmem:[%s0 + $0x1f8] sm:$0xff]
  %v94 = vld [vmem:[%s2] sm:$0xff]
  %v95 = vld [vmem:[%s2 + $0x8] sm:$0xff]
  %v96 = vld [vmem:[%s2 + $0x10] sm:$0xff]
  %v97 = vld [vmem:[%s2 + $0x18] sm:$0xff]
  %99 = vset.pattern.permute.xlu0 0
  %100 = vperm.xlu0 %99, %v94
  %v101 = vpop.permute.xlu0 %100
  %104 = vset.pattern.permute.xlu0 0
  %105 = vperm.xlu0 %104, %v95
  %v106 = vpop.permute.xlu0 %105
  %109 = vset.pattern.permute.xlu0 0
  %110 = vperm.xlu0 %109, %v96
  %v111 = vpop.permute.xlu0 %110
  %114 = vset.pattern.permute.xlu0 0
  %115 = vperm.xlu0 %114, %v97
  %v116 = vpop.permute.xlu0 %115
  %118 = vmatpush.msra.mxu0 %v45
  %119 = vmatpush.msra.mxu0 %v44
  %120 = vmatpush.msra.mxu0 %v43
  %121 = vmatpush.msra.mxu0 %v42
  %122 = vmatpush.msra.mxu0 %v41
  %123 = vmatpush.msra.mxu0 %v40
  %124 = vmatpush.msra.mxu0 %v39
  %125 = vmatpush.msra.mxu0 %v38
  %126 = vmatpush.msra.mxu0 %v37
  %127 = vmatpush.msra.mxu0 %v36
  %128 = vmatpush.msra.mxu0 %v35
  %129 = vmatpush.msra.mxu0 %v34
  %130 = vmatpush.msra.mxu0 %v33
  %131 = vmatpush.msra.mxu0 %v32
  %132 = vmatpush.msra.mxu0 %v31
  %133 = vmatpush.msra.mxu0 %v30
  %134 = vmatmul.f32.gmra.mxu0 %v14
  %v135 = vpop.f32.mrf.mxu0
  %v136 = vadd.f32 %v101, %v135
  %137 = vmatmul.f32.gmra.mxu0 %v18
  %v138 = vpop.f32.mrf.mxu0
  %v139 = vadd.f32 %v106, %v138
  %140 = vmatmul.f32.gmra.mxu0 %v22
  %v141 = vpop.f32.mrf.mxu0
  %v142 = vadd.f32 %v111, %v141
  %143 = vmatmul.f32.gmra.mxu0 %v26
  %v144 = vpop.f32.mrf.mxu0
  %v145 = vadd.f32 %v116, %v144
  %146 = vdwg.mxu0
  %147 = vmatpush.msra.mxu0 %v61
  %148 = vmatpush.msra.mxu0 %v60
  %149 = vmatpush.msra.mxu0 %v59
  %150 = vmatpush.msra.mxu0 %v58
  %151 = vmatpush.msra.mxu0 %v57
  %152 = vmatpush.msra.mxu0 %v56
  %153 = vmatpush.msra.mxu0 %v55
  %154 = vmatpush.msra.mxu0 %v54
  %155 = vmatpush.msra.mxu0 %v53
  %156 = vmatpush.msra.mxu0 %v52
  %157 = vmatpush.msra.mxu0 %v51
  %158 = vmatpush.msra.mxu0 %v50
  %159 = vmatpush.msra.mxu0 %v49
  %160 = vmatpush.msra.mxu0 %v48
  %161 = vmatpush.msra.mxu0 %v47
  %162 = vmatpush.msra.mxu0 %v46
  %163 = vmatmul.f32.gmra.mxu0 %v15
  %v164 = vpop.f32.mrf.mxu0
  %v165 = vadd.f32 %v136, %v164
  %166 = vmatmul.f32.gmra.mxu0 %v19
  %v167 = vpop.f32.mrf.mxu0
  %v168 = vadd.f32 %v139, %v167
  %169 = vmatmul.f32.gmra.mxu0 %v23
  %v170 = vpop.f32.mrf.mxu0
  %v171 = vadd.f32 %v142, %v170
  %172 = vmatmul.f32.gmra.mxu0 %v27
  %v173 = vpop.f32.mrf.mxu0
  %v174 = vadd.f32 %v145, %v173
  %175 = vdwg.mxu0
  %176 = vmatpush.msra.mxu0 %v77
  %177 = vmatpush.msra.mxu0 %v76
  %178 = vmatpush.msra.mxu0 %v75
  %179 = vmatpush.msra.mxu0 %v74
  %180 = vmatpush.msra.mxu0 %v73
  %181 = vmatpush.msra.mxu0 %v72
  %182 = vmatpush.msra.mxu0 %v71
  %183 = vmatpush.msra.mxu0 %v70
  %184 = vmatpush.msra.mxu0 %v69
  %185 = vmatpush.msra.mxu0 %v68
  %186 = vmatpush.msra.mxu0 %v67
  %187 = vmatpush.msra.mxu0 %v66
  %188 = vmatpush.msra.mxu0 %v65
  %189 = vmatpush.msra.mxu0 %v64
  %190 = vmatpush.msra.mxu0 %v63
  %191 = vmatpush.msra.mxu0 %v62
  %192 = vmatmul.f32.gmra.mxu0 %v16
  %v193 = vpop.f32.mrf.mxu0
  %v194 = vadd.f32 %v165, %v193
  %195 = vmatmul.f32.gmra.mxu0 %v20
  %v196 = vpop.f32.mrf.mxu0
  %v197 = vadd.f32 %v168, %v196
  %198 = vmatmul.f32.gmra.mxu0 %v24
  %v199 = vpop.f32.mrf.mxu0
  %v200 = vadd.f32 %v171, %v199
  %201 = vmatmul.f32.gmra.mxu0 %v28
  %v202 = vpop.f32.mrf.mxu0
  %v203 = vadd.f32 %v174, %v202
  %204 = vdwg.mxu0
  %205 = vmatpush.msra.mxu0 %v93
  %206 = vmatpush.msra.mxu0 %v92
  %207 = vmatpush.msra.mxu0 %v91
  %208 = vmatpush.msra.mxu0 %v90
  %209 = vmatpush.msra.mxu0 %v89
  %210 = vmatpush.msra.mxu0 %v88
  %211 = vmatpush.msra.mxu0 %v87
  %212 = vmatpush.msra.mxu0 %v86
  %213 = vmatpush.msra.mxu0 %v85
  %214 = vmatpush.msra.mxu0 %v84
  %215 = vmatpush.msra.mxu0 %v83
  %216 = vmatpush.msra.mxu0 %v82
  %217 = vmatpush.msra.mxu0 %v81
  %218 = vmatpush.msra.mxu0 %v80
  %219 = vmatpush.msra.mxu0 %v79
  %220 = vmatpush.msra.mxu0 %v78
  %221 = vmatmul.f32.gmra.mxu0 %v17
  %v222 = vpop.f32.mrf.mxu0
  %v223 = vadd.f32 %v194, %v222
  %224 = vmatmul.f32.gmra.mxu0 %v21
  %v225 = vpop.f32.mrf.mxu0
  %v226 = vadd.f32 %v197, %v225
  %227 = vmatmul.f32.gmra.mxu0 %v25
  %v228 = vpop.f32.mrf.mxu0
  %v229 = vadd.f32 %v200, %v228
  %230 = vmatmul.f32.gmra.mxu0 %v29
  %v231 = vpop.f32.mrf.mxu0
  %v232 = vadd.f32 %v203, %v231
  %233 = vdwg.mxu0
  %vm234 = vcmask 261120
  %235 = vst.msk [vmem:[%s3] sm:$0xff] %vm234, %v223
  %236 = vst.msk [vmem:[%s3 + $0x8] sm:$0xff] %vm234, %v226
  %237 = vst.msk [vmem:[%s3 + $0x10] sm:$0xff] %vm234, %v229
  %238 = vst.msk [vmem:[%s3 + $0x18] sm:$0xff] %vm234, %v232
  // Predicated region
  $region14: #{forward.10} parent=0 // pred_check
    _
  $region15: #{forward.10} parent=0 // pred_check_branch
    %240 = sbr.rel (0) target = $region17
  $region16: #{forward.10} parent=0 // pred_region
    _
  $region17: #{forward.10} parent=0 // pred_fallthru
    _
  // Predicated region
  $region18: #{forward.10} parent=0 // pred_check
    _
  $region19: #{forward.10} parent=0 // pred_check_branch
    %242 = sbr.rel (0) target = $region21
  $region20: #{forward.10} parent=0 // pred_region
    _
  $region21: #{forward.10} parent=0 // pred_fallthru
    _

// kernel: forward.11
$region0: #{forward.11}
  #allocation0 [shape = 'u32[]', space=smem, size = 0x4, offset = 0x4, fixed_abs, tag = 'smem constant byte address 0x4 - core index']
  #allocation1 [shape = 'u32[72,128]{1,0:T(1,128)}', space=vmem, size = 0x9000, scoped, tag = 'internal scratch']
  %s0 = inlined_call_operand.vmem [shape: f32[288,32], index: 0, kind: input, shape index: {}]
  %s1 = inlined_call_operand.vmem [shape: f32[32,32], index: 1, kind: input, shape index: {}]
  %s2 = inlined_call_operand.vmem [shape: f32[32,288], index: 2, kind: input, shape index: {}]
  %s3 = inlined_call_operand.vmem [shape: f32[32,1], index: 3, kind: input, shape index: {}]
  %s4 = inlined_call_operand.vmem [shape: f32[32,1], index: 4, kind: input, shape index: {}]
  %s5 = inlined_call_operand.vmem [shape: f32[32,32], index: 5, kind: input, shape index: {}]
  %s6 = inlined_call_operand.vmem [shape: f32[32,1], index: 6, kind: input, shape index: {}]
  %s7 = inlined_call_operand.vmem [shape: f32[32,1], index: 7, kind: input, shape index: {}]
  %s8 = inlined_call_operand.vmem [shape: f32[32,32], index: 8, kind: output, shape index: {}]
  %s9 = sld [smem:[#allocation0]]
  $region42: #{forward.11} parent=0
    _
  %s11 = ssub.s32 1, %s9
  %s12 = scalar_select 0, %s11, %s9
  // Predicated region
  $region2: #{forward.11} parent=0 // pred_check
    _
  $region3: #{forward.11} parent=0 // pred_check_branch
    %14 = sbr.rel (0) target = $region5
  $region4: #{forward.11} parent=0 // pred_region
    _
  $region5: #{forward.11} parent=0 // pred_fallthru
    _
  // Predicated region
  $region6: #{forward.11} parent=0 // pred_check
    _
  $region7: #{forward.11} parent=0 // pred_check_branch
    %16 = sbr.rel (0) target = $region9
  $region8: #{forward.11} parent=0 // pred_region
    _
  $region9: #{forward.11} parent=0 // pred_fallthru
    _
  // Predicated region
  $region10: #{forward.11} parent=0 // pred_check
    _
  $region11: #{forward.11} parent=0 // pred_check_branch
    %18 = sbr.rel (0) target = $region13
  $region12: #{forward.11} parent=0 // pred_region
    _
  $region13: #{forward.11} parent=0 // pred_fallthru
    _
  // Predicated region
  $region14: #{forward.11} parent=0 // pred_check
    _
  $region15: #{forward.11} parent=0 // pred_check_branch
    %20 = sbr.rel (0) target = $region17
  $region16: #{forward.11} parent=0 // pred_region
    _
  $region17: #{forward.11} parent=0 // pred_fallthru
    _
  // Predicated region
  $region18: #{forward.11} parent=0 // pred_check
    _
  $region19: #{forward.11} parent=0 // pred_check_branch
    %22 = sbr.rel (0) target = $region21
  $region20: #{forward.11} parent=0 // pred_region
    _
  $region21: #{forward.11} parent=0 // pred_fallthru
    _
  // Predicated region
  $region22: #{forward.11} parent=0 // pred_check
    _
  $region23: #{forward.11} parent=0 // pred_check_branch
    %24 = sbr.rel (0) target = $region25
  $region24: #{forward.11} parent=0 // pred_region
    _
  $region25: #{forward.11} parent=0 // pred_fallthru
    _
  // Predicated region
  $region26: #{forward.11} parent=0 // pred_check
    _
  $region27: #{forward.11} parent=0 // pred_check_branch
    %26 = sbr.rel (0) target = $region29
  $region28: #{forward.11} parent=0 // pred_region
    _
  $region29: #{forward.11} parent=0 // pred_fallthru
    _
  // Predicated region
  $region30: #{forward.11} parent=0 // pred_check
    _
  $region31: #{forward.11} parent=0 // pred_check_branch
    %28 = sbr.rel (0) target = $region33
  $region32: #{forward.11} parent=0 // pred_region
    _
  $region33: #{forward.11} parent=0 // pred_fallthru
    _
  %v29 = vld [vmem:[%s0] sm:$0xff]
  %v30 = vld [vmem:[%s0 + $0x8] sm:$0xff]
  %v31 = vld [vmem:[%s0 + $0x10] sm:$0xff]
  %v32 = vld [vmem:[%s0 + $0x18] sm:$0xff]
  %v33 = vld [vmem:[%s0 + $0x20] sm:$0xff]
  %v34 = vld [vmem:[%s0 + $0x28] sm:$0xff]
  %v35 = vld [vmem:[%s0 + $0x30] sm:$0xff]
  %v36 = vld [vmem:[%s0 + $0x38] sm:$0xff]
  %v37 = vld [vmem:[%s0 + $0x40] sm:$0xff]
  %v38 = vld [vmem:[%s0 + $0x48] sm:$0xff]
  %v39 = vld [vmem:[%s0 + $0x50] sm:$0xff]
  %v40 = vld [vmem:[%s0 + $0x58] sm:$0xff]
  %v41 = vld [vmem:[%s0 + $0x60] sm:$0xff]
  %v42 = vld [vmem:[%s0 + $0x68] sm:$0xff]
  %v43 = vld [vmem:[%s0 + $0x70] sm:$0xff]
  %v44 = vld [vmem:[%s0 + $0x78] sm:$0xff]
  %v45 = vld [vmem:[%s0 + $0x80] sm:$0xff]
  %v46 = vld [vmem:[%s0 + $0x88] sm:$0xff]
  %v47 = vld [vmem:[%s0 + $0x90] sm:$0xff]
  %v48 = vld [vmem:[%s0 + $0x98] sm:$0xff]
  %v49 = vld [vmem:[%s0 + $0xa0] sm:$0xff]
  %v50 = vld [vmem:[%s0 + $0xa8] sm:$0xff]
  %v51 = vld [vmem:[%s0 + $0xb0] sm:$0xff]
  %v52 = vld [vmem:[%s0 + $0xb8] sm:$0xff]
  %v53 = vld [vmem:[%s0 + $0xc0] sm:$0xff]
  %v54 = vld [vmem:[%s0 + $0xc8] sm:$0xff]
  %v55 = vld [vmem:[%s0 + $0xd0] sm:$0xff]
  %v56 = vld [vmem:[%s0 + $0xd8] sm:$0xff]
  %v57 = vld [vmem:[%s0 + $0xe0] sm:$0xff]
  %v58 = vld [vmem:[%s0 + $0xe8] sm:$0xff]
  %v59 = vld [vmem:[%s0 + $0xf0] sm:$0xff]
  %v60 = vld [vmem:[%s0 + $0xf8] sm:$0xff]
  %v61 = vld [vmem:[%s0 + $0x100] sm:$0xff]
  %v62 = vld [vmem:[%s0 + $0x108] sm:$0xff]
  %v63 = vld [vmem:[%s0 + $0x110] sm:$0xff]
  %v64 = vld [vmem:[%s0 + $0x118] sm:$0xff]
  %v65 = vmax.f32 %v29, 0.0
  %v66 = vmax.f32 %v30, 0.0
  %v67 = vmax.f32 %v31, 0.0
  %v68 = vmax.f32 %v32, 0.0
  %v69 = vmax.f32 %v33, 0.0
  %v70 = vmax.f32 %v34, 0.0
  %v71 = vmax.f32 %v35, 0.0
  %v72 = vmax.f32 %v36, 0.0
  %v73 = vmax.f32 %v37, 0.0
  %v74 = vmax.f32 %v38, 0.0
  %v75 = vmax.f32 %v39, 0.0
  %v76 = vmax.f32 %v40, 0.0
  %v77 = vmax.f32 %v41, 0.0
  %v78 = vmax.f32 %v42, 0.0
  %v79 = vmax.f32 %v43, 0.0
  %v80 = vmax.f32 %v44, 0.0
  %v81 = vmax.f32 %v45, 0.0
  %v82 = vmax.f32 %v46, 0.0
  %v83 = vmax.f32 %v47, 0.0
  %v84 = vmax.f32 %v48, 0.0
  %v85 = vmax.f32 %v49, 0.0
  %v86 = vmax.f32 %v50, 0.0
  %v87 = vmax.f32 %v51, 0.0
  %v88 = vmax.f32 %v52, 0.0
  %v89 = vmax.f32 %v53, 0.0
  %v90 = vmax.f32 %v54, 0.0
  %v91 = vmax.f32 %v55, 0.0
  %v92 = vmax.f32 %v56, 0.0
  %v93 = vmax.f32 %v57, 0.0
  %v94 = vmax.f32 %v58, 0.0
  %v95 = vmax.f32 %v59, 0.0
  %v96 = vmax.f32 %v60, 0.0
  %v97 = vmax.f32 %v61, 0.0
  %v98 = vmax.f32 %v62, 0.0
  %v99 = vmax.f32 %v63, 0.0
  %v100 = vmax.f32 %v64, 0.0
  %v101 = vld [vmem:[%s2] sm:$0xff]
  %v102 = vld [vmem:[%s2 + $0x8] sm:$0xff]
  %v103 = vld [vmem:[%s2 + $0x10] sm:$0xff]
  %v104 = vld [vmem:[%s2 + $0x18] sm:$0xff]
  %v105 = vld [vmem:[%s2 + $0x20] sm:$0xff]
  %v106 = vld [vmem:[%s2 + $0x28] sm:$0xff]
  %v107 = vld [vmem:[%s2 + $0x30] sm:$0xff]
  %v108 = vld [vmem:[%s2 + $0x38] sm:$0xff]
  %v109 = vld [vmem:[%s2 + $0x40] sm:$0xff]
  %v110 = vld [vmem:[%s2 + $0x48] sm:$0xff]
  %v111 = vld [vmem:[%s2 + $0x50] sm:$0xff]
  %v112 = vld [vmem:[%s2 + $0x58] sm:$0xff]
  %vm113 = vcmask 261120
  %v115 = vsel %vm113, %v103, 0
  %v118 = vsel %vm113, %v106, 0
  %v121 = vsel %vm113, %v109, 0
  %v124 = vsel %vm113, %v112, 0
  %126 = vmatpush.msra.mxu0 %v80
  %127 = vmatpush.msra.mxu0 %v79
  %128 = vmatpush.msra.mxu0 %v78
  %129 = vmatpush.msra.mxu0 %v77
  %130 = vmatpush.msra.mxu0 %v76
  %131 = vmatpush.msra.mxu0 %v75
  %132 = vmatpush.msra.mxu0 %v74
  %133 = vmatpush.msra.mxu0 %v73
  %134 = vmatpush.msra.mxu0 %v72
  %135 = vmatpush.msra.mxu0 %v71
  %136 = vmatpush.msra.mxu0 %v70
  %137 = vmatpush.msra.mxu0 %v69
  %138 = vmatpush.msra.mxu0 %v68
  %139 = vmatpush.msra.mxu0 %v67
  %140 = vmatpush.msra.mxu0 %v66
  %141 = vmatpush.msra.mxu0 %v65
  %142 = vmatmul.f32.gmra.mxu0 %v101
  %v143 = vpop.f32.mrf.mxu0
  %v144 = vadd.f32 0.0, %v143
  %145 = vmatmul.f32.gmra.mxu0 %v104
  %v146 = vpop.f32.mrf.mxu0
  %v147 = vadd.f32 0.0, %v146
  %148 = vmatmul.f32.gmra.mxu0 %v107
  %v149 = vpop.f32.mrf.mxu0
  %v150 = vadd.f32 0.0, %v149
  %151 = vmatmul.f32.gmra.mxu0 %v110
  %v152 = vpop.f32.mrf.mxu0
  %v153 = vadd.f32 0.0, %v152
  %154 = vdwg.mxu0
  %155 = vmatpush.msra.mxu0 %v96
  %156 = vmatpush.msra.mxu0 %v95
  %157 = vmatpush.msra.mxu0 %v94
  %158 = vmatpush.msra.mxu0 %v93
  %159 = vmatpush.msra.mxu0 %v92
  %160 = vmatpush.msra.mxu0 %v91
  %161 = vmatpush.msra.mxu0 %v90
  %162 = vmatpush.msra.mxu0 %v89
  %163 = vmatpush.msra.mxu0 %v88
  %164 = vmatpush.msra.mxu0 %v87
  %165 = vmatpush.msra.mxu0 %v86
  %166 = vmatpush.msra.mxu0 %v85
  %167 = vmatpush.msra.mxu0 %v84
  %168 = vmatpush.msra.mxu0 %v83
  %169 = vmatpush.msra.mxu0 %v82
  %170 = vmatpush.msra.mxu0 %v81
  %171 = vmatmul.f32.gmra.mxu0 %v102
  %v172 = vpop.f32.mrf.mxu0
  %v173 = vadd.f32 %v144, %v172
  %174 = vmatmul.f32.gmra.mxu0 %v105
  %v175 = vpop.f32.mrf.mxu0
  %v176 = vadd.f32 %v147, %v175
  %177 = vmatmul.f32.gmra.mxu0 %v108
  %v178 = vpop.f32.mrf.mxu0
  %v179 = vadd.f32 %v150, %v178
  %180 = vmatmul.f32.gmra.mxu0 %v111
  %v181 = vpop.f32.mrf.mxu0
  %v182 = vadd.f32 %v153, %v181
  %183 = vdwg.mxu0
  %184 = vmatpush.msra.mxu0 0.0
  %185 = vmatpush.msra.mxu0 0.0
  %186 = vmatpush.msra.mxu0 0.0
  %187 = vmatpush.msra.mxu0 0.0
  %188 = vmatpush.msra.mxu0 0.0
  %189 = vmatpush.msra.mxu0 0.0
  %190 = vmatpush.msra.mxu0 0.0
  %191 = vmatpush.msra.mxu0 0.0
  %192 = vmatpush.msra.mxu0 0.0
  %193 = vmatpush.msra.mxu0 0.0
  %194 = vmatpush.msra.mxu0 0.0
  %195 = vmatpush.msra.mxu0 0.0
  %196 = vmatpush.msra.mxu0 %v100
  %197 = vmatpush.msra.mxu0 %v99
  %198 = vmatpush.msra.mxu0 %v98
  %199 = vmatpush.msra.mxu0 %v97
  %200 = vmatmul.f32.gmra.mxu0 %v115
  %v201 = vpop.f32.mrf.mxu0
  %v202 = vadd.f32 %v173, %v201
  %203 = vmatmul.f32.gmra.mxu0 %v118
  %v204 = vpop.f32.mrf.mxu0
  %v205 = vadd.f32 %v176, %v204
  %206 = vmatmul.f32.gmra.mxu0 %v121
  %v207 = vpop.f32.mrf.mxu0
  %v208 = vadd.f32 %v179, %v207
  %209 = vmatmul.f32.gmra.mxu0 %v124
  %v210 = vpop.f32.mrf.mxu0
  %v211 = vadd.f32 %v182, %v210
  %212 = vdwg.mxu0
  %v213 = vsel %vm113, %v202, 0.0
  %214 = vadd.xlane.f32.xlu0 %v213
  %v215 = vpop.xlane.xlu0 %214
  %v216 = vsel %vm113, %v205, 0.0
  %217 = vadd.xlane.f32.xlu0 %v216
  %v218 = vpop.xlane.xlu0 %217
  %v219 = vsel %vm113, %v208, 0.0
  %220 = vadd.xlane.f32.xlu0 %v219
  %v221 = vpop.xlane.xlu0 %220
  %v222 = vsel %vm113, %v211, 0.0
  %223 = vadd.xlane.f32.xlu0 %v222
  %v224 = vpop.xlane.xlu0 %223
  %v225 = vmul.f32 %v215, 0.03125
  %v226 = vmul.f32 %v218, 0.03125
  %v227 = vmul.f32 %v221, 0.03125
  %v228 = vmul.f32 %v224, 0.03125
  %v229 = vmul.f32 %v202, %v202
  %v230 = vmul.f32 %v205, %v205
  %v231 = vmul.f32 %v208, %v208
  %v232 = vmul.f32 %v211, %v211
  %v233 = vsel %vm113, %v229, 0.0
  %234 = vadd.xlane.f32.xlu0 %v233
  %v235 = vpop.xlane.xlu0 %234
  %v236 = vsel %vm113, %v230, 0.0
  %237 = vadd.xlane.f32.xlu0 %v236
  %v238 = vpop.xlane.xlu0 %237
  %v239 = vsel %vm113, %v231, 0.0
  %240 = vadd.xlane.f32.xlu0 %v239
  %v241 = vpop.xlane.xlu0 %240
  %v242 = vsel %vm113, %v232, 0.0
  %243 = vadd.xlane.f32.xlu0 %v242
  %v244 = vpop.xlane.xlu0 %243
  %v245 = vmul.f32 %v235, 0.03125
  %v246 = vmul.f32 %v238, 0.03125
  %v247 = vmul.f32 %v241, 0.03125
  %v248 = vmul.f32 %v244, 0.03125
  %v249 = vmul.f32 %v225, %v225
  %v250 = vmul.f32 %v226, %v226
  %v251 = vmul.f32 %v227, %v227
  %v252 = vmul.f32 %v228, %v228
  %v253 = vsub.f32 %v245, %v249
  %v254 = vsub.f32 %v246, %v250
  %v255 = vsub.f32 %v247, %v251
  %v256 = vsub.f32 %v248, %v252
  %v257 = vsub.f32 %v202, %v225
  %v258 = vsub.f32 %v205, %v226
  %v259 = vsub.f32 %v208, %v227
  %v260 = vsub.f32 %v211, %v228
  %v261 = vadd.f32 %v253, 1e-05
  %v262 = vadd.f32 %v254, 1e-05
  %v263 = vadd.f32 %v255, 1e-05
  %v264 = vadd.f32 %v256, 1e-05
  %v265 = vrsqrt.pop %v261
  %v266 = vmul.f32 %v265, %v261
  %v267 = vmul.f32 %v266, %v265
  %v268 = vmul.f32 0.5, %v267
  %v269 = vsub.f32 1.5, %v268
  %v270 = vmul.f32 %v265, %v269
  %vm271 = vweird.f32 %v261
  %vm272 = vweird.f32 %v265
  %vm273 = vmor %vm271, %vm272
  %v274 = vsel %vm273, %v265, %v270
  %v275 = vrsqrt.pop %v262
  %v276 = vmul.f32 %v275, %v262
  %v277 = vmul.f32 %v276, %v275
  %v278 = vmul.f32 0.5, %v277
  %v279 = vsub.f32 1.5, %v278
  %v280 = vmul.f32 %v275, %v279
  %vm281 = vweird.f32 %v262
  %vm282 = vweird.f32 %v275
  %vm283 = vmor %vm281, %vm282
  %v284 = vsel %vm283, %v275, %v280
  %v285 = vrsqrt.pop %v263
  %v286 = vmul.f32 %v285, %v263
  %v287 = vmul.f32 %v286, %v285
  %v288 = vmul.f32 0.5, %v287
  %v289 = vsub.f32 1.5, %v288
  %v290 = vmul.f32 %v285, %v289
  %vm291 = vweird.f32 %v263
  %vm292 = vweird.f32 %v285
  %vm293 = vmor %vm291, %vm292
  %v294 = vsel %vm293, %v285, %v290
  %v295 = vrsqrt.pop %v264
  %v296 = vmul.f32 %v295, %v264
  %v297 = vmul.f32 %v296, %v295
  %v298 = vmul.f32 0.5, %v297
  %v299 = vsub.f32 1.5, %v298
  %v300 = vmul.f32 %v295, %v299
  %vm301 = vweird.f32 %v264
  %vm302 = vweird.f32 %v295
  %vm303 = vmor %vm301, %vm302
  %v304 = vsel %vm303, %v295, %v300
  %v305 = vmul.f32 %v257, %v274
  %v306 = vmul.f32 %v258, %v284
  %v307 = vmul.f32 %v259, %v294
  %v308 = vmul.f32 %v260, %v304
  %v309 = vld [vmem:[%s3] sm:$0xff]
  %v310 = vld [vmem:[%s3 + $0x8] sm:$0xff]
  %v311 = vld [vmem:[%s3 + $0x10] sm:$0xff]
  %v312 = vld [vmem:[%s3 + $0x18] sm:$0xff]
  %314 = vset.pattern.permute.xlu0 0
  %315 = vperm.xlu0 %314, %v309
  %v316 = vpop.permute.xlu0 %315
  %319 = vset.pattern.permute.xlu0 0
  %320 = vperm.xlu0 %319, %v310
  %v321 = vpop.permute.xlu0 %320
  %324 = vset.pattern.permute.xlu0 0
  %325 = vperm.xlu0 %324, %v311
  %v326 = vpop.permute.xlu0 %325
  %329 = vset.pattern.permute.xlu0 0
  %330 = vperm.xlu0 %329, %v312
  %v331 = vpop.permute.xlu0 %330
  %v333 = vmul.f32 %v305, %v316
  %v334 = vmul.f32 %v306, %v321
  %v335 = vmul.f32 %v307, %v326
  %v336 = vmul.f32 %v308, %v331
  %v337 = vld [vmem:[%s4] sm:$0xff]
  %v338 = vld [vmem:[%s4 + $0x8] sm:$0xff]
  %v339 = vld [vmem:[%s4 + $0x10] sm:$0xff]
  %v340 = vld [vmem:[%s4 + $0x18] sm:$0xff]
  %342 = vset.pattern.permute.xlu0 0
  %343 = vperm.xlu0 %342, %v337
  %v344 = vpop.permute.xlu0 %343
  %347 = vset.pattern.permute.xlu0 0
  %348 = vperm.xlu0 %347, %v338
  %v349 = vpop.permute.xlu0 %348
  %352 = vset.pattern.permute.xlu0 0
  %353 = vperm.xlu0 %352, %v339
  %v354 = vpop.permute.xlu0 %353
  %357 = vset.pattern.permute.xlu0 0
  %358 = vperm.xlu0 %357, %v340
  %v359 = vpop.permute.xlu0 %358
  %v361 = vadd.f32 %v333, %v344
  %v362 = vadd.f32 %v334, %v349
  %v363 = vadd.f32 %v335, %v354
  %v364 = vadd.f32 %v336, %v359
  %v365 = vmax.f32 %v361, 0.0
  %v366 = vmax.f32 %v362, 0.0
  %v367 = vmax.f32 %v363, 0.0
  %v368 = vmax.f32 %v364, 0.0
  %v369 = vld [vmem:[%s5] sm:$0xff]
  %v370 = vld [vmem:[%s5 + $0x8] sm:$0xff]
  %v371 = vld [vmem:[%s5 + $0x10] sm:$0xff]
  %v372 = vld [vmem:[%s5 + $0x18] sm:$0xff]
  %v374 = vsel %vm113, %v369, 0
  %v377 = vsel %vm113, %v370, 0
  %v380 = vsel %vm113, %v371, 0
  %v383 = vsel %vm113, %v372, 0
  %385 = vmatpush.msra.mxu0 0.0
  %386 = vmatpush.msra.mxu0 0.0
  %387 = vmatpush.msra.mxu0 0.0
  %388 = vmatpush.msra.mxu0 0.0
  %389 = vmatpush.msra.mxu0 0.0
  %390 = vmatpush.msra.mxu0 0.0
  %391 = vmatpush.msra.mxu0 0.0
  %392 = vmatpush.msra.mxu0 0.0
  %393 = vmatpush.msra.mxu0 0.0
  %394 = vmatpush.msra.mxu0 0.0
  %395 = vmatpush.msra.mxu0 0.0
  %396 = vmatpush.msra.mxu0 0.0
  %397 = vmatpush.msra.mxu0 %v368
  %398 = vmatpush.msra.mxu0 %v367
  %399 = vmatpush.msra.mxu0 %v366
  %400 = vmatpush.msra.mxu0 %v365
  %401 = vmatmul.f32.gmra.mxu0 %v374
  %v402 = vpop.f32.mrf.mxu0
  %v403 = vadd.f32 0.0, %v402
  %404 = vmatmul.f32.gmra.mxu0 %v377
  %v405 = vpop.f32.mrf.mxu0
  %v406 = vadd.f32 0.0, %v405
  %407 = vmatmul.f32.gmra.mxu0 %v380
  %v408 = vpop.f32.mrf.mxu0
  %v409 = vadd.f32 0.0, %v408
  %410 = vmatmul.f32.gmra.mxu0 %v383
  %v411 = vpop.f32.mrf.mxu0
  %v412 = vadd.f32 0.0, %v411
  %413 = vdwg.mxu0
  %v414 = vsel %vm113, %v403, 0.0
  %415 = vadd.xlane.f32.xlu0 %v414
  %v416 = vpop.xlane.xlu0 %415
  %v417 = vsel %vm113, %v406, 0.0
  %418 = vadd.xlane.f32.xlu0 %v417
  %v419 = vpop.xlane.xlu0 %418
  %v420 = vsel %vm113, %v409, 0.0
  %421 = vadd.xlane.f32.xlu0 %v420
  %v422 = vpop.xlane.xlu0 %421
  %v423 = vsel %vm113, %v412, 0.0
  %424 = vadd.xlane.f32.xlu0 %v423
  %v425 = vpop.xlane.xlu0 %424
  %v426 = vmul.f32 %v416, 0.03125
  %v427 = vmul.f32 %v419, 0.03125
  %v428 = vmul.f32 %v422, 0.03125
  %v429 = vmul.f32 %v425, 0.03125
  %v430 = vmul.f32 %v403, %v403
  %v431 = vmul.f32 %v406, %v406
  %v432 = vmul.f32 %v409, %v409
  %v433 = vmul.f32 %v412, %v412
  %v434 = vsel %vm113, %v430, 0.0
  %435 = vadd.xlane.f32.xlu0 %v434
  %v436 = vpop.xlane.xlu0 %435
  %v437 = vsel %vm113, %v431, 0.0
  %438 = vadd.xlane.f32.xlu0 %v437
  %v439 = vpop.xlane.xlu0 %438
  %v440 = vsel %vm113, %v432, 0.0
  %441 = vadd.xlane.f32.xlu0 %v440
  %v442 = vpop.xlane.xlu0 %441
  %v443 = vsel %vm113, %v433, 0.0
  %444 = vadd.xlane.f32.xlu0 %v443
  %v445 = vpop.xlane.xlu0 %444
  %v446 = vmul.f32 %v436, 0.03125
  %v447 = vmul.f32 %v439, 0.03125
  %v448 = vmul.f32 %v442, 0.03125
  %v449 = vmul.f32 %v445, 0.03125
  %v450 = vmul.f32 %v426, %v426
  %v451 = vmul.f32 %v427, %v427
  %v452 = vmul.f32 %v428, %v428
  %v453 = vmul.f32 %v429, %v429
  %v454 = vsub.f32 %v446, %v450
  %v455 = vsub.f32 %v447, %v451
  %v456 = vsub.f32 %v448, %v452
  %v457 = vsub.f32 %v449, %v453
  %v458 = vld [vmem:[%s1] sm:$0xff]
  %v459 = vld [vmem:[%s1 + $0x8] sm:$0xff]
  %v460 = vld [vmem:[%s1 + $0x10] sm:$0xff]
  %v461 = vld [vmem:[%s1 + $0x18] sm:$0xff]
  %v462 = vsub.f32 %v403, %v426
  %v463 = vsub.f32 %v406, %v427
  %v464 = vsub.f32 %v409, %v428
  %v465 = vsub.f32 %v412, %v429
  %v466 = vadd.f32 %v454, 1e-05
  %v467 = vadd.f32 %v455, 1e-05
  %v468 = vadd.f32 %v456, 1e-05
  %v469 = vadd.f32 %v457, 1e-05
  %v470 = vrsqrt.pop %v466
  %v471 = vmul.f32 %v470, %v466
  %v472 = vmul.f32 %v471, %v470
  %v473 = vmul.f32 0.5, %v472
  %v474 = vsub.f32 1.5, %v473
  %v475 = vmul.f32 %v470, %v474
  %vm476 = vweird.f32 %v466
  %vm477 = vweird.f32 %v470
  %vm478 = vmor %vm476, %vm477
  %v479 = vsel %vm478, %v470, %v475
  %v480 = vrsqrt.pop %v467
  %v481 = vmul.f32 %v480, %v467
  %v482 = vmul.f32 %v481, %v480
  %v483 = vmul.f32 0.5, %v482
  %v484 = vsub.f32 1.5, %v483
  %v485 = vmul.f32 %v480, %v484
  %vm486 = vweird.f32 %v467
  %vm487 = vweird.f32 %v480
  %vm488 = vmor %vm486, %vm487
  %v489 = vsel %vm488, %v480, %v485
  %v490 = vrsqrt.pop %v468
  %v491 = vmul.f32 %v490, %v468
  %v492 = vmul.f32 %v491, %v490
  %v493 = vmul.f32 0.5, %v492
  %v494 = vsub.f32 1.5, %v493
  %v495 = vmul.f32 %v490, %v494
  %vm496 = vweird.f32 %v468
  %vm497 = vweird.f32 %v490
  %vm498 = vmor %vm496, %vm497
  %v499 = vsel %vm498, %v490, %v495
  %v500 = vrsqrt.pop %v469
  %v501 = vmul.f32 %v500, %v469
  %v502 = vmul.f32 %v501, %v500
  %v503 = vmul.f32 0.5, %v502
  %v504 = vsub.f32 1.5, %v503
  %v505 = vmul.f32 %v500, %v504
  %vm506 = vweird.f32 %v469
  %vm507 = vweird.f32 %v500
  %vm508 = vmor %vm506, %vm507
  %v509 = vsel %vm508, %v500, %v505
  %v510 = vmul.f32 %v462, %v479
  %v511 = vmul.f32 %v463, %v489
  %v512 = vmul.f32 %v464, %v499
  %v513 = vmul.f32 %v465, %v509
  %v514 = vld [vmem:[%s6] sm:$0xff]
  %v515 = vld [vmem:[%s6 + $0x8] sm:$0xff]
  %v516 = vld [vmem:[%s6 + $0x10] sm:$0xff]
  %v517 = vld [vmem:[%s6 + $0x18] sm:$0xff]
  %519 = vset.pattern.permute.xlu0 0
  %520 = vperm.xlu0 %519, %v514
  %v521 = vpop.permute.xlu0 %520
  %524 = vset.pattern.permute.xlu0 0
  %525 = vperm.xlu0 %524, %v515
  %v526 = vpop.permute.xlu0 %525
  %529 = vset.pattern.permute.xlu0 0
  %530 = vperm.xlu0 %529, %v516
  %v531 = vpop.permute.xlu0 %530
  %534 = vset.pattern.permute.xlu0 0
  %535 = vperm.xlu0 %534, %v517
  %v536 = vpop.permute.xlu0 %535
  %v538 = vmul.f32 %v510, %v521
  %v539 = vmul.f32 %v511, %v526
  %v540 = vmul.f32 %v512, %v531
  %v541 = vmul.f32 %v513, %v536
  %v542 = vld [vmem:[%s7] sm:$0xff]
  %v543 = vld [vmem:[%s7 + $0x8] sm:$0xff]
  %v544 = vld [vmem:[%s7 + $0x10] sm:$0xff]
  %v545 = vld [vmem:[%s7 + $0x18] sm:$0xff]
  %547 = vset.pattern.permute.xlu0 0
  %548 = vperm.xlu0 %547, %v542
  %v549 = vpop.permute.xlu0 %548
  %552 = vset.pattern.permute.xlu0 0
  %553 = vperm.xlu0 %552, %v543
  %v554 = vpop.permute.xlu0 %553
  %557 = vset.pattern.permute.xlu0 0
  %558 = vperm.xlu0 %557, %v544
  %v559 = vpop.permute.xlu0 %558
  %562 = vset.pattern.permute.xlu0 0
  %563 = vperm.xlu0 %562, %v545
  %v564 = vpop.permute.xlu0 %563
  %v566 = vadd.f32 %v538, %v549
  %v567 = vadd.f32 %v539, %v554
  %v568 = vadd.f32 %v540, %v559
  %v569 = vadd.f32 %v541, %v564
  %v570 = vadd.f32 %v458, %v566
  %v571 = vadd.f32 %v459, %v567
  %v572 = vadd.f32 %v460, %v568
  %v573 = vadd.f32 %v461, %v569
  %574 = vst.msk [vmem:[%s8] sm:$0xff] %vm113, %v570
  %575 = vst.msk [vmem:[%s8 + $0x8] sm:$0xff] %vm113, %v571
  %576 = vst.msk [vmem:[%s8 + $0x10] sm:$0xff] %vm113, %v572
  %577 = vst.msk [vmem:[%s8 + $0x18] sm:$0xff] %vm113, %v573
  // Predicated region
  $region34: #{forward.11} parent=0 // pred_check
    _
  $region35: #{forward.11} parent=0 // pred_check_branch
    %579 = sbr.rel (0) target = $region37
  $region36: #{forward.11} parent=0 // pred_region
    _
  $region37: #{forward.11} parent=0 // pred_fallthru
    _
  // Predicated region
  $region38: #{forward.11} parent=0 // pred_check
    _
  $region39: #{forward.11} parent=0 // pred_check_branch
    %581 = sbr.rel (0) target = $region41
  $region40: #{forward.11} parent=0 // pred_region
    _
  $region41: #{forward.11} parent=0 // pred_fallthru
    _

// kernel: forward.13
$region0: #{forward.13}
  #allocation0 [shape = 'u32[]', space=smem, size = 0x4, offset = 0x4, fixed_abs, tag = 'smem constant byte address 0x4 - core index']
  #allocation1 [shape = 'u32[72,128]{1,0:T(1,128)}', space=vmem, size = 0x9000, scoped, tag = 'internal scratch']
  %s0 = inlined_call_operand.vmem [shape: f32[32,32], index: 0, kind: input, shape index: {}]
  %s1 = inlined_call_operand.vmem [shape: f32[64,32], index: 1, kind: input, shape index: {}]
  %s2 = inlined_call_operand.vmem [shape: f32[32,64], index: 2, kind: input, shape index: {}]
  %s3 = inlined_call_operand.vmem [shape: f32[32,32], index: 3, kind: output, shape index: {0}]
  %s4 = inlined_call_operand.hbm [shape: f32[1,1], index: 4, kind: output, shape index: {1}]
  %s5 = inlined_call_operand.hbm [shape: f32[1,1], index: 5, kind: output, shape index: {2}]
  %6 = xla_tuple %s3, %s4, %s5
  %s7 = sld [smem:[#allocation0]]
  $region38: #{forward.13} parent=0
    _
  %s9 = ssub.s32 1, %s7
  %s10 = scalar_select 0, %s9, %s7
  $region1: #{forward.13} parent=0
    #allocation2 [shape = 'u8[512]{0}', space=vmem, size = 0x400, scoped, tag = 'output window, operand 1, single buffered']
    #allocation3 [shape = 's32[1]{0}', space=sflag, size = 0x4, scoped, tag = 'scoped memory for forward.13']
    #allocation4 [shape = 'u8[512]{0}', space=vmem, size = 0x400, scoped, tag = 'output window, operand 2, single buffered']
    #allocation5 [shape = 's32[1]{0}', space=sflag, size = 0x4, scoped, tag = 'scoped memory for forward.13']
    %11 = vsyncpa [#allocation3], 0
    %12 = vsyncpa [#allocation5], 0
    // Predicated region
    $region2: #{forward.13} parent=1 // pred_check
      _
    $region3: #{forward.13} parent=1 // pred_check_branch
      %14 = sbr.rel (0) target = $region5
    $region4: #{forward.13} parent=1 // pred_region
      _
    $region5: #{forward.13} parent=1 // pred_fallthru
      _
    // Predicated region
    $region6: #{forward.13} parent=1 // pred_check
      _
    $region7: #{forward.13} parent=1 // pred_check_branch
      %16 = sbr.rel (0) target = $region9
    $region8: #{forward.13} parent=1 // pred_region
      _
    $region9: #{forward.13} parent=1 // pred_fallthru
      _
    // Predicated region
    $region10: #{forward.13} parent=1 // pred_check
      _
    $region11: #{forward.13} parent=1 // pred_check_branch
      %18 = sbr.rel (0) target = $region13
    $region12: #{forward.13} parent=1 // pred_region
      _
    $region13: #{forward.13} parent=1 // pred_fallthru
      _
    %v19 = vld [vmem:[%s0] sm:$0xff]
    %v20 = vld [vmem:[%s0 + $0x8] sm:$0xff]
    %v21 = vld [vmem:[%s0 + $0x10] sm:$0xff]
    %v22 = vld [vmem:[%s0 + $0x18] sm:$0xff]
    %v23 = vld [vmem:[%s1] sm:$0xff]
    %v24 = vld [vmem:[%s1 + $0x8] sm:$0xff]
    %v25 = vld [vmem:[%s1 + $0x10] sm:$0xff]
    %v26 = vld [vmem:[%s1 + $0x18] sm:$0xff]
    %v27 = vld [vmem:[%s1 + $0x20] sm:$0xff]
    %v28 = vld [vmem:[%s1 + $0x28] sm:$0xff]
    %v29 = vld [vmem:[%s1 + $0x30] sm:$0xff]
    %v30 = vld [vmem:[%s1 + $0x38] sm:$0xff]
    %v31 = vmul.f32 %v23, %v23
    %v32 = vmul.f32 %v24, %v24
    %v33 = vmul.f32 %v25, %v25
    %v34 = vmul.f32 %v26, %v26
    %v35 = vmul.f32 %v27, %v27
    %v36 = vmul.f32 %v28, %v28
    %v37 = vmul.f32 %v29, %v29
    %v38 = vmul.f32 %v30, %v30
    %vm39 = vcmask 261120
    %v40 = vsel %vm39, %v31, 0.0
    %41 = vadd.xlane.f32.xlu0 %v40
    %v42 = vpop.xlane.xlu0 %41
    %v43 = vsel %vm39, %v32, 0.0
    %44 = vadd.xlane.f32.xlu0 %v43
    %v45 = vpop.xlane.xlu0 %44
    %v46 = vsel %vm39, %v33, 0.0
    %47 = vadd.xlane.f32.xlu0 %v46
    %v48 = vpop.xlane.xlu0 %47
    %v49 = vsel %vm39, %v34, 0.0
    %50 = vadd.xlane.f32.xlu0 %v49
    %v51 = vpop.xlane.xlu0 %50
    %v52 = vsel %vm39, %v35, 0.0
    %53 = vadd.xlane.f32.xlu0 %v52
    %v54 = vpop.xlane.xlu0 %53
    %v55 = vsel %vm39, %v36, 0.0
    %56 = vadd.xlane.f32.xlu0 %v55
    %v57 = vpop.xlane.xlu0 %56
    %v58 = vsel %vm39, %v37, 0.0
    %59 = vadd.xlane.f32.xlu0 %v58
    %v60 = vpop.xlane.xlu0 %59
    %v61 = vsel %vm39, %v38, 0.0
    %62 = vadd.xlane.f32.xlu0 %v61
    %v63 = vpop.xlane.xlu0 %62
    %v65 = vsel %vm39, %v23, 0
    %v68 = vsel %vm39, %v24, 0
    %v71 = vsel %vm39, %v25, 0
    %v74 = vsel %vm39, %v26, 0
    %v77 = vsel %vm39, %v27, 0
    %v80 = vsel %vm39, %v28, 0
    %v83 = vsel %vm39, %v29, 0
    %v86 = vsel %vm39, %v30, 0
    %88 = vmatpush.msra.mxu0 0.0
    %89 = vmatpush.msra.mxu0 0.0
    %90 = vmatpush.msra.mxu0 0.0
    %91 = vmatpush.msra.mxu0 0.0
    %92 = vmatpush.msra.mxu0 0.0
    %93 = vmatpush.msra.mxu0 0.0
    %94 = vmatpush.msra.mxu0 0.0
    %95 = vmatpush.msra.mxu0 0.0
    %96 = vmatpush.msra.mxu0 0.0
    %97 = vmatpush.msra.mxu0 0.0
    %98 = vmatpush.msra.mxu0 0.0
    %99 = vmatpush.msra.mxu0 0.0
    %100 = vmatpush.msra.mxu0 %v22
    %101 = vmatpush.msra.mxu0 %v21
    %102 = vmatpush.msra.mxu0 %v20
    %103 = vmatpush.msra.mxu0 %v19
    %104 = vmatmul.f32.gmra.mxu0 %v65
    %v105 = vpop.f32.mrf.mxu0
    %v106 = vadd.f32 0.0, %v105
    %107 = vmatmul.f32.gmra.mxu0 %v68
    %v108 = vpop.f32.mrf.mxu0
    %v109 = vadd.f32 0.0, %v108
    %110 = vmatmul.f32.gmra.mxu0 %v71
    %v111 = vpop.f32.mrf.mxu0
    %v112 = vadd.f32 0.0, %v111
    %113 = vmatmul.f32.gmra.mxu0 %v74
    %v114 = vpop.f32.mrf.mxu0
    %v115 = vadd.f32 0.0, %v114
    %116 = vmatmul.f32.gmra.mxu0 %v77
    %v117 = vpop.f32.mrf.mxu0
    %v118 = vadd.f32 0.0, %v117
    %119 = vmatmul.f32.gmra.mxu0 %v80
    %v120 = vpop.f32.mrf.mxu0
    %v121 = vadd.f32 0.0, %v120
    %122 = vmatmul.f32.gmra.mxu0 %v83
    %v123 = vpop.f32.mrf.mxu0
    %v124 = vadd.f32 0.0, %v123
    %125 = vmatmul.f32.gmra.mxu0 %v86
    %v126 = vpop.f32.mrf.mxu0
    %v127 = vadd.f32 0.0, %v126
    %128 = vdwg.mxu0
    %v129 = vmul.f32 %v106, 2.0
    %v130 = vmul.f32 %v109, 2.0
    %v131 = vmul.f32 %v112, 2.0
    %v132 = vmul.f32 %v115, 2.0
    %v133 = vmul.f32 %v118, 2.0
    %v134 = vmul.f32 %v121, 2.0
    %v135 = vmul.f32 %v124, 2.0
    %v136 = vmul.f32 %v127, 2.0
    %v137 = vsub.f32 %v42, %v129
    %v138 = vsub.f32 %v45, %v130
    %v139 = vsub.f32 %v48, %v131
    %v140 = vsub.f32 %v51, %v132
    %v141 = vsub.f32 %v54, %v133
    %v142 = vsub.f32 %v57, %v134
    %v143 = vsub.f32 %v60, %v135
    %v144 = vsub.f32 %v63, %v136
    %v145 = vsel %vm39, %v137, inf
    %v146 = vsel %vm39, %v138, inf
    %v147 = vsel %vm39, %v139, inf
    %v148 = vsel %vm39, %v140, inf
    %v149 = vsel %vm39, %v141, inf
    %v150 = vmin.f32 %v145, %v149
    %v151 = vsel %vm39, %v142, inf
    %v152 = vmin.f32 %v146, %v151
    %v153 = vsel %vm39, %v143, inf
    %v154 = vmin.f32 %v147, %v153
    %v155 = vsel %vm39, %v144, inf
    %v156 = vmin.f32 %v148, %v155
    %v157 = vmin.f32 %v150, %v152
    %v158 = vmin.f32 %v154, %v156
    %v159 = vmin.f32 %v157, %v158
    %v160 = vrot.slane %v159, 4
    %v161 = vmin.f32 %v159, %v160
    %v162 = vrot.slane %v161, 2
    %v163 = vmin.f32 %v161, %v162
    %v164 = vrot.slane %v163, 1
    %v165 = vmin.f32 %v163, %v164
    %v166 = vlaneseq
    %v167 = vshrl.u32 %v166, 7
    %v168 = vadd.s32 %v167, 8
    %v169 = vadd.s32 %v167, 16
    %v170 = vadd.s32 %v167, 24
    %v171 = vadd.s32 %v167, 32
    %v172 = vadd.s32 %v167, 40
    %v173 = vadd.s32 %v167, 48
    %v174 = vadd.s32 %v167, 56
    %vm175 = vcmp.eq.f32.partialorder %v137, %v165
    %vm176 = vcmp.eq.f32.partialorder %v138, %v165
    %vm177 = vcmp.eq.f32.partialorder %v139, %v165
    %vm178 = vcmp.eq.f32.partialorder %v140, %v165
    %vm179 = vcmp.eq.f32.partialorder %v141, %v165
    %vm180 = vcmp.eq.f32.partialorder %v142, %v165
    %vm181 = vcmp.eq.f32.partialorder %v143, %v165
    %vm182 = vcmp.eq.f32.partialorder %v144, %v165
    %v183 = vsel %vm175, %v167, 64
    %v184 = vsel %vm176, %v168, 64
    %v185 = vsel %vm177, %v169, 64
    %v186 = vsel %vm178, %v170, 64
    %v187 = vsel %vm179, %v171, 64
    %v188 = vsel %vm180, %v172, 64
    %v189 = vsel %vm181, %v173, 64
    %v190 = vsel %vm182, %v174, 64
    %v191 = vsel %vm39, %v183, 2147483647
    %v192 = vsel %vm39, %v184, 2147483647
    %v193 = vsel %vm39, %v185, 2147483647
    %v194 = vsel %vm39, %v186, 2147483647
    %v195 = vsel %vm39, %v187, 2147483647
    %vm196 = vcmp.lt.s32.totalorder %v191, %v195
    %v197 = vsel %vm196, %v191, %v195
    %v198 = vsel %vm39, %v188, 2147483647
    %vm199 = vcmp.lt.s32.totalorder %v192, %v198
    %v200 = vsel %vm199, %v192, %v198
    %v201 = vsel %vm39, %v189, 2147483647
    %vm202 = vcmp.lt.s32.totalorder %v193, %v201
    %v203 = vsel %vm202, %v193, %v201
    %v204 = vsel %vm39, %v190, 2147483647
    %vm205 = vcmp.lt.s32.totalorder %v194, %v204
    %v206 = vsel %vm205, %v194, %v204
    %vm207 = vcmp.lt.s32.totalorder %v197, %v200
    %v208 = vsel %vm207, %v197, %v200
    %vm209 = vcmp.lt.s32.totalorder %v203, %v206
    %v210 = vsel %vm209, %v203, %v206
    %vm211 = vcmp.lt.s32.totalorder %v208, %v210
    %v212 = vsel %vm211, %v208, %v210
    %v213 = vrot.slane %v212, 4
    %vm214 = vcmp.lt.s32.totalorder %v212, %v213
    %v215 = vsel %vm214, %v212, %v213
    %v216 = vrot.slane %v215, 2
    %vm217 = vcmp.lt.s32.totalorder %v215, %v216
    %v218 = vsel %vm217, %v215, %v216
    %v219 = vrot.slane %v218, 1
    %vm220 = vcmp.lt.s32.totalorder %v218, %v219
    %v221 = vsel %vm220, %v218, %v219
    %vm222 = vcmp.eq.s32.totalorder %v167, %v221
    %vm223 = vcmp.eq.s32.totalorder %v168, %v221
    %vm224 = vcmp.eq.s32.totalorder %v169, %v221
    %vm225 = vcmp.eq.s32.totalorder %v170, %v221
    %vm226 = vcmp.eq.s32.totalorder %v171, %v221
    %vm227 = vcmp.eq.s32.totalorder %v172, %v221
    %vm228 = vcmp.eq.s32.totalorder %v173, %v221
    %vm229 = vcmp.eq.s32.totalorder %v174, %v221
    %v230 = vsel %vm222, 1, 0
    %v231 = vsel %vm223, 1, 0
    %v232 = vsel %vm224, 1, 0
    %v233 = vsel %vm225, 1, 0
    %v234 = vsel %vm226, 1, 0
    %v235 = vsel %vm227, 1, 0
    %v236 = vsel %vm228, 1, 0
    %v237 = vsel %vm229, 1, 0
    %v238 = vcvt.s32.f32 %v230
    %v239 = vcvt.s32.f32 %v231
    %v240 = vcvt.s32.f32 %v232
    %v241 = vcvt.s32.f32 %v233
    %v242 = vcvt.s32.f32 %v234
    %v243 = vcvt.s32.f32 %v235
    %v244 = vcvt.s32.f32 %v236
    %v245 = vcvt.s32.f32 %v237
    %v246 = vld [vmem:[%s2] sm:$0xff]
    %v247 = vld [vmem:[%s2 + $0x8] sm:$0xff]
    %v248 = vld [vmem:[%s2 + $0x10] sm:$0xff]
    %v249 = vld [vmem:[%s2 + $0x18] sm:$0xff]
    %vm250 = vcmask 523264
    %v252 = vsel %vm250, %v246, 0
    %v255 = vsel %vm250, %v247, 0
    %v258 = vsel %vm250, %v248, 0
    %v261 = vsel %vm250, %v249, 0
    %263 = vmatpush.msra.mxu0 0.0
    %264 = vmatpush.msra.mxu0 0.0
    %265 = vmatpush.msra.mxu0 0.0
    %266 = vmatpush.msra.mxu0 0.0
    %267 = vmatpush.msra.mxu0 0.0
    %268 = vmatpush.msra.mxu0 0.0
    %269 = vmatpush.msra.mxu0 0.0
    %270 = vmatpush.msra.mxu0 0.0
    %271 = vmatpush.msra.mxu0 %v245
    %272 = vmatpush.msra.mxu0 %v244
    %273 = vmatpush.msra.mxu0 %v243
    %274 = vmatpush.msra.mxu0 %v242
    %275 = vmatpush.msra.mxu0 %v241
    %276 = vmatpush.msra.mxu0 %v240
    %277 = vmatpush.msra.mxu0 %v239
    %278 = vmatpush.msra.mxu0 %v238
    %279 = vmatmul.f32.gmra.mxu0 %v252
    %v280 = vpop.f32.mrf.mxu0
    %v281 = vadd.f32 0.0, %v280
    %282 = vmatmul.f32.gmra.mxu0 %v255
    %v283 = vpop.f32.mrf.mxu0
    %v284 = vadd.f32 0.0, %v283
    %285 = vmatmul.f32.gmra.mxu0 %v258
    %v286 = vpop.f32.mrf.mxu0
    %v287 = vadd.f32 0.0, %v286
    %288 = vmatmul.f32.gmra.mxu0 %v261
    %v289 = vpop.f32.mrf.mxu0
    %v290 = vadd.f32 0.0, %v289
    %291 = vdwg.mxu0
    %292 = vst.msk [vmem:[%s3] sm:$0xff] %vm39, %v281
    %293 = vst.msk [vmem:[%s3 + $0x8] sm:$0xff] %vm39, %v284
    %294 = vst.msk [vmem:[%s3 + $0x10] sm:$0xff] %vm39, %v287
    %295 = vst.msk [vmem:[%s3 + $0x18] sm:$0xff] %vm39, %v290
    %v296 = vsub.f32 %v281, %v19
    %v297 = vsub.f32 %v284, %v20
    %v298 = vsub.f32 %v287, %v21
    %v299 = vsub.f32 %v290, %v22
    %v300 = vmul.f32 %v296, %v296
    %v301 = vmul.f32 %v297, %v297
    %v302 = vmul.f32 %v298, %v298
    %v303 = vmul.f32 %v299, %v299
    %v304 = vsel %vm39, %v300, 0.0
    %305 = vadd.xlane.f32.xlu0 %v304
    %v306 = vpop.xlane.xlu0 %305
    %v307 = vsel %vm39, %v301, 0.0
    %308 = vadd.xlane.f32.xlu0 %v307
    %v309 = vpop.xlane.xlu0 %308
    %v310 = vsel %vm39, %v302, 0.0
    %311 = vadd.xlane.f32.xlu0 %v310
    %v312 = vpop.xlane.xlu0 %311
    %v313 = vsel %vm39, %v303, 0.0
    %314 = vadd.xlane.f32.xlu0 %v313
    %v315 = vpop.xlane.xlu0 %314
    %v316 = vadd.f32 %v306, %v309
    %v317 = vadd.f32 %v316, %v312
    %v318 = vadd.f32 %v317, %v315
    %v319 = vrot.slane %v318, 4
    %v320 = vadd.f32 %v318, %v319
    %v321 = vrot.slane %v320, 2
    %v322 = vadd.f32 %v320, %v321
    %v323 = vrot.slane %v322, 1
    %v324 = vadd.f32 %v322, %v323
    %v325 = vmul.f32 %v324, 1.25
    %v326 = vmul.f32 %v325, 0.0009765625
    %vm327 = vcmask 0
    %328 = vst.msk [vmem:[#allocation2] sm:$0x1] %vm327, %v326
    %v329 = vsel %vm39, %v238, 0.0
    %330 = vadd.xlane.f32.xlu0 %v329
    %v331 = vpop.xlane.xlu0 %330
    %v332 = vsel %vm39, %v239, 0.0
    %333 = vadd.xlane.f32.xlu0 %v332
    %v334 = vpop.xlane.xlu0 %333
    %v335 = vsel %vm39, %v240, 0.0
    %336 = vadd.xlane.f32.xlu0 %v335
    %v337 = vpop.xlane.xlu0 %336
    %v338 = vsel %vm39, %v241, 0.0
    %339 = vadd.xlane.f32.xlu0 %v338
    %v340 = vpop.xlane.xlu0 %339
    %v341 = vsel %vm39, %v242, 0.0
    %342 = vadd.xlane.f32.xlu0 %v341
    %v343 = vpop.xlane.xlu0 %342
    %v344 = vsel %vm39, %v243, 0.0
    %345 = vadd.xlane.f32.xlu0 %v344
    %v346 = vpop.xlane.xlu0 %345
    %v347 = vsel %vm39, %v244, 0.0
    %348 = vadd.xlane.f32.xlu0 %v347
    %v349 = vpop.xlane.xlu0 %348
    %v350 = vsel %vm39, %v245, 0.0
    %351 = vadd.xlane.f32.xlu0 %v350
    %v352 = vpop.xlane.xlu0 %351
    %v353 = vmul.f32 %v331, 0.03125
    %v354 = vmul.f32 %v334, 0.03125
    %v355 = vmul.f32 %v337, 0.03125
    %v356 = vmul.f32 %v340, 0.03125
    %v357 = vmul.f32 %v343, 0.03125
    %v358 = vmul.f32 %v346, 0.03125
    %v359 = vmul.f32 %v349, 0.03125
    %v360 = vmul.f32 %v352, 0.03125
    %v361 = vadd.f32 %v353, 1e-10
    %v362 = vadd.f32 %v354, 1e-10
    %v363 = vadd.f32 %v355, 1e-10
    %v364 = vadd.f32 %v356, 1e-10
    %v365 = vadd.f32 %v357, 1e-10
    %v366 = vadd.f32 %v358, 1e-10
    %v367 = vadd.f32 %v359, 1e-10
    %v368 = vadd.f32 %v360, 1e-10
    %v369 = vlog2.pop %v361
    %v370 = vmul.f32 %v369, 0.6931472
    %v371 = vlog2.pop %v362
    %v372 = vmul.f32 %v371, 0.6931472
    %v373 = vlog2.pop %v363
    %v374 = vmul.f32 %v373, 0.6931472
    %v375 = vlog2.pop %v364
    %v376 = vmul.f32 %v375, 0.6931472
    %v377 = vlog2.pop %v365
    %v378 = vmul.f32 %v377, 0.6931472
    %v379 = vlog2.pop %v366
    %v380 = vmul.f32 %v379, 0.6931472
    %v381 = vlog2.pop %v367
    %v382 = vmul.f32 %v381, 0.6931472
    %v383 = vlog2.pop %v368
    %v384 = vmul.f32 %v383, 0.6931472
    %v385 = vmul.f32 %v353, %v370
    %v386 = vmul.f32 %v354, %v372
    %v387 = vmul.f32 %v355, %v374
    %v388 = vmul.f32 %v356, %v376
    %v389 = vmul.f32 %v357, %v378
    %v390 = vmul.f32 %v358, %v380
    %v391 = vmul.f32 %v359, %v382
    %v392 = vmul.f32 %v360, %v384
    %v393 = vadd.f32 %v385, %v386
    %v394 = vadd.f32 %v393, %v387
    %v395 = vadd.f32 %v394, %v388
    %v396 = vadd.f32 %v395, %v389
    %v397 = vadd.f32 %v396, %v390
    %v398 = vadd.f32 %v397, %v391
    %v399 = vadd.f32 %v398, %v392
    %v400 = vrot.slane %v399, 4
    %v401 = vadd.f32 %v399, %v400
    %v402 = vrot.slane %v401, 2
    %v403 = vadd.f32 %v401, %v402
    %v404 = vrot.slane %v403, 1
    %v405 = vadd.f32 %v403, %v404
    %v406 = vsub.f32 0.0, %v405
    %v407 = vmul.f32 %v406, 1.442695
    %v408 = vpow.pop %v407
    %409 = vst.msk [vmem:[#allocation4] sm:$0x1] %vm327, %v408
    // Predicated region
    $region14: #{forward.13} parent=1 // pred_check
      _
    $region15: #{forward.13} parent=1 // pred_check_branch
      %411 = sbr.rel (0) target = $region17
    $region16: #{forward.13} parent=1 // pred_region
      _
    $region17: #{forward.13} parent=1 // pred_fallthru
      _
    // Predicated region
    $region18: #{forward.13} parent=1 // pred_check
      _
    $region19: #{forward.13} parent=1 // pred_check_branch
      %413 = sbr.rel (0) target = $region21
    $region20: #{forward.13} parent=1 // pred_region
      %415 = vsyncadd [#allocation3], 0
      %s417 = sshll.u32 [#allocation2], 4
      %s418 = int_to_ptr.vmem [resolvable:$true] %s417
      %s419 = sshll.u32 %s4, 4
      %s420 = int_to_ptr.hbm [resolvable:$true] %s419
      %422 = dma.vmem_to_hbm [thread:$0]  %s418, 16, %s420, [#allocation3]
    $region21: #{forward.13} parent=1 // pred_fallthru
      _
    // Predicated region
    $region22: #{forward.13} parent=1 // pred_check
      _
    $region23: #{forward.13} parent=1 // pred_check_branch
      %424 = sbr.rel (0) target = $region25
    $region24: #{forward.13} parent=1 // pred_region
      %426 = vsyncadd [#allocation5], 0
      %s428 = sshll.u32 [#allocation4], 4
      %s429 = int_to_ptr.vmem [resolvable:$true] %s428
      %s430 = sshll.u32 %s5, 4
      %s431 = int_to_ptr.hbm [resolvable:$true] %s430
      %433 = dma.vmem_to_hbm [thread:$0]  %s429, 16, %s431, [#allocation5]
    $region25: #{forward.13} parent=1 // pred_fallthru
      _
    // Predicated region
    $region26: #{forward.13} parent=1 // pred_check
      _
    $region27: #{forward.13} parent=1 // pred_check_branch
      %435 = sbr.rel (0) target = $region29
    $region28: #{forward.13} parent=1 // pred_region
      _
    $region29: #{forward.13} parent=1 // pred_fallthru
      _
    // Predicated region
    $region30: #{forward.13} parent=1 // pred_check
      _
    $region31: #{forward.13} parent=1 // pred_check_branch
      %437 = sbr.rel (0) target = $region33
    $region32: #{forward.13} parent=1 // pred_region
      %439 = dma.done [#allocation3], 16
    $region33: #{forward.13} parent=1 // pred_fallthru
      _
    // Predicated region
    $region34: #{forward.13} parent=1 // pred_check
      _
    $region35: #{forward.13} parent=1 // pred_check_branch
      %441 = sbr.rel (0) target = $region37
    $region36: #{forward.13} parent=1 // pred_region
      %443 = dma.done [#allocation5], 16
    $region37: #{forward.13} parent=1 // pred_fallthru
      _
    %444 = vsyncpa [#allocation3], 1
    %445 = vsyncpa [#allocation5], 1

// kernel: forward.16
$region0: #{forward.16}
  #allocation0 [shape = 'u32[]', space=smem, size = 0x4, offset = 0x4, fixed_abs, tag = 'smem constant byte address 0x4 - core index']
  #allocation1 [shape = 'u32[72,128]{1,0:T(1,128)}', space=vmem, size = 0x9000, scoped, tag = 'internal scratch']
  %s0 = inlined_call_operand.vmem [shape: f32[4,128,32], index: 0, kind: input, shape index: {}]
  %s1 = inlined_call_operand.vmem [shape: f32[4,32,128], index: 1, kind: input, shape index: {}]
  %s2 = inlined_call_operand.vmem [shape: f32[32,1], index: 2, kind: input, shape index: {}]
  %s3 = inlined_call_operand.vmem [shape: f32[32,1], index: 3, kind: input, shape index: {}]
  %s4 = inlined_call_operand.vmem [shape: f32[4,32,32], index: 4, kind: output, shape index: {}]
  %s5 = sld [smem:[#allocation0]]
  $region26: #{forward.16} parent=0
    _
  %s7 = ssub.s32 1, %s5
  %s8 = scalar_select 0, %s7, %s5
  // Predicated region
  $region2: #{forward.16} parent=0 // pred_check
    _
  $region3: #{forward.16} parent=0 // pred_check_branch
    %10 = sbr.rel (0) target = $region5
  $region4: #{forward.16} parent=0 // pred_region
    _
  $region5: #{forward.16} parent=0 // pred_fallthru
    _
  // Predicated region
  $region6: #{forward.16} parent=0 // pred_check
    _
  $region7: #{forward.16} parent=0 // pred_check_branch
    %12 = sbr.rel (0) target = $region9
  $region8: #{forward.16} parent=0 // pred_region
    _
  $region9: #{forward.16} parent=0 // pred_fallthru
    _
  // Predicated region
  $region10: #{forward.16} parent=0 // pred_check
    _
  $region11: #{forward.16} parent=0 // pred_check_branch
    %14 = sbr.rel (0) target = $region13
  $region12: #{forward.16} parent=0 // pred_region
    _
  $region13: #{forward.16} parent=0 // pred_fallthru
    _
  // Predicated region
  $region14: #{forward.16} parent=0 // pred_check
    _
  $region15: #{forward.16} parent=0 // pred_check_branch
    %16 = sbr.rel (0) target = $region17
  $region16: #{forward.16} parent=0 // pred_region
    _
  $region17: #{forward.16} parent=0 // pred_fallthru
    _
  %v17 = vld [vmem:[%s0] sm:$0xff]
  %v18 = vld [vmem:[%s0 + $0x8] sm:$0xff]
  %v19 = vld [vmem:[%s0 + $0x10] sm:$0xff]
  %v20 = vld [vmem:[%s0 + $0x18] sm:$0xff]
  %v21 = vld [vmem:[%s0 + $0x20] sm:$0xff]
  %v22 = vld [vmem:[%s0 + $0x28] sm:$0xff]
  %v23 = vld [vmem:[%s0 + $0x30] sm:$0xff]
  %v24 = vld [vmem:[%s0 + $0x38] sm:$0xff]
  %v25 = vld [vmem:[%s0 + $0x40] sm:$0xff]
  %v26 = vld [vmem:[%s0 + $0x48] sm:$0xff]
  %v27 = vld [vmem:[%s0 + $0x50] sm:$0xff]
  %v28 = vld [vmem:[%s0 + $0x58] sm:$0xff]
  %v29 = vld [vmem:[%s0 + $0x60] sm:$0xff]
  %v30 = vld [vmem:[%s0 + $0x68] sm:$0xff]
  %v31 = vld [vmem:[%s0 + $0x70] sm:$0xff]
  %v32 = vld [vmem:[%s0 + $0x78] sm:$0xff]
  %v33 = vmax.f32 %v17, 0.0
  %v34 = vmax.f32 %v18, 0.0
  %v35 = vmax.f32 %v19, 0.0
  %v36 = vmax.f32 %v20, 0.0
  %v37 = vmax.f32 %v21, 0.0
  %v38 = vmax.f32 %v22, 0.0
  %v39 = vmax.f32 %v23, 0.0
  %v40 = vmax.f32 %v24, 0.0
  %v41 = vmax.f32 %v25, 0.0
  %v42 = vmax.f32 %v26, 0.0
  %v43 = vmax.f32 %v27, 0.0
  %v44 = vmax.f32 %v28, 0.0
  %v45 = vmax.f32 %v29, 0.0
  %v46 = vmax.f32 %v30, 0.0
  %v47 = vmax.f32 %v31, 0.0
  %v48 = vmax.f32 %v32, 0.0
  %v49 = vld [vmem:[%s1] sm:$0xff]
  %v50 = vld [vmem:[%s1 + $0x8] sm:$0xff]
  %v51 = vld [vmem:[%s1 + $0x10] sm:$0xff]
  %v52 = vld [vmem:[%s1 + $0x18] sm:$0xff]
  %53 = vmatpush.msra.mxu0 %v48
  %54 = vmatpush.msra.mxu0 %v47
  %55 = vmatpush.msra.mxu0 %v46
  %56 = vmatpush.msra.mxu0 %v45
  %57 = vmatpush.msra.mxu0 %v44
  %58 = vmatpush.msra.mxu0 %v43
  %59 = vmatpush.msra.mxu0 %v42
  %60 = vmatpush.msra.mxu0 %v41
  %61 = vmatpush.msra.mxu0 %v40
  %62 = vmatpush.msra.mxu0 %v39
  %63 = vmatpush.msra.mxu0 %v38
  %64 = vmatpush.msra.mxu0 %v37
  %65 = vmatpush.msra.mxu0 %v36
  %66 = vmatpush.msra.mxu0 %v35
  %67 = vmatpush.msra.mxu0 %v34
  %68 = vmatpush.msra.mxu0 %v33
  %69 = vmatmul.f32.gmra.mxu0 %v49
  %v70 = vpop.f32.mrf.mxu0
  %v71 = vadd.f32 0.0, %v70
  %72 = vmatmul.f32.gmra.mxu0 %v50
  %v73 = vpop.f32.mrf.mxu0
  %v74 = vadd.f32 0.0, %v73
  %75 = vmatmul.f32.gmra.mxu0 %v51
  %v76 = vpop.f32.mrf.mxu0
  %v77 = vadd.f32 0.0, %v76
  %78 = vmatmul.f32.gmra.mxu0 %v52
  %v79 = vpop.f32.mrf.mxu0
  %v80 = vadd.f32 0.0, %v79
  %81 = vdwg.mxu0
  %s82 = scalar_lea.vmem %s0, 128
  %v83 = vld [vmem:[%s82] sm:$0xff]
  %v84 = vld [vmem:[%s82 + $0x8] sm:$0xff]
  %v85 = vld [vmem:[%s82 + $0x10] sm:$0xff]
  %v86 = vld [vmem:[%s82 + $0x18] sm:$0xff]
  %v87 = vld [vmem:[%s82 + $0x20] sm:$0xff]
  %v88 = vld [vmem:[%s82 + $0x28] sm:$0xff]
  %v89 = vld [vmem:[%s82 + $0x30] sm:$0xff]
  %v90 = vld [vmem:[%s82 + $0x38] sm:$0xff]
  %v91 = vld [vmem:[%s82 + $0x40] sm:$0xff]
  %v92 = vld [vmem:[%s82 + $0x48] sm:$0xff]
  %v93 = vld [vmem:[%s82 + $0x50] sm:$0xff]
  %v94 = vld [vmem:[%s82 + $0x58] sm:$0xff]
  %v95 = vld [vmem:[%s82 + $0x60] sm:$0xff]
  %v96 = vld [vmem:[%s82 + $0x68] sm:$0xff]
  %v97 = vld [vmem:[%s82 + $0x70] sm:$0xff]
  %v98 = vld [vmem:[%s82 + $0x78] sm:$0xff]
  %v99 = vmax.f32 %v83, 0.0
  %v100 = vmax.f32 %v84, 0.0
  %v101 = vmax.f32 %v85, 0.0
  %v102 = vmax.f32 %v86, 0.0
  %v103 = vmax.f32 %v87, 0.0
  %v104 = vmax.f32 %v88, 0.0
  %v105 = vmax.f32 %v89, 0.0
  %v106 = vmax.f32 %v90, 0.0
  %v107 = vmax.f32 %v91, 0.0
  %v108 = vmax.f32 %v92, 0.0
  %v109 = vmax.f32 %v93, 0.0
  %v110 = vmax.f32 %v94, 0.0
  %v111 = vmax.f32 %v95, 0.0
  %v112 = vmax.f32 %v96, 0.0
  %v113 = vmax.f32 %v97, 0.0
  %v114 = vmax.f32 %v98, 0.0
  %s115 = scalar_lea.vmem %s1, 32
  %v116 = vld [vmem:[%s115] sm:$0xff]
  %v117 = vld [vmem:[%s115 + $0x8] sm:$0xff]
  %v118 = vld [vmem:[%s115 + $0x10] sm:$0xff]
  %v119 = vld [vmem:[%s115 + $0x18] sm:$0xff]
  %120 = vmatpush.msra.mxu0 %v114
  %121 = vmatpush.msra.mxu0 %v113
  %122 = vmatpush.msra.mxu0 %v112
  %123 = vmatpush.msra.mxu0 %v111
  %124 = vmatpush.msra.mxu0 %v110
  %125 = vmatpush.msra.mxu0 %v109
  %126 = vmatpush.msra.mxu0 %v108
  %127 = vmatpush.msra.mxu0 %v107
  %128 = vmatpush.msra.mxu0 %v106
  %129 = vmatpush.msra.mxu0 %v105
  %130 = vmatpush.msra.mxu0 %v104
  %131 = vmatpush.msra.mxu0 %v103
  %132 = vmatpush.msra.mxu0 %v102
  %133 = vmatpush.msra.mxu0 %v101
  %134 = vmatpush.msra.mxu0 %v100
  %135 = vmatpush.msra.mxu0 %v99
  %136 = vmatmul.f32.gmra.mxu0 %v116
  %v137 = vpop.f32.mrf.mxu0
  %v138 = vadd.f32 0.0, %v137
  %139 = vmatmul.f32.gmra.mxu0 %v117
  %v140 = vpop.f32.mrf.mxu0
  %v141 = vadd.f32 0.0, %v140
  %142 = vmatmul.f32.gmra.mxu0 %v118
  %v143 = vpop.f32.mrf.mxu0
  %v144 = vadd.f32 0.0, %v143
  %145 = vmatmul.f32.gmra.mxu0 %v119
  %v146 = vpop.f32.mrf.mxu0
  %v147 = vadd.f32 0.0, %v146
  %148 = vdwg.mxu0
  %s149 = scalar_lea.vmem %s0, 256
  %v150 = vld [vmem:[%s149] sm:$0xff]
  %v151 = vld [vmem:[%s149 + $0x8] sm:$0xff]
  %v152 = vld [vmem:[%s149 + $0x10] sm:$0xff]
  %v153 = vld [vmem:[%s149 + $0x18] sm:$0xff]
  %v154 = vld [vmem:[%s149 + $0x20] sm:$0xff]
  %v155 = vld [vmem:[%s149 + $0x28] sm:$0xff]
  %v156 = vld [vmem:[%s149 + $0x30] sm:$0xff]
  %v157 = vld [vmem:[%s149 + $0x38] sm:$0xff]
  %v158 = vld [vmem:[%s149 + $0x40] sm:$0xff]
  %v159 = vld [vmem:[%s149 + $0x48] sm:$0xff]
  %v160 = vld [vmem:[%s149 + $0x50] sm:$0xff]
  %v161 = vld [vmem:[%s149 + $0x58] sm:$0xff]
  %v162 = vld [vmem:[%s149 + $0x60] sm:$0xff]
  %v163 = vld [vmem:[%s149 + $0x68] sm:$0xff]
  %v164 = vld [vmem:[%s149 + $0x70] sm:$0xff]
  %v165 = vld [vmem:[%s149 + $0x78] sm:$0xff]
  %v166 = vmax.f32 %v150, 0.0
  %v167 = vmax.f32 %v151, 0.0
  %v168 = vmax.f32 %v152, 0.0
  %v169 = vmax.f32 %v153, 0.0
  %v170 = vmax.f32 %v154, 0.0
  %v171 = vmax.f32 %v155, 0.0
  %v172 = vmax.f32 %v156, 0.0
  %v173 = vmax.f32 %v157, 0.0
  %v174 = vmax.f32 %v158, 0.0
  %v175 = vmax.f32 %v159, 0.0
  %v176 = vmax.f32 %v160, 0.0
  %v177 = vmax.f32 %v161, 0.0
  %v178 = vmax.f32 %v162, 0.0
  %v179 = vmax.f32 %v163, 0.0
  %v180 = vmax.f32 %v164, 0.0
  %v181 = vmax.f32 %v165, 0.0
  %s182 = scalar_lea.vmem %s1, 64
  %v183 = vld [vmem:[%s182] sm:$0xff]
  %v184 = vld [vmem:[%s182 + $0x8] sm:$0xff]
  %v185 = vld [vmem:[%s182 + $0x10] sm:$0xff]
  %v186 = vld [vmem:[%s182 + $0x18] sm:$0xff]
  %187 = vmatpush.msra.mxu0 %v181
  %188 = vmatpush.msra.mxu0 %v180
  %189 = vmatpush.msra.mxu0 %v179
  %190 = vmatpush.msra.mxu0 %v178
  %191 = vmatpush.msra.mxu0 %v177
  %192 = vmatpush.msra.mxu0 %v176
  %193 = vmatpush.msra.mxu0 %v175
  %194 = vmatpush.msra.mxu0 %v174
  %195 = vmatpush.msra.mxu0 %v173
  %196 = vmatpush.msra.mxu0 %v172
  %197 = vmatpush.msra.mxu0 %v171
  %198 = vmatpush.msra.mxu0 %v170
  %199 = vmatpush.msra.mxu0 %v169
  %200 = vmatpush.msra.mxu0 %v168
  %201 = vmatpush.msra.mxu0 %v167
  %202 = vmatpush.msra.mxu0 %v166
  %203 = vmatmul.f32.gmra.mxu0 %v183
  %v204 = vpop.f32.mrf.mxu0
  %v205 = vadd.f32 0.0, %v204
  %206 = vmatmul.f32.gmra.mxu0 %v184
  %v207 = vpop.f32.mrf.mxu0
  %v208 = vadd.f32 0.0, %v207
  %209 = vmatmul.f32.gmra.mxu0 %v185
  %v210 = vpop.f32.mrf.mxu0
  %v211 = vadd.f32 0.0, %v210
  %212 = vmatmul.f32.gmra.mxu0 %v186
  %v213 = vpop.f32.mrf.mxu0
  %v214 = vadd.f32 0.0, %v213
  %215 = vdwg.mxu0
  %s216 = scalar_lea.vmem %s0, 384
  %v217 = vld [vmem:[%s216] sm:$0xff]
  %v218 = vld [vmem:[%s216 + $0x8] sm:$0xff]
  %v219 = vld [vmem:[%s216 + $0x10] sm:$0xff]
  %v220 = vld [vmem:[%s216 + $0x18] sm:$0xff]
  %v221 = vld [vmem:[%s216 + $0x20] sm:$0xff]
  %v222 = vld [vmem:[%s216 + $0x28] sm:$0xff]
  %v223 = vld [vmem:[%s216 + $0x30] sm:$0xff]
  %v224 = vld [vmem:[%s216 + $0x38] sm:$0xff]
  %v225 = vld [vmem:[%s216 + $0x40] sm:$0xff]
  %v226 = vld [vmem:[%s216 + $0x48] sm:$0xff]
  %v227 = vld [vmem:[%s216 + $0x50] sm:$0xff]
  %v228 = vld [vmem:[%s216 + $0x58] sm:$0xff]
  %v229 = vld [vmem:[%s216 + $0x60] sm:$0xff]
  %v230 = vld [vmem:[%s216 + $0x68] sm:$0xff]
  %v231 = vld [vmem:[%s216 + $0x70] sm:$0xff]
  %v232 = vld [vmem:[%s216 + $0x78] sm:$0xff]
  %v233 = vmax.f32 %v217, 0.0
  %v234 = vmax.f32 %v218, 0.0
  %v235 = vmax.f32 %v219, 0.0
  %v236 = vmax.f32 %v220, 0.0
  %v237 = vmax.f32 %v221, 0.0
  %v238 = vmax.f32 %v222, 0.0
  %v239 = vmax.f32 %v223, 0.0
  %v240 = vmax.f32 %v224, 0.0
  %v241 = vmax.f32 %v225, 0.0
  %v242 = vmax.f32 %v226, 0.0
  %v243 = vmax.f32 %v227, 0.0
  %v244 = vmax.f32 %v228, 0.0
  %v245 = vmax.f32 %v229, 0.0
  %v246 = vmax.f32 %v230, 0.0
  %v247 = vmax.f32 %v231, 0.0
  %v248 = vmax.f32 %v232, 0.0
  %s249 = scalar_lea.vmem %s1, 96
  %v250 = vld [vmem:[%s249] sm:$0xff]
  %v251 = vld [vmem:[%s249 + $0x8] sm:$0xff]
  %v252 = vld [vmem:[%s249 + $0x10] sm:$0xff]
  %v253 = vld [vmem:[%s249 + $0x18] sm:$0xff]
  %254 = vmatpush.msra.mxu0 %v248
  %255 = vmatpush.msra.mxu0 %v247
  %256 = vmatpush.msra.mxu0 %v246
  %257 = vmatpush.msra.mxu0 %v245
  %258 = vmatpush.msra.mxu0 %v244
  %259 = vmatpush.msra.mxu0 %v243
  %260 = vmatpush.msra.mxu0 %v242
  %261 = vmatpush.msra.mxu0 %v241
  %262 = vmatpush.msra.mxu0 %v240
  %263 = vmatpush.msra.mxu0 %v239
  %264 = vmatpush.msra.mxu0 %v238
  %265 = vmatpush.msra.mxu0 %v237
  %266 = vmatpush.msra.mxu0 %v236
  %267 = vmatpush.msra.mxu0 %v235
  %268 = vmatpush.msra.mxu0 %v234
  %269 = vmatpush.msra.mxu0 %v233
  %270 = vmatmul.f32.gmra.mxu0 %v250
  %v271 = vpop.f32.mrf.mxu0
  %v272 = vadd.f32 0.0, %v271
  %273 = vmatmul.f32.gmra.mxu0 %v251
  %v274 = vpop.f32.mrf.mxu0
  %v275 = vadd.f32 0.0, %v274
  %276 = vmatmul.f32.gmra.mxu0 %v252
  %v277 = vpop.f32.mrf.mxu0
  %v278 = vadd.f32 0.0, %v277
  %279 = vmatmul.f32.gmra.mxu0 %v253
  %v280 = vpop.f32.mrf.mxu0
  %v281 = vadd.f32 0.0, %v280
  %282 = vdwg.mxu0
  %vm283 = vcmask 261120
  %v284 = vsel %vm283, %v71, 0.0
  %285 = vadd.xlane.f32.xlu0 %v284
  %v286 = vpop.xlane.xlu0 %285
  %v287 = vsel %vm283, %v74, 0.0
  %288 = vadd.xlane.f32.xlu0 %v287
  %v289 = vpop.xlane.xlu0 %288
  %v290 = vsel %vm283, %v77, 0.0
  %291 = vadd.xlane.f32.xlu0 %v290
  %v292 = vpop.xlane.xlu0 %291
  %v293 = vsel %vm283, %v80, 0.0
  %294 = vadd.xlane.f32.xlu0 %v293
  %v295 = vpop.xlane.xlu0 %294
  %v296 = vsel %vm283, %v138, 0.0
  %297 = vadd.xlane.f32.xlu0 %v296
  %v298 = vpop.xlane.xlu0 %297
  %v299 = vsel %vm283, %v141, 0.0
  %300 = vadd.xlane.f32.xlu0 %v299
  %v301 = vpop.xlane.xlu0 %300
  %v302 = vsel %vm283, %v144, 0.0
  %303 = vadd.xlane.f32.xlu0 %v302
  %v304 = vpop.xlane.xlu0 %303
  %v305 = vsel %vm283, %v147, 0.0
  %306 = vadd.xlane.f32.xlu0 %v305
  %v307 = vpop.xlane.xlu0 %306
  %v308 = vadd.f32 %v286, %v298
  %v309 = vadd.f32 %v289, %v301
  %v310 = vadd.f32 %v292, %v304
  %v311 = vadd.f32 %v295, %v307
  %v312 = vsel %vm283, %v205, 0.0
  %313 = vadd.xlane.f32.xlu0 %v312
  %v314 = vpop.xlane.xlu0 %313
  %v315 = vsel %vm283, %v208, 0.0
  %316 = vadd.xlane.f32.xlu0 %v315
  %v317 = vpop.xlane.xlu0 %316
  %v318 = vsel %vm283, %v211, 0.0
  %319 = vadd.xlane.f32.xlu0 %v318
  %v320 = vpop.xlane.xlu0 %319
  %v321 = vsel %vm283, %v214, 0.0
  %322 = vadd.xlane.f32.xlu0 %v321
  %v323 = vpop.xlane.xlu0 %322
  %v324 = vadd.f32 %v308, %v314
  %v325 = vadd.f32 %v309, %v317
  %v326 = vadd.f32 %v310, %v320
  %v327 = vadd.f32 %v311, %v323
  %v328 = vsel %vm283, %v272, 0.0
  %329 = vadd.xlane.f32.xlu0 %v328
  %v330 = vpop.xlane.xlu0 %329
  %v331 = vsel %vm283, %v275, 0.0
  %332 = vadd.xlane.f32.xlu0 %v331
  %v333 = vpop.xlane.xlu0 %332
  %v334 = vsel %vm283, %v278, 0.0
  %335 = vadd.xlane.f32.xlu0 %v334
  %v336 = vpop.xlane.xlu0 %335
  %v337 = vsel %vm283, %v281, 0.0
  %338 = vadd.xlane.f32.xlu0 %v337
  %v339 = vpop.xlane.xlu0 %338
  %v340 = vadd.f32 %v324, %v330
  %v341 = vadd.f32 %v325, %v333
  %v342 = vadd.f32 %v326, %v336
  %v343 = vadd.f32 %v327, %v339
  %v344 = vmul.f32 %v71, %v71
  %v345 = vmul.f32 %v74, %v74
  %v346 = vmul.f32 %v77, %v77
  %v347 = vmul.f32 %v80, %v80
  %v348 = vsel %vm283, %v344, 0.0
  %349 = vadd.xlane.f32.xlu0 %v348
  %v350 = vpop.xlane.xlu0 %349
  %v351 = vsel %vm283, %v345, 0.0
  %352 = vadd.xlane.f32.xlu0 %v351
  %v353 = vpop.xlane.xlu0 %352
  %v354 = vsel %vm283, %v346, 0.0
  %355 = vadd.xlane.f32.xlu0 %v354
  %v356 = vpop.xlane.xlu0 %355
  %v357 = vsel %vm283, %v347, 0.0
  %358 = vadd.xlane.f32.xlu0 %v357
  %v359 = vpop.xlane.xlu0 %358
  %v360 = vmul.f32 %v138, %v138
  %v361 = vmul.f32 %v141, %v141
  %v362 = vmul.f32 %v144, %v144
  %v363 = vmul.f32 %v147, %v147
  %v364 = vsel %vm283, %v360, 0.0
  %365 = vadd.xlane.f32.xlu0 %v364
  %v366 = vpop.xlane.xlu0 %365
  %v367 = vsel %vm283, %v361, 0.0
  %368 = vadd.xlane.f32.xlu0 %v367
  %v369 = vpop.xlane.xlu0 %368
  %v370 = vsel %vm283, %v362, 0.0
  %371 = vadd.xlane.f32.xlu0 %v370
  %v372 = vpop.xlane.xlu0 %371
  %v373 = vsel %vm283, %v363, 0.0
  %374 = vadd.xlane.f32.xlu0 %v373
  %v375 = vpop.xlane.xlu0 %374
  %v376 = vadd.f32 %v350, %v366
  %v377 = vadd.f32 %v353, %v369
  %v378 = vadd.f32 %v356, %v372
  %v379 = vadd.f32 %v359, %v375
  %v380 = vmul.f32 %v205, %v205
  %v381 = vmul.f32 %v208, %v208
  %v382 = vmul.f32 %v211, %v211
  %v383 = vmul.f32 %v214, %v214
  %v384 = vsel %vm283, %v380, 0.0
  %385 = vadd.xlane.f32.xlu0 %v384
  %v386 = vpop.xlane.xlu0 %385
  %v387 = vsel %vm283, %v381, 0.0
  %388 = vadd.xlane.f32.xlu0 %v387
  %v389 = vpop.xlane.xlu0 %388
  %v390 = vsel %vm283, %v382, 0.0
  %391 = vadd.xlane.f32.xlu0 %v390
  %v392 = vpop.xlane.xlu0 %391
  %v393 = vsel %vm283, %v383, 0.0
  %394 = vadd.xlane.f32.xlu0 %v393
  %v395 = vpop.xlane.xlu0 %394
  %v396 = vadd.f32 %v376, %v386
  %v397 = vadd.f32 %v377, %v389
  %v398 = vadd.f32 %v378, %v392
  %v399 = vadd.f32 %v379, %v395
  %v400 = vmul.f32 %v272, %v272
  %v401 = vmul.f32 %v275, %v275
  %v402 = vmul.f32 %v278, %v278
  %v403 = vmul.f32 %v281, %v281
  %v404 = vsel %vm283, %v400, 0.0
  %405 = vadd.xlane.f32.xlu0 %v404
  %v406 = vpop.xlane.xlu0 %405
  %v407 = vsel %vm283, %v401, 0.0
  %408 = vadd.xlane.f32.xlu0 %v407
  %v409 = vpop.xlane.xlu0 %408
  %v410 = vsel %vm283, %v402, 0.0
  %411 = vadd.xlane.f32.xlu0 %v410
  %v412 = vpop.xlane.xlu0 %411
  %v413 = vsel %vm283, %v403, 0.0
  %414 = vadd.xlane.f32.xlu0 %v413
  %v415 = vpop.xlane.xlu0 %414
  %v416 = vadd.f32 %v396, %v406
  %v417 = vadd.f32 %v397, %v409
  %v418 = vadd.f32 %v398, %v412
  %v419 = vadd.f32 %v399, %v415
  %v420 = vmul.f32 %v340, 0.0078125
  %v421 = vmul.f32 %v341, 0.0078125
  %v422 = vmul.f32 %v342, 0.0078125
  %v423 = vmul.f32 %v343, 0.0078125
  %v424 = vmul.f32 %v416, 0.0078125
  %v425 = vmul.f32 %v417, 0.0078125
  %v426 = vmul.f32 %v418, 0.0078125
  %v427 = vmul.f32 %v419, 0.0078125
  %v428 = vmul.f32 %v420, %v420
  %v429 = vmul.f32 %v421, %v421
  %v430 = vmul.f32 %v422, %v422
  %v431 = vmul.f32 %v423, %v423
  %v432 = vsub.f32 %v424, %v428
  %v433 = vsub.f32 %v425, %v429
  %v434 = vsub.f32 %v426, %v430
  %v435 = vsub.f32 %v427, %v431
  %v436 = vadd.f32 %v432, 1e-05
  %v437 = vadd.f32 %v433, 1e-05
  %v438 = vadd.f32 %v434, 1e-05
  %v439 = vadd.f32 %v435, 1e-05
  %v440 = vrsqrt.pop %v436
  %v441 = vmul.f32 %v440, %v436
  %v442 = vmul.f32 %v441, %v440
  %v443 = vmul.f32 0.5, %v442
  %v444 = vsub.f32 1.5, %v443
  %v445 = vmul.f32 %v440, %v444
  %vm446 = vweird.f32 %v436
  %vm447 = vweird.f32 %v440
  %vm448 = vmor %vm446, %vm447
  %v449 = vsel %vm448, %v440, %v445
  %v450 = vrsqrt.pop %v437
  %v451 = vmul.f32 %v450, %v437
  %v452 = vmul.f32 %v451, %v450
  %v453 = vmul.f32 0.5, %v452
  %v454 = vsub.f32 1.5, %v453
  %v455 = vmul.f32 %v450, %v454
  %vm456 = vweird.f32 %v437
  %vm457 = vweird.f32 %v450
  %vm458 = vmor %vm456, %vm457
  %v459 = vsel %vm458, %v450, %v455
  %v460 = vrsqrt.pop %v438
  %v461 = vmul.f32 %v460, %v438
  %v462 = vmul.f32 %v461, %v460
  %v463 = vmul.f32 0.5, %v462
  %v464 = vsub.f32 1.5, %v463
  %v465 = vmul.f32 %v460, %v464
  %vm466 = vweird.f32 %v438
  %vm467 = vweird.f32 %v460
  %vm468 = vmor %vm466, %vm467
  %v469 = vsel %vm468, %v460, %v465
  %v470 = vrsqrt.pop %v439
  %v471 = vmul.f32 %v470, %v439
  %v472 = vmul.f32 %v471, %v470
  %v473 = vmul.f32 0.5, %v472
  %v474 = vsub.f32 1.5, %v473
  %v475 = vmul.f32 %v470, %v474
  %vm476 = vweird.f32 %v439
  %vm477 = vweird.f32 %v470
  %vm478 = vmor %vm476, %vm477
  %v479 = vsel %vm478, %v470, %v475
  %v480 = vld [vmem:[%s2] sm:$0xff]
  %v481 = vld [vmem:[%s2 + $0x8] sm:$0xff]
  %v482 = vld [vmem:[%s2 + $0x10] sm:$0xff]
  %v483 = vld [vmem:[%s2 + $0x18] sm:$0xff]
  %v484 = vmul.f32 %v449, %v480
  %v485 = vmul.f32 %v459, %v481
  %v486 = vmul.f32 %v469, %v482
  %v487 = vmul.f32 %v479, %v483
  %v488 = vld [vmem:[%s3] sm:$0xff]
  %v489 = vld [vmem:[%s3 + $0x8] sm:$0xff]
  %v490 = vld [vmem:[%s3 + $0x10] sm:$0xff]
  %v491 = vld [vmem:[%s3 + $0x18] sm:$0xff]
  %v492 = vmul.f32 %v420, %v484
  %v493 = vmul.f32 %v421, %v485
  %v494 = vmul.f32 %v422, %v486
  %v495 = vmul.f32 %v423, %v487
  %v496 = vsub.f32 %v488, %v492
  %v497 = vsub.f32 %v489, %v493
  %v498 = vsub.f32 %v490, %v494
  %v499 = vsub.f32 %v491, %v495
  %501 = vset.pattern.permute.xlu0 0
  %502 = vperm.xlu0 %501, %v484
  %v503 = vpop.permute.xlu0 %502
  %506 = vset.pattern.permute.xlu0 0
  %507 = vperm.xlu0 %506, %v485
  %v508 = vpop.permute.xlu0 %507
  %511 = vset.pattern.permute.xlu0 0
  %512 = vperm.xlu0 %511, %v486
  %v513 = vpop.permute.xlu0 %512
  %516 = vset.pattern.permute.xlu0 0
  %517 = vperm.xlu0 %516, %v487
  %v518 = vpop.permute.xlu0 %517
  %v520 = vmul.f32 %v71, %v503
  %v521 = vmul.f32 %v74, %v508
  %v522 = vmul.f32 %v77, %v513
  %v523 = vmul.f32 %v80, %v518
  %525 = vset.pattern.permute.xlu0 0
  %526 = vperm.xlu0 %525, %v496
  %v527 = vpop.permute.xlu0 %526
  %530 = vset.pattern.permute.xlu0 0
  %531 = vperm.xlu0 %530, %v497
  %v532 = vpop.permute.xlu0 %531
  %535 = vset.pattern.permute.xlu0 0
  %536 = vperm.xlu0 %535, %v498
  %v537 = vpop.permute.xlu0 %536
  %540 = vset.pattern.permute.xlu0 0
  %541 = vperm.xlu0 %540, %v499
  %v542 = vpop.permute.xlu0 %541
  %v544 = vadd.f32 %v520, %v527
  %v545 = vadd.f32 %v521, %v532
  %v546 = vadd.f32 %v522, %v537
  %v547 = vadd.f32 %v523, %v542
  %v548 = vmax.f32 %v544, 0.0
  %v549 = vmax.f32 %v545, 0.0
  %v550 = vmax.f32 %v546, 0.0
  %v551 = vmax.f32 %v547, 0.0
  %552 = vst.msk [vmem:[%s4] sm:$0xff] %vm283, %v548
  %553 = vst.msk [vmem:[%s4 + $0x8] sm:$0xff] %vm283, %v549
  %554 = vst.msk [vmem:[%s4 + $0x10] sm:$0xff] %vm283, %v550
  %555 = vst.msk [vmem:[%s4 + $0x18] sm:$0xff] %vm283, %v551
  %v556 = vmul.f32 %v138, %v503
  %v557 = vmul.f32 %v141, %v508
  %v558 = vmul.f32 %v144, %v513
  %v559 = vmul.f32 %v147, %v518
  %v560 = vadd.f32 %v556, %v527
  %v561 = vadd.f32 %v557, %v532
  %v562 = vadd.f32 %v558, %v537
  %v563 = vadd.f32 %v559, %v542
  %v564 = vmax.f32 %v560, 0.0
  %v565 = vmax.f32 %v561, 0.0
  %v566 = vmax.f32 %v562, 0.0
  %v567 = vmax.f32 %v563, 0.0
  %s568 = scalar_lea.vmem %s4, 32
  %569 = vst.msk [vmem:[%s568] sm:$0xff] %vm283, %v564
  %570 = vst.msk [vmem:[%s568 + $0x8] sm:$0xff] %vm283, %v565
  %571 = vst.msk [vmem:[%s568 + $0x10] sm:$0xff] %vm283, %v566
  %572 = vst.msk [vmem:[%s568 + $0x18] sm:$0xff] %vm283, %v567
  %v573 = vmul.f32 %v205, %v503
  %v574 = vmul.f32 %v208, %v508
  %v575 = vmul.f32 %v211, %v513
  %v576 = vmul.f32 %v214, %v518
  %v577 = vadd.f32 %v573, %v527
  %v578 = vadd.f32 %v574, %v532
  %v579 = vadd.f32 %v575, %v537
  %v580 = vadd.f32 %v576, %v542
  %v581 = vmax.f32 %v577, 0.0
  %v582 = vmax.f32 %v578, 0.0
  %v583 = vmax.f32 %v579, 0.0
  %v584 = vmax.f32 %v580, 0.0
  %s585 = scalar_lea.vmem %s4, 64
  %586 = vst.msk [vmem:[%s585] sm:$0xff] %vm283, %v581
  %587 = vst.msk [vmem:[%s585 + $0x8] sm:$0xff] %vm283, %v582
  %588 = vst.msk [vmem:[%s585 + $0x10] sm:$0xff] %vm283, %v583
  %589 = vst.msk [vmem:[%s585 + $0x18] sm:$0xff] %vm283, %v584
  %v590 = vmul.f32 %v272, %v503
  %v591 = vmul.f32 %v275, %v508
  %v592 = vmul.f32 %v278, %v513
  %v593 = vmul.f32 %v281, %v518
  %v594 = vadd.f32 %v590, %v527
  %v595 = vadd.f32 %v591, %v532
  %v596 = vadd.f32 %v592, %v537
  %v597 = vadd.f32 %v593, %v542
  %v598 = vmax.f32 %v594, 0.0
  %v599 = vmax.f32 %v595, 0.0
  %v600 = vmax.f32 %v596, 0.0
  %v601 = vmax.f32 %v597, 0.0
  %s602 = scalar_lea.vmem %s4, 96
  %603 = vst.msk [vmem:[%s602] sm:$0xff] %vm283, %v598
  %604 = vst.msk [vmem:[%s602 + $0x8] sm:$0xff] %vm283, %v599
  %605 = vst.msk [vmem:[%s602 + $0x10] sm:$0xff] %vm283, %v600
  %606 = vst.msk [vmem:[%s602 + $0x18] sm:$0xff] %vm283, %v601
  // Predicated region
  $region18: #{forward.16} parent=0 // pred_check
    _
  $region19: #{forward.16} parent=0 // pred_check_branch
    %608 = sbr.rel (0) target = $region21
  $region20: #{forward.16} parent=0 // pred_region
    _
  $region21: #{forward.16} parent=0 // pred_fallthru
    _
  // Predicated region
  $region22: #{forward.16} parent=0 // pred_check
    _
  $region23: #{forward.16} parent=0 // pred_check_branch
    %610 = sbr.rel (0) target = $region25
  $region24: #{forward.16} parent=0 // pred_region
    _
  $region25: #{forward.16} parent=0 // pred_fallthru
    _

// kernel: squeeze.80
$region0: #{squeeze.80}
  %s0 = inlined_call_operand.vmem [shape: f32[1,3,128], index: 0, kind: input, shape index: {}]
  %s1 = inlined_call_operand.vmem [shape: f32[3,2,8,8,1], index: 1, kind: output, shape index: {}]
  $region1: #{squeeze.80} parent=0
    #allocation0 [shape = 'u8[4096]{0}', space=vmem, size = 0x1000, scoped, tag = 'scoped mem for input reshape']
    %s3 = ssub.s32 16, 1
    %v4 = vld [vmem:[%s0] sm:%s3]
    %5 = vst [vmem:[#allocation0] sm:%s3] %v4
    %v6 = vld [vmem:[#allocation0] sm:$0x7]
    %vm7 = vcmask 64512
    %8 = vst.msk [vmem:[%s1] ss:$16 sm:$0x3] %vm7, %v6
    %s9 = scalar_lea.vmem %s1, 30
    %10 = vst.msk [vmem:[%s9] sm:$0x4] %vm7, %v6
    %v11 = vld [vmem:[#allocation0] sm:$0x7]
    %12 = vrot.lane.b32.xlu0 %v11, 120
    %v13 = vpop.permute.xlu0 %12
    %vm14 = vcmask 64512
    %s15 = scalar_lea.vmem %s1, 1
    %16 = vst.msk [vmem:[%s15] ss:$16 sm:$0x3] %vm14, %v13
    %s17 = scalar_lea.vmem %s1, 31
    %18 = vst.msk [vmem:[%s17] sm:$0x4] %vm14, %v13
    %v19 = vld [vmem:[#allocation0] sm:$0x7]
    %20 = vrot.lane.b32.xlu0 %v19, 112
    %v21 = vpop.permute.xlu0 %20
    %vm22 = vcmask 64512
    %s23 = scalar_lea.vmem %s1, 2
    %24 = vst.msk [vmem:[%s23] ss:$16 sm:$0x3] %vm22, %v21
    %s25 = scalar_lea.vmem %s1, 32
    %26 = vst.msk [vmem:[%s25] sm:$0x4] %vm22, %v21
    %v27 = vld [vmem:[#allocation0] sm:$0x7]
    %28 = vrot.lane.b32.xlu0 %v27, 104
    %v29 = vpop.permute.xlu0 %28
    %vm30 = vcmask 64512
    %s31 = scalar_lea.vmem %s1, 3
    %32 = vst.msk [vmem:[%s31] ss:$16 sm:$0x3] %vm30, %v29
    %s33 = scalar_lea.vmem %s1, 33
    %34 = vst.msk [vmem:[%s33] sm:$0x4] %vm30, %v29
    %v35 = vld [vmem:[#allocation0] sm:$0x7]
    %36 = vrot.lane.b32.xlu0 %v35, 96
    %v37 = vpop.permute.xlu0 %36
    %vm38 = vcmask 64512
    %s39 = scalar_lea.vmem %s1, 4
    %40 = vst.msk [vmem:[%s39] ss:$16 sm:$0x3] %vm38, %v37
    %s41 = scalar_lea.vmem %s1, 34
    %42 = vst.msk [vmem:[%s41] sm:$0x4] %vm38, %v37
    %v43 = vld [vmem:[#allocation0] sm:$0x7]
    %44 = vrot.lane.b32.xlu0 %v43, 88
    %v45 = vpop.permute.xlu0 %44
    %vm46 = vcmask 64512
    %s47 = scalar_lea.vmem %s1, 5
    %48 = vst.msk [vmem:[%s47] ss:$16 sm:$0x3] %vm46, %v45
    %s49 = scalar_lea.vmem %s1, 35
    %50 = vst.msk [vmem:[%s49] sm:$0x4] %vm46, %v45
    %v51 = vld [vmem:[#allocation0] sm:$0x7]
    %52 = vrot.lane.b32.xlu0 %v51, 80
    %v53 = vpop.permute.xlu0 %52
    %vm54 = vcmask 64512
    %s55 = scalar_lea.vmem %s1, 6
    %56 = vst.msk [vmem:[%s55] ss:$16 sm:$0x3] %vm54, %v53
    %s57 = scalar_lea.vmem %s1, 36
    %58 = vst.msk [vmem:[%s57] sm:$0x4] %vm54, %v53
    %v59 = vld [vmem:[#allocation0] sm:$0x7]
    %60 = vrot.lane.b32.xlu0 %v59, 72
    %v61 = vpop.permute.xlu0 %60
    %vm62 = vcmask 64512
    %s63 = scalar_lea.vmem %s1, 7
    %64 = vst.msk [vmem:[%s63] ss:$16 sm:$0x3] %vm62, %v61
    %s65 = scalar_lea.vmem %s1, 37
    %66 = vst.msk [vmem:[%s65] sm:$0x4] %vm62, %v61
    %v67 = vld [vmem:[#allocation0] sm:$0x7]
    %68 = vrot.lane.b32.xlu0 %v67, 64
    %v69 = vpop.permute.xlu0 %68
    %vm70 = vcmask 64512
    %s71 = scalar_lea.vmem %s1, 8
    %72 = vst.msk [vmem:[%s71] ss:$16 sm:$0x3] %vm70, %v69
    %s73 = scalar_lea.vmem %s1, 38
    %74 = vst.msk [vmem:[%s73] sm:$0x4] %vm70, %v69
    %v75 = vld [vmem:[#allocation0] sm:$0x7]
    %76 = vrot.lane.b32.xlu0 %v75, 56
    %v77 = vpop.permute.xlu0 %76
    %vm78 = vcmask 64512
    %s79 = scalar_lea.vmem %s1, 9
    %80 = vst.msk [vmem:[%s79] ss:$16 sm:$0x3] %vm78, %v77
    %s81 = scalar_lea.vmem %s1, 39
    %82 = vst.msk [vmem:[%s81] sm:$0x4] %vm78, %v77
    %v83 = vld [vmem:[#allocation0] sm:$0x7]
    %84 = vrot.lane.b32.xlu0 %v83, 48
    %v85 = vpop.permute.xlu0 %84
    %vm86 = vcmask 64512
    %s87 = scalar_lea.vmem %s1, 10
    %88 = vst.msk [vmem:[%s87] ss:$16 sm:$0x3] %vm86, %v85
    %s89 = scalar_lea.vmem %s1, 40
    %90 = vst.msk [vmem:[%s89] sm:$0x4] %vm86, %v85
    %v91 = vld [vmem:[#allocation0] sm:$0x7]
    %92 = vrot.lane.b32.xlu0 %v91, 40
    %v93 = vpop.permute.xlu0 %92
    %vm94 = vcmask 64512
    %s95 = scalar_lea.vmem %s1, 11
    %96 = vst.msk [vmem:[%s95] ss:$16 sm:$0x3] %vm94, %v93
    %s97 = scalar_lea.vmem %s1, 41
    %98 = vst.msk [vmem:[%s97] sm:$0x4] %vm94, %v93
    %v99 = vld [vmem:[#allocation0] sm:$0x7]
    %100 = vrot.lane.b32.xlu0 %v99, 32
    %v101 = vpop.permute.xlu0 %100
    %vm102 = vcmask 64512
    %s103 = scalar_lea.vmem %s1, 12
    %104 = vst.msk [vmem:[%s103] ss:$16 sm:$0x3] %vm102, %v101
    %s105 = scalar_lea.vmem %s1, 42
    %106 = vst.msk [vmem:[%s105] sm:$0x4] %vm102, %v101
    %v107 = vld [vmem:[#allocation0] sm:$0x7]
    %108 = vrot.lane.b32.xlu0 %v107, 24
    %v109 = vpop.permute.xlu0 %108
    %vm110 = vcmask 64512
    %s111 = scalar_lea.vmem %s1, 13
    %112 = vst.msk [vmem:[%s111] ss:$16 sm:$0x3] %vm110, %v109
    %s113 = scalar_lea.vmem %s1, 43
    %114 = vst.msk [vmem:[%s113] sm:$0x4] %vm110, %v109
    %v115 = vld [vmem:[#allocation0] sm:$0x7]
    %116 = vrot.lane.b32.xlu0 %v115, 16
    %v117 = vpop.permute.xlu0 %116
    %vm118 = vcmask 64512
    %s119 = scalar_lea.vmem %s1, 14
    %120 = vst.msk [vmem:[%s119] ss:$16 sm:$0x3] %vm118, %v117
    %s121 = scalar_lea.vmem %s1, 44
    %122 = vst.msk [vmem:[%s121] sm:$0x4] %vm118, %v117
    %v123 = vld [vmem:[#allocation0] sm:$0x7]
    %124 = vrot.lane.b32.xlu0 %v123, 8
    %v125 = vpop.permute.xlu0 %124
    %vm126 = vcmask 64512
    %s127 = scalar_lea.vmem %s1, 15
    %128 = vst.msk [vmem:[%s127] ss:$16 sm:$0x3] %vm126, %v125
    %s129 = scalar_lea.vmem %s1, 45
    %130 = vst.msk [vmem:[%s129] sm:$0x4] %vm126, %v125

// kernel: forward.17
$region0: #{forward.17}
  #allocation0 [shape = 'u32[]', space=smem, size = 0x4, offset = 0x4, fixed_abs, tag = 'smem constant byte address 0x4 - core index']
  #allocation1 [shape = 'u32[72,128]{1,0:T(1,128)}', space=vmem, size = 0x9000, scoped, tag = 'internal scratch']
  %s0 = inlined_call_operand.vmem [shape: f32[4,128,128], index: 0, kind: input, shape index: {}]
  %s1 = inlined_call_operand.vmem [shape: f32[4,3,128], index: 1, kind: input, shape index: {}]
  %s2 = inlined_call_operand.vmem [shape: f32[3,1], index: 2, kind: input, shape index: {}]
  %s3 = inlined_call_operand.vmem [shape: f32[4,3,128], index: 3, kind: output, shape index: {}]
  %s4 = sld [smem:[#allocation0]]
  $region22: #{forward.17} parent=0
    _
  %s6 = ssub.s32 1, %s4
  %s7 = scalar_select 0, %s6, %s4
  // Predicated region
  $region2: #{forward.17} parent=0 // pred_check
    _
  $region3: #{forward.17} parent=0 // pred_check_branch
    %9 = sbr.rel (0) target = $region5
  $region4: #{forward.17} parent=0 // pred_region
    _
  $region5: #{forward.17} parent=0 // pred_fallthru
    _
  // Predicated region
  $region6: #{forward.17} parent=0 // pred_check
    _
  $region7: #{forward.17} parent=0 // pred_check_branch
    %11 = sbr.rel (0) target = $region9
  $region8: #{forward.17} parent=0 // pred_region
    _
  $region9: #{forward.17} parent=0 // pred_fallthru
    _
  // Predicated region
  $region10: #{forward.17} parent=0 // pred_check
    _
  $region11: #{forward.17} parent=0 // pred_check_branch
    %13 = sbr.rel (0) target = $region13
  $region12: #{forward.17} parent=0 // pred_region
    _
  $region13: #{forward.17} parent=0 // pred_fallthru
    _
  %v14 = vld [vmem:[%s1] sm:$0x7]
  %v15 = vld [vmem:[%s0] sm:$0xff]
  %v16 = vld [vmem:[%s0 + $0x8] sm:$0xff]
  %v17 = vld [vmem:[%s0 + $0x10] sm:$0xff]
  %v18 = vld [vmem:[%s0 + $0x18] sm:$0xff]
  %v19 = vld [vmem:[%s0 + $0x20] sm:$0xff]
  %v20 = vld [vmem:[%s0 + $0x28] sm:$0xff]
  %v21 = vld [vmem:[%s0 + $0x30] sm:$0xff]
  %v22 = vld [vmem:[%s0 + $0x38] sm:$0xff]
  %v23 = vld [vmem:[%s0 + $0x40] sm:$0xff]
  %v24 = vld [vmem:[%s0 + $0x48] sm:$0xff]
  %v25 = vld [vmem:[%s0 + $0x50] sm:$0xff]
  %v26 = vld [vmem:[%s0 + $0x58] sm:$0xff]
  %v27 = vld [vmem:[%s0 + $0x60] sm:$0xff]
  %v28 = vld [vmem:[%s0 + $0x68] sm:$0xff]
  %v29 = vld [vmem:[%s0 + $0x70] sm:$0xff]
  %v30 = vld [vmem:[%s0 + $0x78] sm:$0xff]
  %v31 = vld [vmem:[%s2] sm:$0x7]
  %33 = vset.pattern.permute.xlu0 0
  %34 = vperm.xlu0 %33, %v31
  %v35 = vpop.permute.xlu0 %34
  %37 = vmatpush.msra.mxu0 %v30
  %38 = vmatpush.msra.mxu0 %v29
  %39 = vmatpush.msra.mxu0 %v28
  %40 = vmatpush.msra.mxu0 %v27
  %41 = vmatpush.msra.mxu0 %v26
  %42 = vmatpush.msra.mxu0 %v25
  %43 = vmatpush.msra.mxu0 %v24
  %44 = vmatpush.msra.mxu0 %v23
  %45 = vmatpush.msra.mxu0 %v22
  %46 = vmatpush.msra.mxu0 %v21
  %47 = vmatpush.msra.mxu0 %v20
  %48 = vmatpush.msra.mxu0 %v19
  %49 = vmatpush.msra.mxu0 %v18
  %50 = vmatpush.msra.mxu0 %v17
  %51 = vmatpush.msra.mxu0 %v16
  %52 = vmatpush.msra.mxu0 %v15
  %53 = vmatmul.f32.gmra.mxu0 %v14
  %v54 = vpop.f32.mrf.mxu0
  %v55 = vadd.f32 %v35, %v54
  %56 = vdwg.mxu0
  %v57 = vtanh.pop %v55
  %58 = vst [vmem:[%s3] sm:$0x7] %v57
  %s59 = scalar_lea.vmem %s1, 4
  %v60 = vld [vmem:[%s59] sm:$0x7]
  %s61 = scalar_lea.vmem %s0, 128
  %v62 = vld [vmem:[%s61] sm:$0xff]
  %v63 = vld [vmem:[%s61 + $0x8] sm:$0xff]
  %v64 = vld [vmem:[%s61 + $0x10] sm:$0xff]
  %v65 = vld [vmem:[%s61 + $0x18] sm:$0xff]
  %v66 = vld [vmem:[%s61 + $0x20] sm:$0xff]
  %v67 = vld [vmem:[%s61 + $0x28] sm:$0xff]
  %v68 = vld [vmem:[%s61 + $0x30] sm:$0xff]
  %v69 = vld [vmem:[%s61 + $0x38] sm:$0xff]
  %v70 = vld [vmem:[%s61 + $0x40] sm:$0xff]
  %v71 = vld [vmem:[%s61 + $0x48] sm:$0xff]
  %v72 = vld [vmem:[%s61 + $0x50] sm:$0xff]
  %v73 = vld [vmem:[%s61 + $0x58] sm:$0xff]
  %v74 = vld [vmem:[%s61 + $0x60] sm:$0xff]
  %v75 = vld [vmem:[%s61 + $0x68] sm:$0xff]
  %v76 = vld [vmem:[%s61 + $0x70] sm:$0xff]
  %v77 = vld [vmem:[%s61 + $0x78] sm:$0xff]
  %v78 = vld [vmem:[%s2] sm:$0x7]
  %80 = vset.pattern.permute.xlu0 0
  %81 = vperm.xlu0 %80, %v78
  %v82 = vpop.permute.xlu0 %81
  %84 = vmatpush.msra.mxu0 %v77
  %85 = vmatpush.msra.mxu0 %v76
  %86 = vmatpush.msra.mxu0 %v75
  %87 = vmatpush.msra.mxu0 %v74
  %88 = vmatpush.msra.mxu0 %v73
  %89 = vmatpush.msra.mxu0 %v72
  %90 = vmatpush.msra.mxu0 %v71
  %91 = vmatpush.msra.mxu0 %v70
  %92 = vmatpush.msra.mxu0 %v69
  %93 = vmatpush.msra.mxu0 %v68
  %94 = vmatpush.msra.mxu0 %v67
  %95 = vmatpush.msra.mxu0 %v66
  %96 = vmatpush.msra.mxu0 %v65
  %97 = vmatpush.msra.mxu0 %v64
  %98 = vmatpush.msra.mxu0 %v63
  %99 = vmatpush.msra.mxu0 %v62
  %100 = vmatmul.f32.gmra.mxu0 %v60
  %v101 = vpop.f32.mrf.mxu0
  %v102 = vadd.f32 %v82, %v101
  %103 = vdwg.mxu0
  %v104 = vtanh.pop %v102
  %s105 = scalar_lea.vmem %s3, 4
  %106 = vst [vmem:[%s105] sm:$0x7] %v104
  %s107 = scalar_lea.vmem %s1, 8
  %v108 = vld [vmem:[%s107] sm:$0x7]
  %s109 = scalar_lea.vmem %s0, 256
  %v110 = vld [vmem:[%s109] sm:$0xff]
  %v111 = vld [vmem:[%s109 + $0x8] sm:$0xff]
  %v112 = vld [vmem:[%s109 + $0x10] sm:$0xff]
  %v113 = vld [vmem:[%s109 + $0x18] sm:$0xff]
  %v114 = vld [vmem:[%s109 + $0x20] sm:$0xff]
  %v115 = vld [vmem:[%s109 + $0x28] sm:$0xff]
  %v116 = vld [vmem:[%s109 + $0x30] sm:$0xff]
  %v117 = vld [vmem:[%s109 + $0x38] sm:$0xff]
  %v118 = vld [vmem:[%s109 + $0x40] sm:$0xff]
  %v119 = vld [vmem:[%s109 + $0x48] sm:$0xff]
  %v120 = vld [vmem:[%s109 + $0x50] sm:$0xff]
  %v121 = vld [vmem:[%s109 + $0x58] sm:$0xff]
  %v122 = vld [vmem:[%s109 + $0x60] sm:$0xff]
  %v123 = vld [vmem:[%s109 + $0x68] sm:$0xff]
  %v124 = vld [vmem:[%s109 + $0x70] sm:$0xff]
  %v125 = vld [vmem:[%s109 + $0x78] sm:$0xff]
  %v126 = vld [vmem:[%s2] sm:$0x7]
  %128 = vset.pattern.permute.xlu0 0
  %129 = vperm.xlu0 %128, %v126
  %v130 = vpop.permute.xlu0 %129
  %132 = vmatpush.msra.mxu0 %v125
  %133 = vmatpush.msra.mxu0 %v124
  %134 = vmatpush.msra.mxu0 %v123
  %135 = vmatpush.msra.mxu0 %v122
  %136 = vmatpush.msra.mxu0 %v121
  %137 = vmatpush.msra.mxu0 %v120
  %138 = vmatpush.msra.mxu0 %v119
  %139 = vmatpush.msra.mxu0 %v118
  %140 = vmatpush.msra.mxu0 %v117
  %141 = vmatpush.msra.mxu0 %v116
  %142 = vmatpush.msra.mxu0 %v115
  %143 = vmatpush.msra.mxu0 %v114
  %144 = vmatpush.msra.mxu0 %v113
  %145 = vmatpush.msra.mxu0 %v112
  %146 = vmatpush.msra.mxu0 %v111
  %147 = vmatpush.msra.mxu0 %v110
  %148 = vmatmul.f32.gmra.mxu0 %v108
  %v149 = vpop.f32.mrf.mxu0
  %v150 = vadd.f32 %v130, %v149
  %151 = vdwg.mxu0
  %v152 = vtanh.pop %v150
  %s153 = scalar_lea.vmem %s3, 8
  %154 = vst [vmem:[%s153] sm:$0x7] %v152
  %s155 = scalar_lea.vmem %s1, 12
  %v156 = vld [vmem:[%s155] sm:$0x7]
  %s157 = scalar_lea.vmem %s0, 384
  %v158 = vld [vmem:[%s157] sm:$0xff]
  %v159 = vld [vmem:[%s157 + $0x8] sm:$0xff]
  %v160 = vld [vmem:[%s157 + $0x10] sm:$0xff]
  %v161 = vld [vmem:[%s157 + $0x18] sm:$0xff]
  %v162 = vld [vmem:[%s157 + $0x20] sm:$0xff]
  %v163 = vld [vmem:[%s157 + $0x28] sm:$0xff]
  %v164 = vld [vmem:[%s157 + $0x30] sm:$0xff]
  %v165 = vld [vmem:[%s157 + $0x38] sm:$0xff]
  %v166 = vld [vmem:[%s157 + $0x40] sm:$0xff]
  %v167 = vld [vmem:[%s157 + $0x48] sm:$0xff]
  %v168 = vld [vmem:[%s157 + $0x50] sm:$0xff]
  %v169 = vld [vmem:[%s157 + $0x58] sm:$0xff]
  %v170 = vld [vmem:[%s157 + $0x60] sm:$0xff]
  %v171 = vld [vmem:[%s157 + $0x68] sm:$0xff]
  %v172 = vld [vmem:[%s157 + $0x70] sm:$0xff]
  %v173 = vld [vmem:[%s157 + $0x78] sm:$0xff]
  %v174 = vld [vmem:[%s2] sm:$0x7]
  %176 = vset.pattern.permute.xlu0 0
  %177 = vperm.xlu0 %176, %v174
  %v178 = vpop.permute.xlu0 %177
  %180 = vmatpush.msra.mxu0 %v173
  %181 = vmatpush.msra.mxu0 %v172
  %182 = vmatpush.msra.mxu0 %v171
  %183 = vmatpush.msra.mxu0 %v170
  %184 = vmatpush.msra.mxu0 %v169
  %185 = vmatpush.msra.mxu0 %v168
  %186 = vmatpush.msra.mxu0 %v167
  %187 = vmatpush.msra.mxu0 %v166
  %188 = vmatpush.msra.mxu0 %v165
  %189 = vmatpush.msra.mxu0 %v164
  %190 = vmatpush.msra.mxu0 %v163
  %191 = vmatpush.msra.mxu0 %v162
  %192 = vmatpush.msra.mxu0 %v161
  %193 = vmatpush.msra.mxu0 %v160
  %194 = vmatpush.msra.mxu0 %v159
  %195 = vmatpush.msra.mxu0 %v158
  %196 = vmatmul.f32.gmra.mxu0 %v156
  %v197 = vpop.f32.mrf.mxu0
  %v198 = vadd.f32 %v178, %v197
  %199 = vdwg.mxu0
  %v200 = vtanh.pop %v198
  %s201 = scalar_lea.vmem %s3, 12
  %202 = vst [vmem:[%s201] sm:$0x7] %v200
  // Predicated region
  $region14: #{forward.17} parent=0 // pred_check
    _
  $region15: #{forward.17} parent=0 // pred_check_branch
    %204 = sbr.rel (0) target = $region17
  $region16: #{forward.17} parent=0 // pred_region
    _
  $region17: #{forward.17} parent=0 // pred_fallthru
    _
  // Predicated region
  $region18: #{forward.17} parent=0 // pred_check
    _
  $region19: #{forward.17} parent=0 // pred_check_branch
    %206 = sbr.rel (0) target = $region21
  $region20: #{forward.17} parent=0 // pred_region
    _
  $region21: #{forward.17} parent=0 // pred_fallthru
    _

</llo_original>
